<compile_context>
chip_gen: v7x
topology: tpu7x:2x2x1
jax: 0.10.0
libtpu: 0.0.40
codegen_flags: <defaults>
</compile_context>

<pallas_src>
import functools

import jax
import jax.numpy as jnp
from jax import lax
from jax.experimental import pallas as pl
from jax.experimental.pallas import tpu as pltpu

TILE_N_MAX = 2048                 # points (lanes) per grid step (sweep 2048-4096)
TILE_N_MIN = 256
_SQRT_2_OVER_PI = 0.7978845608028654
_INV_SQRT_2 = 0.7071067811865476


def _gelu(x, approximate):
    if approximate:
        # tanh form -> transcendental goes to the EUP (separate bundle slot).
        return 0.5 * x * (1.0 + jnp.tanh(
            _SQRT_2_OVER_PI * (x + 0.044715 * (x * x * x))))
    # exact erf form (torch F.gelu default); VALU-heavy polynomial.
    return 0.5 * x * (1.0 + lax.erf(x * _INV_SQRT_2))


def _pick_tile_n(n, tile_n_max=TILE_N_MAX, tile_n_min=TILE_N_MIN):
    """Largest power-of-two tile <= tile_n_max that still gives >=2 grid steps."""
    t = tile_n_max
    while t > tile_n_min and n <= t:
        t //= 2
    return max(t, tile_n_min)     # always a multiple of 128


def _mlp_kernel(*refs, num_hidden_layers, approximate):
    if num_hidden_layers > 1:
        x_ref, w1_ref, b1_ref, wh_ref, bh_ref, wl_ref, bl_ref, o_ref = refs
    else:  # no hidden stack (L == 1 edge case)
        x_ref, w1_ref, b1_ref, wl_ref, bl_ref, o_ref = refs

    x = x_ref[...]                                   # (2, TILE_N) f32
    w1 = w1_ref[...]                                 # (F_PAD, 2) f32

    # fc1: K=2 contraction as two broadcast FMAs on the VPU (f32).
    h = w1[:, 0:1] * x[0:1, :] + w1[:, 1:2] * x[1:2, :] + b1_ref[...]
    h = _gelu(h, approximate)

    # hidden layers: bf16 x bf16 MXU matmuls with f32 accumulation; weights are
    # VMEM-resident (constant-index BlockSpec), bias-add + GELU in f32.
    for i in range(num_hidden_layers - 1):
        h = jnp.dot(wh_ref[i], h.astype(jnp.bfloat16),
                    preferred_element_type=jnp.float32) + bh_ref[i]
        h = _gelu(h, approximate)

    # fclast: single output feature as a (1, F_PAD) @ (F_PAD, TILE_N) MXU matmul
    # (was an elementwise mul + XLU sublane-reduce); lane-dense (1, TILE_N) store.
    o_ref[...] = (jnp.dot(wl_ref[...], h, preferred_element_type=jnp.float32)
                  + bl_ref[...])


@functools.partial(jax.jit,
                   static_argnames=("num_hidden_layers", "approximate", "tile_n"))
def gelufcnet2d_forward(x, params, *, num_hidden_layers, approximate=True,
                        tile_n=None):
    """x: (N, 2) float32 -> (N,) float32, matching GELUfcNet2D.forward."""
    w1t, b1c, wht, bhc, wlr, bl11 = params
    f_pad = w1t.shape[0]

    n = x.shape[0]
    if tile_n is None:
        tile_n = _pick_tile_n(n)
    n_pad = ((n + tile_n - 1) // tile_n) * tile_n

    # Feature-major input (2, N_pad): one transpose + one pad.
    x_t = x.T
    if n_pad != n:
        x_t = jnp.pad(x_t, ((0, 0), (0, n_pad - n)))

    kernel = functools.partial(_mlp_kernel,
                               num_hidden_layers=num_hidden_layers,
                               approximate=approximate)

    in_specs = [
        pl.BlockSpec((2, tile_n), lambda i: (0, i)),          # x (feature-major)
        pl.BlockSpec((f_pad, 2), lambda i: (0, 0)),           # W1^T   (resident)
        pl.BlockSpec((f_pad, 1), lambda i: (0, 0)),           # b1     (resident)
    ]
    args = [x_t, w1t, b1c]
    weight_bytes = w1t.size * 4 + b1c.size * 4 + wlr.size * 4 + bl11.size * 4
    if num_hidden_layers > 1:
        in_specs += [
            pl.BlockSpec((num_hidden_layers - 1, f_pad, f_pad),
                         lambda i: (0, 0, 0)),                # hidden W^T (bf16)
            pl.BlockSpec((num_hidden_layers - 1, f_pad, 1),
                         lambda i: (0, 0, 0)),                # hidden biases
        ]
        args += [wht, bhc]
        weight_bytes += wht.size * 2 + bhc.size * 4
    in_specs += [
        pl.BlockSpec((1, f_pad), lambda i: (0, 0)),           # w_last (as row)
        pl.BlockSpec((1, 1), lambda i: (0, 0)),               # b_last
    ]
    args += [wlr, bl11]

    flops = n_pad * (4 * f_pad                                 # fc1 (K=2)
                     + 2 * (num_hidden_layers - 1) * f_pad * f_pad
                     + 2 * f_pad)                              # fclast
    cost = pl.CostEstimate(
        flops=int(flops),
        transcendentals=int(num_hidden_layers * f_pad * n_pad),
        bytes_accessed=int(3 * n_pad * 4 + weight_bytes))

    out = pl.pallas_call(
        kernel,
        out_shape=jax.ShapeDtypeStruct((1, n_pad), jnp.float32),
        grid=(n_pad // tile_n,),
        in_specs=in_specs,
        out_specs=pl.BlockSpec((1, tile_n), lambda i: (0, i)),
        compiler_params=pltpu.CompilerParams(
            dimension_semantics=("parallel",),
            vmem_limit_bytes=32 * 1024 * 1024),
        cost_estimate=cost,
    )(*args)

    # squeeze(1) in torch -> (N,)
    return out[0, :n]


def init_params(key, num_hidden_layers=5, num_hidden_neurons=50):
    """Torch-Linear-style init.  Returns (kernel_params, raw_params).

    Kernel params are feature-major and zero-padded to F_PAD (padding is inert:
    GELU(0) = 0).  Hidden weights are stored in bf16 (MXU operands); everything
    else stays f32.
    """
    h = num_hidden_neurons
    f_pad = ((h + 127) // 128) * 128
    keys = jax.random.split(key, 2 * (num_hidden_layers + 1))

    def linear(kw, kb, fan_in, fan_out):
        bound = 1.0 / float(fan_in) ** 0.5
        w = jax.random.uniform(kw, (fan_in, fan_out), jnp.float32, -bound, bound)
        b = jax.random.uniform(kb, (fan_out,), jnp.float32, -bound, bound)
        return w, b

    w1, b1 = linear(keys[0], keys[1], 2, h)                   # 2 -> h
    whs, bhs = [], []
    for i in range(num_hidden_layers - 1):
        w, b = linear(keys[2 + 2 * i], keys[3 + 2 * i], h, h)
        whs.append(w)
        bhs.append(b)
    wl, bl = linear(keys[-2], keys[-1], h, 1)                 # h -> 1

    w1t = jnp.zeros((f_pad, 2), jnp.float32).at[:h, :].set(w1.T)
    b1c = jnp.zeros((f_pad, 1), jnp.float32).at[:h, 0].set(b1)
    if num_hidden_layers > 1:
        wht = jnp.zeros((num_hidden_layers - 1, f_pad, f_pad), jnp.bfloat16)
        bhc = jnp.zeros((num_hidden_layers - 1, f_pad, 1), jnp.float32)
        for i, (w, b) in enumerate(zip(whs, bhs)):
            wht = wht.at[i, :h, :h].set(w.T.astype(jnp.bfloat16))
            bhc = bhc.at[i, :h, 0].set(b)
    else:
        wht, bhc = None, None
    wlr = jnp.zeros((1, f_pad), jnp.float32).at[0, :h].set(wl[:, 0])  # row layout
    bl11 = bl.reshape(1, 1)

    kernel_params = (w1t, b1c, wht, bhc, wlr, bl11)
    raw_params = (w1, b1, whs, bhs, wl, bl)
    return kernel_params, raw_params


def _reference_forward(x, raw_params, num_hidden_layers, approximate,
                       emulate_bf16=False):
    """Pure-JAX reference in the original row-major torch layout.

    emulate_bf16=True rounds hidden-layer matmul operands to bf16 (f32 accum),
    matching the kernel's MXU numerics so a tight tolerance checks layout/indexing.
    """
    w1, b1, whs, bhs, wl, bl = raw_params
    dot = functools.partial(jnp.dot, precision=lax.Precision.HIGHEST)
    h = _gelu(dot(x, w1) + b1, approximate)
    for i in range(num_hidden_layers - 1):
        hh, ww = h, whs[i]
        if emulate_bf16:
            hh = hh.astype(jnp.bfloat16).astype(jnp.float32)
            ww = ww.astype(jnp.bfloat16).astype(jnp.float32)
        h = _gelu(dot(hh, ww) + bhs[i], approximate)
    return (dot(h, wl) + bl)[:, 0]


if __name__ == "__main__":
    NUM_HIDDEN_LAYERS = 5
    NUM_HIDDEN_NEURONS = 50
    N = 1000   # not a multiple of the tile -> exercises padding; adaptive tile=512

    key = jax.random.PRNGKey(0)
    k_x, k_p = jax.random.split(key)
    x = jax.random.normal(k_x, (N, 2), jnp.float32)

    kernel_params, raw_params = init_params(k_p, NUM_HIDDEN_LAYERS,
                                            NUM_HIDDEN_NEURONS)

    out = jax.block_until_ready(
        gelufcnet2d_forward(x, kernel_params,
                            num_hidden_layers=NUM_HIDDEN_LAYERS))
    assert out.shape == (N,)

    # Tight check vs a reference with matching bf16 operand rounding
    # (catches any layout / indexing bug; only accumulation order differs).
    ref_bf16 = _reference_forward(x, raw_params, NUM_HIDDEN_LAYERS,
                                  approximate=True, emulate_bf16=True)
    assert jnp.allclose(out, ref_bf16, atol=2e-3, rtol=2e-3), "mismatch (bf16 ref)"

    # Coarse semantics check vs the full-f32 reference (bf16 matmul noise only).
    ref_f32 = _reference_forward(x, raw_params, NUM_HIDDEN_LAYERS,
                                 approximate=True, emulate_bf16=False)
    assert jnp.allclose(out, ref_f32, atol=5e-2, rtol=5e-2), "mismatch (f32 ref)"

    # Larger N exercising the full 2048-point tile + padding (grid of 3 steps).
    N2 = 5000
    x2 = jax.random.normal(jax.random.PRNGKey(1), (N2, 2), jnp.float32)
    out2 = jax.block_until_ready(
        gelufcnet2d_forward(x2, kernel_params,
                            num_hidden_layers=NUM_HIDDEN_LAYERS))
    ref2 = _reference_forward(x2, raw_params, NUM_HIDDEN_LAYERS,
                              approximate=True, emulate_bf16=True)
    assert out2.shape == (N2,)
    assert jnp.allclose(out2, ref2, atol=2e-3, rtol=2e-3), "mismatch (N=5000)"

    # num_hidden_layers == 1 edge case (no hidden stack, no bf16 path).
    kp1, rp1 = init_params(k_p, 1, NUM_HIDDEN_NEURONS)
    out1 = jax.block_until_ready(
        gelufcnet2d_forward(x[:257], kp1, num_hidden_layers=1))
    ref1 = _reference_forward(x[:257], rp1, 1, approximate=True)
    assert out1.shape == (257,)
    assert jnp.allclose(out1, ref1, atol=1e-3, rtol=1e-3), "mismatch (L=1)"

    print("KERNEL_OK")
</pallas_src>

<mosaic_0001>
module attributes {stable_mosaic.version = 11 : i64} {
  func.func @_mlp_kernel(%arg0: i32, %arg1: memref<2x512xf32, #tpu.memory_space<vmem>>, %arg2: memref<128x2xf32, #tpu.memory_space<vmem>>, %arg3: memref<128x1xf32, #tpu.memory_space<vmem>>, %arg4: memref<4x128x128xbf16, #tpu.memory_space<vmem>>, %arg5: memref<4x128x1xf32, #tpu.memory_space<vmem>>, %arg6: memref<1x128xf32, #tpu.memory_space<vmem>>, %arg7: memref<1x1xf32, #tpu.memory_space<vmem>>, %arg8: memref<1x512xf32, #tpu.memory_space<vmem>>) attributes {dimension_semantics = [#tpu.dimension_semantics<parallel>], iteration_bounds = array<i64: 2>, scalar_prefetch = 0 : i64, scratch_operands = 0 : i64, tpu.core_type = #tpu.core_type<tc>, window_params = [{transform_indices = @transform_0, window_bounds = array<i64: 2, 512>}, {pipeline_mode = #tpu.pipeline_mode<synchronous>, transform_indices = @transform_1, window_bounds = array<i64: 128, 2>}, {pipeline_mode = #tpu.pipeline_mode<synchronous>, transform_indices = @transform_2, window_bounds = array<i64: 128, 1>}, {pipeline_mode = #tpu.pipeline_mode<synchronous>, transform_indices = @transform_3, window_bounds = array<i64: 4, 128, 128>}, {pipeline_mode = #tpu.pipeline_mode<synchronous>, transform_indices = @transform_4, window_bounds = array<i64: 4, 128, 1>}, {pipeline_mode = #tpu.pipeline_mode<synchronous>, transform_indices = @transform_5, window_bounds = array<i64: 1, 128>}, {pipeline_mode = #tpu.pipeline_mode<synchronous>, transform_indices = @transform_6, window_bounds = array<i64: 1, 1>}, {transform_indices = @transform_7, window_bounds = array<i64: 1, 512>}]} {
    %c0 = arith.constant 0 : index
    %c0_0 = arith.constant 0 : index
    %0 = vector.load %arg1[%c0, %c0_0] : memref<2x512xf32, #tpu.memory_space<vmem>>, vector<2x512xf32>
    %c0_1 = arith.constant 0 : index
    %c0_2 = arith.constant 0 : index
    %1 = vector.load %arg2[%c0_1, %c0_2] : memref<128x2xf32, #tpu.memory_space<vmem>>, vector<128x2xf32>
    %2 = vector.extract_strided_slice %1 {offsets = [0, 0], sizes = [128, 1], strides = [1, 1]} : vector<128x2xf32> to vector<128x1xf32>
    %3 = vector.extract_strided_slice %0 {offsets = [0, 0], sizes = [1, 512], strides = [1, 1]} : vector<2x512xf32> to vector<1x512xf32>
    %4 = vector.broadcast %2 : vector<128x1xf32> to vector<128x512xf32>
    %5 = vector.broadcast %3 : vector<1x512xf32> to vector<128x512xf32>
    %6 = arith.mulf %4, %5 : vector<128x512xf32>
    %7 = vector.extract_strided_slice %1 {offsets = [0, 1], sizes = [128, 1], strides = [1, 1]} : vector<128x2xf32> to vector<128x1xf32>
    %8 = vector.extract_strided_slice %0 {offsets = [1, 0], sizes = [1, 512], strides = [1, 1]} : vector<2x512xf32> to vector<1x512xf32>
    %9 = vector.broadcast %7 : vector<128x1xf32> to vector<128x512xf32>
    %10 = vector.broadcast %8 : vector<1x512xf32> to vector<128x512xf32>
    %11 = arith.mulf %9, %10 : vector<128x512xf32>
    %12 = arith.addf %6, %11 : vector<128x512xf32>
    %c0_3 = arith.constant 0 : index
    %c0_4 = arith.constant 0 : index
    %13 = vector.load %arg3[%c0_3, %c0_4] : memref<128x1xf32, #tpu.memory_space<vmem>>, vector<128x1xf32>
    %14 = vector.broadcast %13 : vector<128x1xf32> to vector<128x512xf32>
    %15 = arith.addf %12, %14 : vector<128x512xf32>
    %cst = arith.constant 5.000000e-01 : f32
    %16 = vector.broadcast %cst : f32 to vector<128x512xf32>
    %17 = arith.mulf %16, %15 : vector<128x512xf32>
    %18 = arith.mulf %15, %15 : vector<128x512xf32>
    %19 = arith.mulf %18, %15 : vector<128x512xf32>
    %cst_5 = arith.constant 4.471500e-02 : f32
    %20 = vector.broadcast %cst_5 : f32 to vector<128x512xf32>
    %21 = arith.mulf %20, %19 : vector<128x512xf32>
    %22 = arith.addf %15, %21 : vector<128x512xf32>
    %cst_6 = arith.constant 0.797884583 : f32
    %23 = vector.broadcast %cst_6 : f32 to vector<128x512xf32>
    %24 = arith.mulf %23, %22 : vector<128x512xf32>
    %25 = math.tanh %24 : vector<128x512xf32>
    %cst_7 = arith.constant 1.000000e+00 : f32
    %26 = vector.broadcast %cst_7 : f32 to vector<128x512xf32>
    %27 = arith.addf %26, %25 : vector<128x512xf32>
    %28 = arith.mulf %17, %27 : vector<128x512xf32>
    %c0_8 = arith.constant 0 : index
    %c0_9 = arith.constant 0 : index
    %c0_10 = arith.constant 0 : index
    %29 = vector.load %arg4[%c0_8, %c0_9, %c0_10] : memref<4x128x128xbf16, #tpu.memory_space<vmem>>, vector<1x128x128xbf16>
    %30 = vector.shape_cast %29 : vector<1x128x128xbf16> to vector<128x128xbf16>
    %31 = arith.truncf %28 : vector<128x512xf32> to vector<128x512xbf16>
    %cst_11 = arith.constant dense<0.000000e+00> : vector<128x512xf32>
    %32 = tpu.matmul %30, %31, %cst_11 {dimension_numbers = #tpu.dot_dimension_numbers<[1], [0], [0], [1], [0, 0, 1, 1], [], []>} : vector<128x128xbf16>, vector<128x512xbf16>, vector<128x512xf32> -> vector<128x512xf32>
    %c0_12 = arith.constant 0 : index
    %c0_13 = arith.constant 0 : index
    %c0_14 = arith.constant 0 : index
    %33 = vector.load %arg5[%c0_12, %c0_13, %c0_14] : memref<4x128x1xf32, #tpu.memory_space<vmem>>, vector<1x128x1xf32>
    %34 = vector.shape_cast %33 : vector<1x128x1xf32> to vector<128x1xf32>
    %35 = vector.broadcast %34 : vector<128x1xf32> to vector<128x512xf32>
    %36 = arith.addf %32, %35 : vector<128x512xf32>
    %cst_15 = arith.constant 5.000000e-01 : f32
    %37 = vector.broadcast %cst_15 : f32 to vector<128x512xf32>
    %38 = arith.mulf %37, %36 : vector<128x512xf32>
    %39 = arith.mulf %36, %36 : vector<128x512xf32>
    %40 = arith.mulf %39, %36 : vector<128x512xf32>
    %cst_16 = arith.constant 4.471500e-02 : f32
    %41 = vector.broadcast %cst_16 : f32 to vector<128x512xf32>
    %42 = arith.mulf %41, %40 : vector<128x512xf32>
    %43 = arith.addf %36, %42 : vector<128x512xf32>
    %cst_17 = arith.constant 0.797884583 : f32
    %44 = vector.broadcast %cst_17 : f32 to vector<128x512xf32>
    %45 = arith.mulf %44, %43 : vector<128x512xf32>
    %46 = math.tanh %45 : vector<128x512xf32>
    %cst_18 = arith.constant 1.000000e+00 : f32
    %47 = vector.broadcast %cst_18 : f32 to vector<128x512xf32>
    %48 = arith.addf %47, %46 : vector<128x512xf32>
    %49 = arith.mulf %38, %48 : vector<128x512xf32>
    %c1 = arith.constant 1 : index
    %c0_19 = arith.constant 0 : index
    %c0_20 = arith.constant 0 : index
    %50 = vector.load %arg4[%c1, %c0_19, %c0_20] : memref<4x128x128xbf16, #tpu.memory_space<vmem>>, vector<1x128x128xbf16>
    %51 = vector.shape_cast %50 : vector<1x128x128xbf16> to vector<128x128xbf16>
    %52 = arith.truncf %49 : vector<128x512xf32> to vector<128x512xbf16>
    %cst_21 = arith.constant dense<0.000000e+00> : vector<128x512xf32>
    %53 = tpu.matmul %51, %52, %cst_21 {dimension_numbers = #tpu.dot_dimension_numbers<[1], [0], [0], [1], [0, 0, 1, 1], [], []>} : vector<128x128xbf16>, vector<128x512xbf16>, vector<128x512xf32> -> vector<128x512xf32>
    %c1_22 = arith.constant 1 : index
    %c0_23 = arith.constant 0 : index
    %c0_24 = arith.constant 0 : index
    %54 = vector.load %arg5[%c1_22, %c0_23, %c0_24] : memref<4x128x1xf32, #tpu.memory_space<vmem>>, vector<1x128x1xf32>
    %55 = vector.shape_cast %54 : vector<1x128x1xf32> to vector<128x1xf32>
    %56 = vector.broadcast %55 : vector<128x1xf32> to vector<128x512xf32>
    %57 = arith.addf %53, %56 : vector<128x512xf32>
    %cst_25 = arith.constant 5.000000e-01 : f32
    %58 = vector.broadcast %cst_25 : f32 to vector<128x512xf32>
    %59 = arith.mulf %58, %57 : vector<128x512xf32>
    %60 = arith.mulf %57, %57 : vector<128x512xf32>
    %61 = arith.mulf %60, %57 : vector<128x512xf32>
    %cst_26 = arith.constant 4.471500e-02 : f32
    %62 = vector.broadcast %cst_26 : f32 to vector<128x512xf32>
    %63 = arith.mulf %62, %61 : vector<128x512xf32>
    %64 = arith.addf %57, %63 : vector<128x512xf32>
    %cst_27 = arith.constant 0.797884583 : f32
    %65 = vector.broadcast %cst_27 : f32 to vector<128x512xf32>
    %66 = arith.mulf %65, %64 : vector<128x512xf32>
    %67 = math.tanh %66 : vector<128x512xf32>
    %cst_28 = arith.constant 1.000000e+00 : f32
    %68 = vector.broadcast %cst_28 : f32 to vector<128x512xf32>
    %69 = arith.addf %68, %67 : vector<128x512xf32>
    %70 = arith.mulf %59, %69 : vector<128x512xf32>
    %c2 = arith.constant 2 : index
    %c0_29 = arith.constant 0 : index
    %c0_30 = arith.constant 0 : index
    %71 = vector.load %arg4[%c2, %c0_29, %c0_30] : memref<4x128x128xbf16, #tpu.memory_space<vmem>>, vector<1x128x128xbf16>
    %72 = vector.shape_cast %71 : vector<1x128x128xbf16> to vector<128x128xbf16>
    %73 = arith.truncf %70 : vector<128x512xf32> to vector<128x512xbf16>
    %cst_31 = arith.constant dense<0.000000e+00> : vector<128x512xf32>
    %74 = tpu.matmul %72, %73, %cst_31 {dimension_numbers = #tpu.dot_dimension_numbers<[1], [0], [0], [1], [0, 0, 1, 1], [], []>} : vector<128x128xbf16>, vector<128x512xbf16>, vector<128x512xf32> -> vector<128x512xf32>
    %c2_32 = arith.constant 2 : index
    %c0_33 = arith.constant 0 : index
    %c0_34 = arith.constant 0 : index
    %75 = vector.load %arg5[%c2_32, %c0_33, %c0_34] : memref<4x128x1xf32, #tpu.memory_space<vmem>>, vector<1x128x1xf32>
    %76 = vector.shape_cast %75 : vector<1x128x1xf32> to vector<128x1xf32>
    %77 = vector.broadcast %76 : vector<128x1xf32> to vector<128x512xf32>
    %78 = arith.addf %74, %77 : vector<128x512xf32>
    %cst_35 = arith.constant 5.000000e-01 : f32
    %79 = vector.broadcast %cst_35 : f32 to vector<128x512xf32>
    %80 = arith.mulf %79, %78 : vector<128x512xf32>
    %81 = arith.mulf %78, %78 : vector<128x512xf32>
    %82 = arith.mulf %81, %78 : vector<128x512xf32>
    %cst_36 = arith.constant 4.471500e-02 : f32
    %83 = vector.broadcast %cst_36 : f32 to vector<128x512xf32>
    %84 = arith.mulf %83, %82 : vector<128x512xf32>
    %85 = arith.addf %78, %84 : vector<128x512xf32>
    %cst_37 = arith.constant 0.797884583 : f32
    %86 = vector.broadcast %cst_37 : f32 to vector<128x512xf32>
    %87 = arith.mulf %86, %85 : vector<128x512xf32>
    %88 = math.tanh %87 : vector<128x512xf32>
    %cst_38 = arith.constant 1.000000e+00 : f32
    %89 = vector.broadcast %cst_38 : f32 to vector<128x512xf32>
    %90 = arith.addf %89, %88 : vector<128x512xf32>
    %91 = arith.mulf %80, %90 : vector<128x512xf32>
    %c3 = arith.constant 3 : index
    %c0_39 = arith.constant 0 : index
    %c0_40 = arith.constant 0 : index
    %92 = vector.load %arg4[%c3, %c0_39, %c0_40] : memref<4x128x128xbf16, #tpu.memory_space<vmem>>, vector<1x128x128xbf16>
    %93 = vector.shape_cast %92 : vector<1x128x128xbf16> to vector<128x128xbf16>
    %94 = arith.truncf %91 : vector<128x512xf32> to vector<128x512xbf16>
    %cst_41 = arith.constant dense<0.000000e+00> : vector<128x512xf32>
    %95 = tpu.matmul %93, %94, %cst_41 {dimension_numbers = #tpu.dot_dimension_numbers<[1], [0], [0], [1], [0, 0, 1, 1], [], []>} : vector<128x128xbf16>, vector<128x512xbf16>, vector<128x512xf32> -> vector<128x512xf32>
    %c3_42 = arith.constant 3 : index
    %c0_43 = arith.constant 0 : index
    %c0_44 = arith.constant 0 : index
    %96 = vector.load %arg5[%c3_42, %c0_43, %c0_44] : memref<4x128x1xf32, #tpu.memory_space<vmem>>, vector<1x128x1xf32>
    %97 = vector.shape_cast %96 : vector<1x128x1xf32> to vector<128x1xf32>
    %98 = vector.broadcast %97 : vector<128x1xf32> to vector<128x512xf32>
    %99 = arith.addf %95, %98 : vector<128x512xf32>
    %cst_45 = arith.constant 5.000000e-01 : f32
    %100 = vector.broadcast %cst_45 : f32 to vector<128x512xf32>
    %101 = arith.mulf %100, %99 : vector<128x512xf32>
    %102 = arith.mulf %99, %99 : vector<128x512xf32>
    %103 = arith.mulf %102, %99 : vector<128x512xf32>
    %cst_46 = arith.constant 4.471500e-02 : f32
    %104 = vector.broadcast %cst_46 : f32 to vector<128x512xf32>
    %105 = arith.mulf %104, %103 : vector<128x512xf32>
    %106 = arith.addf %99, %105 : vector<128x512xf32>
    %cst_47 = arith.constant 0.797884583 : f32
    %107 = vector.broadcast %cst_47 : f32 to vector<128x512xf32>
    %108 = arith.mulf %107, %106 : vector<128x512xf32>
    %109 = math.tanh %108 : vector<128x512xf32>
    %cst_48 = arith.constant 1.000000e+00 : f32
    %110 = vector.broadcast %cst_48 : f32 to vector<128x512xf32>
    %111 = arith.addf %110, %109 : vector<128x512xf32>
    %112 = arith.mulf %101, %111 : vector<128x512xf32>
    %c0_49 = arith.constant 0 : index
    %c0_50 = arith.constant 0 : index
    %113 = vector.load %arg6[%c0_49, %c0_50] : memref<1x128xf32, #tpu.memory_space<vmem>>, vector<1x128xf32>
    %cst_51 = arith.constant dense<0.000000e+00> : vector<1x512xf32>
    %114 = tpu.matmul %113, %112, %cst_51 {dimension_numbers = #tpu.dot_dimension_numbers<[1], [0], [0], [1], [0, 0, 1, 1], [], []>} : vector<1x128xf32>, vector<128x512xf32>, vector<1x512xf32> -> vector<1x512xf32>
    %c0_52 = arith.constant 0 : index
    %c0_53 = arith.constant 0 : index
    %115 = vector.load %arg7[%c0_52, %c0_53] : memref<1x1xf32, #tpu.memory_space<vmem>>, vector<1x1xf32>
    %116 = vector.broadcast %115 : vector<1x1xf32> to vector<1x512xf32>
    %117 = arith.addf %114, %116 : vector<1x512xf32>
    %c0_54 = arith.constant 0 : index
    %c0_55 = arith.constant 0 : index
    %118 = vector.load %arg8[%c0_54, %c0_55] : memref<1x512xf32, #tpu.memory_space<vmem>>, vector<1x512xf32>
    tpu.vector_store %arg8[%c0_54, %c0_55], %117 {strides = array<i32>} : memref<1x512xf32, #tpu.memory_space<vmem>>, vector<1x512xf32>,
    return
  }
  func.func @transform_0(%arg0: i32) -> (i32, i32) {
    %c0_i32 = arith.constant 0 : i32
    %c0_i32_0 = arith.constant 0 : i32
    return %c0_i32, %arg0 : i32, i32
  }
  func.func @transform_1(%arg0: i32) -> (i32, i32) {
    %c0_i32 = arith.constant 0 : i32
    %c0_i32_0 = arith.constant 0 : i32
    %c0_i32_1 = arith.constant 0 : i32
    return %c0_i32, %c0_i32_0 : i32, i32
  }
  func.func @transform_2(%arg0: i32) -> (i32, i32) {
    %c0_i32 = arith.constant 0 : i32
    %c0_i32_0 = arith.constant 0 : i32
    %c0_i32_1 = arith.constant 0 : i32
    return %c0_i32, %c0_i32_0 : i32, i32
  }
  func.func @transform_3(%arg0: i32) -> (i32, i32, i32) {
    %c0_i32 = arith.constant 0 : i32
    %c0_i32_0 = arith.constant 0 : i32
    %c0_i32_1 = arith.constant 0 : i32
    %c0_i32_2 = arith.constant 0 : i32
    return %c0_i32, %c0_i32_0, %c0_i32_1 : i32, i32, i32
  }
  func.func @transform_4(%arg0: i32) -> (i32, i32, i32) {
    %c0_i32 = arith.constant 0 : i32
    %c0_i32_0 = arith.constant 0 : i32
    %c0_i32_1 = arith.constant 0 : i32
    %c0_i32_2 = arith.constant 0 : i32
    return %c0_i32, %c0_i32_0, %c0_i32_1 : i32, i32, i32
  }
  func.func @transform_5(%arg0: i32) -> (i32, i32) {
    %c0_i32 = arith.constant 0 : i32
    %c0_i32_0 = arith.constant 0 : i32
    %c0_i32_1 = arith.constant 0 : i32
    return %c0_i32, %c0_i32_0 : i32, i32
  }
  func.func @transform_6(%arg0: i32) -> (i32, i32) {
    %c0_i32 = arith.constant 0 : i32
    %c0_i32_0 = arith.constant 0 : i32
    %c0_i32_1 = arith.constant 0 : i32
    return %c0_i32, %c0_i32_0 : i32, i32
  }
  func.func @transform_7(%arg0: i32) -> (i32, i32) {
    %c0_i32 = arith.constant 0 : i32
    %c0_i32_0 = arith.constant 0 : i32
    return %c0_i32, %arg0 : i32, i32
  }
}

</mosaic_0001>

<llo_original>
// kernel: gelufcnet2d_forward.1
$region0: #{gelufcnet2d_forward.1}
  #allocation0 [shape = 'u32[]', space=smem, size = 0x4, offset = 0x4, fixed_abs, tag = 'smem constant byte address 0x4 - core index']
  #allocation1 [shape = 'u32[144,128]{1,0:T(1,128)}', space=vmem, size = 0x12000, scoped, tag = 'internal scratch']
  #allocation2 [shape = 'f32[1,1]{1,0:T(1,128)S(1)}', space=vmem, size = 0x200, scoped, tag = 'scoped memory for gelufcnet2d_forward.1']
  %s0 = inlined_call_operand.vmem [shape: f32[2,1024], index: 0, kind: input, shape index: {}]
  %s1 = inlined_call_operand.vmem [shape: f32[128,2], index: 1, kind: input, shape index: {}]
  %s2 = inlined_call_operand.vmem [shape: f32[128,1], index: 2, kind: input, shape index: {}]
  %s3 = inlined_call_operand.vmem [shape: bf16[4,128,128], index: 3, kind: input, shape index: {}]
  %s4 = inlined_call_operand.vmem [shape: f32[4,128,1], index: 4, kind: input, shape index: {}]
  %s5 = inlined_call_operand.vmem [shape: f32[1,128], index: 5, kind: input, shape index: {}]
  %s6 = inlined_call_operand.<no memory space> [shape: f32[1,1], index: 6, kind: input, shape index: {}]
  %s7 = inlined_call_operand.hbm [shape: f32[1,1024], index: 7, kind: output, shape index: {}]
  %s8 = sld [smem:[#allocation0]]
  $region61: #{gelufcnet2d_forward.1} parent=0
    _
  %s10 = ssub.s32 1, %s8
  %s11 = scalar_select 0, %s10, %s8
  %v12 = vstv %s6
  %13 = vst [vmem:[#allocation2] sm:$0x1] %v12
  $region1: #{gelufcnet2d_forward.1} parent=0
    #allocation3 [shape = 'u8[4096]{0}', space=vmem, size = 0x1000, scoped, tag = 'output window, operand 0']
    #allocation4 [shape = 's32[2]{0}', space=sflag, size = 0x8, scoped, tag = 'scoped memory for gelufcnet2d_forward.1']
    %14 = vsyncpa [#allocation4], 0
    %s15 = scalar_lea.sflag [#allocation4], 1
    %16 = vsyncpa %s15, 0
    loop: start=0, step=1, limit=4
    $region2: #{gelufcnet2d_forward.1} parent=1 // loop_pre_header
      _
    $region3: #{gelufcnet2d_forward.1} parent=1 // loop_header
      %s18 = sphi 0, %s22
      %p19 = scmp.ge.s32.totalorder %s18, 4
      %s28 = sphi 0, %s30
      %s31 = sphi 0, %s28
      %s32 = sphi 0, %s31
      %s48 = sphi 0, %s32
      %s52 = sphi 0, %s52
      %s54 = sphi 0, %s52
      %s55 = sphi 0, %s54
      %s69 = sphi 0, %s55
      %s73 = sphi 0, %s73
      %s75 = sphi 0, %s73
      %s76 = sphi 0, %s75
      %s90 = sphi 0, %s76
      %s94 = sphi 0, %s94
      %s96 = sphi 0, %s94
      %s97 = sphi 0, %s96
      %s111 = sphi 0, %s97
      %s115 = sphi 0, %s115
      %s117 = sphi 0, %s115
      %s118 = sphi 0, %s117
      %s132 = sphi 0, %s118
      %s136 = sphi 0, %s136
      %s138 = sphi 0, %s136
      %s139 = sphi 0, %s138
      %s153 = sphi 0, %s139
      %s157 = sphi 0, %s157
      %s159 = sphi 0, %s157
      %s160 = sphi 0, %s159
      %s174 = sphi 0, %s160
      %s180 = sphi 0, %s182
      %s183 = sphi 0, %s180
      %s184 = sphi 0, %s183
      %s200 = sphi 0, %s184
    $region4: #{gelufcnet2d_forward.1} parent=1 // loop_header_branch
      %21 = sbr.rel (%p19) target = $region8
    $region5: #{gelufcnet2d_forward.1} parent=1 // loop_body
      %s23 = ssub.s32 %s18, 1
      %s24 = ssub.s32 %s18, 2
      %s25 = sadd.s32 %s18, 1
      %s26 = ssub.s32 %s18, %s25
      %p27 = scmp.eq.s32.totalorder %s26, 0
      %s29 = sadd.s32 %s28, 1
      %s30 = scalar_select %p27, %s28, %s29
      %p33 = pneg %p27
      %p34 = scmp.eq.s32.totalorder %s18, 1
      %p35 = por %p33, %p34
      %p36 = scmp.ne.s32.totalorder %s28, %s31
      %p37 = scmp.eq.s32.totalorder %s18, 0
      %p38 = por %p36, %p37
      %p39 = scmp.ne.s32.totalorder %s28, %s31
      %p40 = scmp.eq.s32.totalorder %s23, 1
      %p41 = por %p39, %p40
      %p42 = scmp.ne.s32.totalorder %s31, %s32
      %p43 = scmp.eq.s32.totalorder %s23, 0
      %p44 = por %p42, %p43
      %p45 = scmp.ne.s32.totalorder %s31, %s32
      %p46 = scmp.eq.s32.totalorder %s24, 1
      %p47 = por %p45, %p46
      %p49 = scmp.ne.s32.totalorder %s32, %s48
      %p50 = scmp.eq.s32.totalorder %s24, 0
      %p51 = por %p49, %p50
      %s53 = sadd.s32 %s52, 1
      %p56 = scmp.eq.s32.totalorder %s18, 1
      %p57 = scmp.ne.s32.totalorder %s52, %s54
      %p58 = scmp.eq.s32.totalorder %s18, 0
      %p59 = por %p57, %p58
      %p60 = scmp.ne.s32.totalorder %s52, %s54
      %p61 = scmp.eq.s32.totalorder %s23, 1
      %p62 = por %p60, %p61
      %p63 = scmp.ne.s32.totalorder %s54, %s55
      %p64 = scmp.eq.s32.totalorder %s23, 0
      %p65 = por %p63, %p64
      %p66 = scmp.ne.s32.totalorder %s54, %s55
      %p67 = scmp.eq.s32.totalorder %s24, 1
      %p68 = por %p66, %p67
      %p70 = scmp.ne.s32.totalorder %s55, %s69
      %p71 = scmp.eq.s32.totalorder %s24, 0
      %p72 = por %p70, %p71
      %s74 = sadd.s32 %s73, 1
      %p77 = scmp.eq.s32.totalorder %s18, 1
      %p78 = scmp.ne.s32.totalorder %s73, %s75
      %p79 = scmp.eq.s32.totalorder %s18, 0
      %p80 = por %p78, %p79
      %p81 = scmp.ne.s32.totalorder %s73, %s75
      %p82 = scmp.eq.s32.totalorder %s23, 1
      %p83 = por %p81, %p82
      %p84 = scmp.ne.s32.totalorder %s75, %s76
      %p85 = scmp.eq.s32.totalorder %s23, 0
      %p86 = por %p84, %p85
      %p87 = scmp.ne.s32.totalorder %s75, %s76
      %p88 = scmp.eq.s32.totalorder %s24, 1
      %p89 = por %p87, %p88
      %p91 = scmp.ne.s32.totalorder %s76, %s90
      %p92 = scmp.eq.s32.totalorder %s24, 0
      %p93 = por %p91, %p92
      %s95 = sadd.s32 %s94, 1
      %p98 = scmp.eq.s32.totalorder %s18, 1
      %p99 = scmp.ne.s32.totalorder %s94, %s96
      %p100 = scmp.eq.s32.totalorder %s18, 0
      %p101 = por %p99, %p100
      %p102 = scmp.ne.s32.totalorder %s94, %s96
      %p103 = scmp.eq.s32.totalorder %s23, 1
      %p104 = por %p102, %p103
      %p105 = scmp.ne.s32.totalorder %s96, %s97
      %p106 = scmp.eq.s32.totalorder %s23, 0
      %p107 = por %p105, %p106
      %p108 = scmp.ne.s32.totalorder %s96, %s97
      %p109 = scmp.eq.s32.totalorder %s24, 1
      %p110 = por %p108, %p109
      %p112 = scmp.ne.s32.totalorder %s97, %s111
      %p113 = scmp.eq.s32.totalorder %s24, 0
      %p114 = por %p112, %p113
      %s116 = sadd.s32 %s115, 1
      %p119 = scmp.eq.s32.totalorder %s18, 1
      %p120 = scmp.ne.s32.totalorder %s115, %s117
      %p121 = scmp.eq.s32.totalorder %s18, 0
      %p122 = por %p120, %p121
      %p123 = scmp.ne.s32.totalorder %s115, %s117
      %p124 = scmp.eq.s32.totalorder %s23, 1
      %p125 = por %p123, %p124
      %p126 = scmp.ne.s32.totalorder %s117, %s118
      %p127 = scmp.eq.s32.totalorder %s23, 0
      %p128 = por %p126, %p127
      %p129 = scmp.ne.s32.totalorder %s117, %s118
      %p130 = scmp.eq.s32.totalorder %s24, 1
      %p131 = por %p129, %p130
      %p133 = scmp.ne.s32.totalorder %s118, %s132
      %p134 = scmp.eq.s32.totalorder %s24, 0
      %p135 = por %p133, %p134
      %s137 = sadd.s32 %s136, 1
      %p140 = scmp.eq.s32.totalorder %s18, 1
      %p141 = scmp.ne.s32.totalorder %s136, %s138
      %p142 = scmp.eq.s32.totalorder %s18, 0
      %p143 = por %p141, %p142
      %p144 = scmp.ne.s32.totalorder %s136, %s138
      %p145 = scmp.eq.s32.totalorder %s23, 1
      %p146 = por %p144, %p145
      %p147 = scmp.ne.s32.totalorder %s138, %s139
      %p148 = scmp.eq.s32.totalorder %s23, 0
      %p149 = por %p147, %p148
      %p150 = scmp.ne.s32.totalorder %s138, %s139
      %p151 = scmp.eq.s32.totalorder %s24, 1
      %p152 = por %p150, %p151
      %p154 = scmp.ne.s32.totalorder %s139, %s153
      %p155 = scmp.eq.s32.totalorder %s24, 0
      %p156 = por %p154, %p155
      %s158 = sadd.s32 %s157, 1
      %p161 = scmp.eq.s32.totalorder %s18, 1
      %p162 = scmp.ne.s32.totalorder %s157, %s159
      %p163 = scmp.eq.s32.totalorder %s18, 0
      %p164 = por %p162, %p163
      %p165 = scmp.ne.s32.totalorder %s157, %s159
      %p166 = scmp.eq.s32.totalorder %s23, 1
      %p167 = por %p165, %p166
      %p168 = scmp.ne.s32.totalorder %s159, %s160
      %p169 = scmp.eq.s32.totalorder %s23, 0
      %p170 = por %p168, %p169
      %p171 = scmp.ne.s32.totalorder %s159, %s160
      %p172 = scmp.eq.s32.totalorder %s24, 1
      %p173 = por %p171, %p172
      %p175 = scmp.ne.s32.totalorder %s160, %s174
      %p176 = scmp.eq.s32.totalorder %s24, 0
      %p177 = por %p175, %p176
      %s178 = ssub.s32 %s18, %s25
      %p179 = scmp.eq.s32.totalorder %s178, 0
      %s181 = sadd.s32 %s180, 1
      %s182 = scalar_select %p179, %s180, %s181
      %p185 = pneg %p179
      %p186 = scmp.eq.s32.totalorder %s18, 1
      %p187 = por %p185, %p186
      %p188 = scmp.ne.s32.totalorder %s180, %s183
      %p189 = scmp.eq.s32.totalorder %s18, 0
      %p190 = por %p188, %p189
      %p191 = scmp.ne.s32.totalorder %s180, %s183
      %p192 = scmp.eq.s32.totalorder %s23, 1
      %p193 = por %p191, %p192
      %p194 = scmp.ne.s32.totalorder %s183, %s184
      %p195 = scmp.eq.s32.totalorder %s23, 0
      %p196 = por %p194, %p195
      %p197 = scmp.ne.s32.totalorder %s183, %s184
      %p198 = scmp.eq.s32.totalorder %s24, 1
      %p199 = por %p197, %p198
      %p201 = scmp.ne.s32.totalorder %s184, %s200
      %p202 = scmp.eq.s32.totalorder %s24, 0
      %p203 = por %p201, %p202
      %p204 = scmp.le.s32.totalorder 1, %s18
      %p205 = scmp.lt.s32.totalorder %s18, 3
      %p206 = pnand %p204, %p205
      %p207 = pneg %p206
      // Predicated region
      $region9: #{gelufcnet2d_forward.1} parent=5 // pred_check
        _
      $region10: #{gelufcnet2d_forward.1} parent=5 // pred_check_branch
        %209 = sbr.rel (%p206) target = $region12
      $region11: #{gelufcnet2d_forward.1} parent=5 // pred_region
        %s210 = ssub.s32 %s18, 1
        // Predicated region
        $region13: #{gelufcnet2d_forward.1} parent=11 // pred_check
          %p211 = pneg %p65
        $region14: #{gelufcnet2d_forward.1} parent=11 // pred_check_branch
          %213 = sbr.rel (%p211) target = $region16
        $region15: #{gelufcnet2d_forward.1} parent=11 // pred_region
          _
        $region16: #{gelufcnet2d_forward.1} parent=11 // pred_fallthru
          _
        // Predicated region
        $region17: #{gelufcnet2d_forward.1} parent=11 // pred_check
          %p214 = pneg %p86
        $region18: #{gelufcnet2d_forward.1} parent=11 // pred_check_branch
          %216 = sbr.rel (%p214) target = $region20
        $region19: #{gelufcnet2d_forward.1} parent=11 // pred_region
          _
        $region20: #{gelufcnet2d_forward.1} parent=11 // pred_fallthru
          _
        // Predicated region
        $region21: #{gelufcnet2d_forward.1} parent=11 // pred_check
          %p217 = pneg %p107
        $region22: #{gelufcnet2d_forward.1} parent=11 // pred_check_branch
          %219 = sbr.rel (%p217) target = $region24
        $region23: #{gelufcnet2d_forward.1} parent=11 // pred_region
          _
        $region24: #{gelufcnet2d_forward.1} parent=11 // pred_fallthru
          _
        // Predicated region
        $region25: #{gelufcnet2d_forward.1} parent=11 // pred_check
          %p220 = pneg %p128
        $region26: #{gelufcnet2d_forward.1} parent=11 // pred_check_branch
          %222 = sbr.rel (%p220) target = $region28
        $region27: #{gelufcnet2d_forward.1} parent=11 // pred_region
          _
        $region28: #{gelufcnet2d_forward.1} parent=11 // pred_fallthru
          _
        // Predicated region
        $region29: #{gelufcnet2d_forward.1} parent=11 // pred_check
          %p223 = pneg %p149
        $region30: #{gelufcnet2d_forward.1} parent=11 // pred_check_branch
          %225 = sbr.rel (%p223) target = $region32
        $region31: #{gelufcnet2d_forward.1} parent=11 // pred_region
          _
        $region32: #{gelufcnet2d_forward.1} parent=11 // pred_fallthru
          _
        // Predicated region
        $region33: #{gelufcnet2d_forward.1} parent=11 // pred_check
          %p226 = pneg %p170
        $region34: #{gelufcnet2d_forward.1} parent=11 // pred_check_branch
          %228 = sbr.rel (%p226) target = $region36
        $region35: #{gelufcnet2d_forward.1} parent=11 // pred_region
          _
        $region36: #{gelufcnet2d_forward.1} parent=11 // pred_fallthru
          _
      $region12: #{gelufcnet2d_forward.1} parent=5 // pred_fallthru
        _
      %p229 = scmp.lt.s32.totalorder %s18, 2
      // Predicated region
      $region37: #{gelufcnet2d_forward.1} parent=5 // pred_check
        %p230 = pneg %p229
      $region38: #{gelufcnet2d_forward.1} parent=5 // pred_check_branch
        %232 = sbr.rel (%p230) target = $region40
      $region39: #{gelufcnet2d_forward.1} parent=5 // pred_region
        // Predicated region
        $region41: #{gelufcnet2d_forward.1} parent=39 // pred_check
          %p233 = pneg %p38
        $region42: #{gelufcnet2d_forward.1} parent=39 // pred_check_branch
          %235 = sbr.rel (%p233) target = $region44
        $region43: #{gelufcnet2d_forward.1} parent=39 // pred_region
          %s236 = smul.u32 4, %s18
          %p237 = scmp.lt.s32.totalorder %s236, 7
          %s238 = scalar_select %p237, %s236, 7
          %s239 = smul.addr %s238, 2
          %s240 = scalar_lea.vmem %s0, %s239
          %s241 = smul.u32 4, %s18
        $region44: #{gelufcnet2d_forward.1} parent=39 // pred_fallthru
          _
      $region40: #{gelufcnet2d_forward.1} parent=5 // pred_fallthru
        _
      %p242 = scmp.le.s32.totalorder 1, %s18
      %p243 = scmp.lt.s32.totalorder %s18, 3
      %p244 = pnand %p242, %p243
      %p245 = pneg %p244
      // Predicated region
      $region45: #{gelufcnet2d_forward.1} parent=5 // pred_check
        _
      $region46: #{gelufcnet2d_forward.1} parent=5 // pred_check_branch
        %247 = sbr.rel (%p244) target = $region48
      $region47: #{gelufcnet2d_forward.1} parent=5 // pred_region
        %s248 = ssub.s32 %s18, 1
        %s249 = smul.u32 4, %s23
        %p250 = scmp.lt.s32.totalorder %s249, 7
        %s251 = scalar_select %p250, %s249, 7
        %s252 = smul.addr %s251, 2
        %s253 = scalar_lea.vmem %s0, %s252
        %p254 = pneg %p44
        %p255 = pneg %p41
        %p256 = pneg %p65
        %p257 = pneg %p62
        %p258 = pneg %p86
        %p259 = pneg %p83
        %p260 = pneg %p107
        %p261 = pneg %p104
        %p262 = pneg %p128
        %p263 = pneg %p125
        %p264 = pneg %p149
        %p265 = pneg %p146
        %p266 = pneg %p170
        %p267 = pneg %p167
        %p268 = pneg %p196
        %p269 = pneg %p193
        %s270 = sand.u32 %s183, 1
        %s271 = scalar_lea.sflag [#allocation4], %s270
        %s272 = sand.u32 %s183, 1
        %s273 = smul.addr %s272, 4
        %s274 = scalar_lea.vmem [#allocation3], %s273
        %s275 = smul.u32 4, %s23
        %p276 = scmp.lt.s32.totalorder %s275, 7
        %s277 = scalar_select %p276, %s275, 7
        %s278 = smul.addr %s277, 2
        %s279 = scalar_lea.vmem %s0, %s278
        %s280 = smul.u32 4, %s23
        %s281 = smul.u32 4, %s23
        %v283 = vld [vmem:[%s279] sm:$0xff]
        %v284 = vld [vmem:[%s1] sm:$0xff]
        %v285 = vld [vmem:[%s1 + $0x8] sm:$0xff]
        %v286 = vld [vmem:[%s1 + $0x10] sm:$0xff]
        %v287 = vld [vmem:[%s1 + $0x18] sm:$0xff]
        %v288 = vld [vmem:[%s1 + $0x20] sm:$0xff]
        %v289 = vld [vmem:[%s1 + $0x28] sm:$0xff]
        %v290 = vld [vmem:[%s1 + $0x30] sm:$0xff]
        %v291 = vld [vmem:[%s1 + $0x38] sm:$0xff]
        %v292 = vld [vmem:[%s1 + $0x40] sm:$0xff]
        %v293 = vld [vmem:[%s1 + $0x48] sm:$0xff]
        %v294 = vld [vmem:[%s1 + $0x50] sm:$0xff]
        %v295 = vld [vmem:[%s1 + $0x58] sm:$0xff]
        %v296 = vld [vmem:[%s1 + $0x60] sm:$0xff]
        %v297 = vld [vmem:[%s1 + $0x68] sm:$0xff]
        %v298 = vld [vmem:[%s1 + $0x70] sm:$0xff]
        %v299 = vld [vmem:[%s1 + $0x78] sm:$0xff]
        %301 = vset.pattern.permute.xlu0 0
        %302 = vperm.xlu0 %301, %v284
        %v303 = vpop.permute.xlu0 %302
        %306 = vset.pattern.permute.xlu0 0
        %307 = vperm.xlu0 %306, %v285
        %v308 = vpop.permute.xlu0 %307
        %311 = vset.pattern.permute.xlu0 0
        %312 = vperm.xlu0 %311, %v286
        %v313 = vpop.permute.xlu0 %312
        %316 = vset.pattern.permute.xlu0 0
        %317 = vperm.xlu0 %316, %v287
        %v318 = vpop.permute.xlu0 %317
        %321 = vset.pattern.permute.xlu0 0
        %322 = vperm.xlu0 %321, %v288
        %v323 = vpop.permute.xlu0 %322
        %326 = vset.pattern.permute.xlu0 0
        %327 = vperm.xlu0 %326, %v289
        %v328 = vpop.permute.xlu0 %327
        %331 = vset.pattern.permute.xlu0 0
        %332 = vperm.xlu0 %331, %v290
        %v333 = vpop.permute.xlu0 %332
        %336 = vset.pattern.permute.xlu0 0
        %337 = vperm.xlu0 %336, %v291
        %v338 = vpop.permute.xlu0 %337
        %341 = vset.pattern.permute.xlu0 0
        %342 = vperm.xlu0 %341, %v292
        %v343 = vpop.permute.xlu0 %342
        %346 = vset.pattern.permute.xlu0 0
        %347 = vperm.xlu0 %346, %v293
        %v348 = vpop.permute.xlu0 %347
        %351 = vset.pattern.permute.xlu0 0
        %352 = vperm.xlu0 %351, %v294
        %v353 = vpop.permute.xlu0 %352
        %356 = vset.pattern.permute.xlu0 0
        %357 = vperm.xlu0 %356, %v295
        %v358 = vpop.permute.xlu0 %357
        %361 = vset.pattern.permute.xlu0 0
        %362 = vperm.xlu0 %361, %v296
        %v363 = vpop.permute.xlu0 %362
        %366 = vset.pattern.permute.xlu0 0
        %367 = vperm.xlu0 %366, %v297
        %v368 = vpop.permute.xlu0 %367
        %371 = vset.pattern.permute.xlu0 0
        %372 = vperm.xlu0 %371, %v298
        %v373 = vpop.permute.xlu0 %372
        %376 = vset.pattern.permute.xlu0 0
        %377 = vperm.xlu0 %376, %v299
        %v378 = vpop.permute.xlu0 %377
        %v381 = vlaneseq
        %v382 = vshrl.u32 %v381, 7
        %v383 = vsub.s32 0, %v382
        %v384 = vrot.slane %v283, %v383
        %v385 = vlaneseq
        %v386 = vshrl.u32 %v385, 7
        %v387 = vsub.s32 2, %v386
        %v388 = vrot.slane %v283, %v387
        %v389 = vlaneseq
        %v390 = vshrl.u32 %v389, 7
        %v391 = vsub.s32 4, %v390
        %v392 = vrot.slane %v283, %v391
        %v393 = vlaneseq
        %v394 = vshrl.u32 %v393, 7
        %v395 = vsub.s32 6, %v394
        %v396 = vrot.slane %v283, %v395
        %v401 = vlaneseq
        %v402 = vshrl.u32 %v401, 7
        %v403 = vsub.s32 0, %v402
        %v404 = vrot.slane %v384, %v403
        %v405 = vlaneseq
        %v406 = vshrl.u32 %v405, 7
        %v407 = vsub.s32 0, %v406
        %v408 = vrot.slane %v388, %v407
        %v409 = vlaneseq
        %v410 = vshrl.u32 %v409, 7
        %v411 = vsub.s32 0, %v410
        %v412 = vrot.slane %v392, %v411
        %v413 = vlaneseq
        %v414 = vshrl.u32 %v413, 7
        %v415 = vsub.s32 0, %v414
        %v416 = vrot.slane %v396, %v415
        %v417 = vmul.f32 %v303, %v404
        %v418 = vmul.f32 %v303, %v408
        %v419 = vmul.f32 %v303, %v412
        %v420 = vmul.f32 %v303, %v416
        %v421 = vmul.f32 %v308, %v404
        %v422 = vmul.f32 %v308, %v408
        %v423 = vmul.f32 %v308, %v412
        %v424 = vmul.f32 %v308, %v416
        %v425 = vmul.f32 %v313, %v404
        %v426 = vmul.f32 %v313, %v408
        %v427 = vmul.f32 %v313, %v412
        %v428 = vmul.f32 %v313, %v416
        %v429 = vmul.f32 %v318, %v404
        %v430 = vmul.f32 %v318, %v408
        %v431 = vmul.f32 %v318, %v412
        %v432 = vmul.f32 %v318, %v416
        %v433 = vmul.f32 %v323, %v404
        %v434 = vmul.f32 %v323, %v408
        %v435 = vmul.f32 %v323, %v412
        %v436 = vmul.f32 %v323, %v416
        %v437 = vmul.f32 %v328, %v404
        %v438 = vmul.f32 %v328, %v408
        %v439 = vmul.f32 %v328, %v412
        %v440 = vmul.f32 %v328, %v416
        %v441 = vmul.f32 %v333, %v404
        %v442 = vmul.f32 %v333, %v408
        %v443 = vmul.f32 %v333, %v412
        %v444 = vmul.f32 %v333, %v416
        %v445 = vmul.f32 %v338, %v404
        %v446 = vmul.f32 %v338, %v408
        %v447 = vmul.f32 %v338, %v412
        %v448 = vmul.f32 %v338, %v416
        %v449 = vmul.f32 %v343, %v404
        %v450 = vmul.f32 %v343, %v408
        %v451 = vmul.f32 %v343, %v412
        %v452 = vmul.f32 %v343, %v416
        %v453 = vmul.f32 %v348, %v404
        %v454 = vmul.f32 %v348, %v408
        %v455 = vmul.f32 %v348, %v412
        %v456 = vmul.f32 %v348, %v416
        %v457 = vmul.f32 %v353, %v404
        %v458 = vmul.f32 %v353, %v408
        %v459 = vmul.f32 %v353, %v412
        %v460 = vmul.f32 %v353, %v416
        %v461 = vmul.f32 %v358, %v404
        %v462 = vmul.f32 %v358, %v408
        %v463 = vmul.f32 %v358, %v412
        %v464 = vmul.f32 %v358, %v416
        %v465 = vmul.f32 %v363, %v404
        %v466 = vmul.f32 %v363, %v408
        %v467 = vmul.f32 %v363, %v412
        %v468 = vmul.f32 %v363, %v416
        %v469 = vmul.f32 %v368, %v404
        %v470 = vmul.f32 %v368, %v408
        %v471 = vmul.f32 %v368, %v412
        %v472 = vmul.f32 %v368, %v416
        %v473 = vmul.f32 %v373, %v404
        %v474 = vmul.f32 %v373, %v408
        %v475 = vmul.f32 %v373, %v412
        %v476 = vmul.f32 %v373, %v416
        %v477 = vmul.f32 %v378, %v404
        %v478 = vmul.f32 %v378, %v408
        %v479 = vmul.f32 %v378, %v412
        %v480 = vmul.f32 %v378, %v416
        %481 = vset.pattern.permute.xlu0 1
        %482 = vperm.xlu0 %481, %v284
        %v483 = vpop.permute.xlu0 %482
        %485 = vset.pattern.permute.xlu0 1
        %486 = vperm.xlu0 %485, %v285
        %v487 = vpop.permute.xlu0 %486
        %489 = vset.pattern.permute.xlu0 1
        %490 = vperm.xlu0 %489, %v286
        %v491 = vpop.permute.xlu0 %490
        %493 = vset.pattern.permute.xlu0 1
        %494 = vperm.xlu0 %493, %v287
        %v495 = vpop.permute.xlu0 %494
        %497 = vset.pattern.permute.xlu0 1
        %498 = vperm.xlu0 %497, %v288
        %v499 = vpop.permute.xlu0 %498
        %501 = vset.pattern.permute.xlu0 1
        %502 = vperm.xlu0 %501, %v289
        %v503 = vpop.permute.xlu0 %502
        %505 = vset.pattern.permute.xlu0 1
        %506 = vperm.xlu0 %505, %v290
        %v507 = vpop.permute.xlu0 %506
        %509 = vset.pattern.permute.xlu0 1
        %510 = vperm.xlu0 %509, %v291
        %v511 = vpop.permute.xlu0 %510
        %513 = vset.pattern.permute.xlu0 1
        %514 = vperm.xlu0 %513, %v292
        %v515 = vpop.permute.xlu0 %514
        %517 = vset.pattern.permute.xlu0 1
        %518 = vperm.xlu0 %517, %v293
        %v519 = vpop.permute.xlu0 %518
        %521 = vset.pattern.permute.xlu0 1
        %522 = vperm.xlu0 %521, %v294
        %v523 = vpop.permute.xlu0 %522
        %525 = vset.pattern.permute.xlu0 1
        %526 = vperm.xlu0 %525, %v295
        %v527 = vpop.permute.xlu0 %526
        %529 = vset.pattern.permute.xlu0 1
        %530 = vperm.xlu0 %529, %v296
        %v531 = vpop.permute.xlu0 %530
        %533 = vset.pattern.permute.xlu0 1
        %534 = vperm.xlu0 %533, %v297
        %v535 = vpop.permute.xlu0 %534
        %537 = vset.pattern.permute.xlu0 1
        %538 = vperm.xlu0 %537, %v298
        %v539 = vpop.permute.xlu0 %538
        %541 = vset.pattern.permute.xlu0 1
        %542 = vperm.xlu0 %541, %v299
        %v543 = vpop.permute.xlu0 %542
        %v545 = vlaneseq
        %v546 = vshrl.u32 %v545, 7
        %v547 = vsub.s32 1, %v546
        %v548 = vrot.slane %v283, %v547
        %v549 = vlaneseq
        %v550 = vshrl.u32 %v549, 7
        %v551 = vsub.s32 3, %v550
        %v552 = vrot.slane %v283, %v551
        %v553 = vlaneseq
        %v554 = vshrl.u32 %v553, 7
        %v555 = vsub.s32 5, %v554
        %v556 = vrot.slane %v283, %v555
        %v557 = vlaneseq
        %v558 = vshrl.u32 %v557, 7
        %v559 = vsub.s32 7, %v558
        %v560 = vrot.slane %v283, %v559
        %v565 = vlaneseq
        %v566 = vshrl.u32 %v565, 7
        %v567 = vsub.s32 1, %v566
        %v568 = vrot.slane %v548, %v567
        %v569 = vlaneseq
        %v570 = vshrl.u32 %v569, 7
        %v571 = vsub.s32 1, %v570
        %v572 = vrot.slane %v552, %v571
        %v573 = vlaneseq
        %v574 = vshrl.u32 %v573, 7
        %v575 = vsub.s32 1, %v574
        %v576 = vrot.slane %v556, %v575
        %v577 = vlaneseq
        %v578 = vshrl.u32 %v577, 7
        %v579 = vsub.s32 1, %v578
        %v580 = vrot.slane %v560, %v579
        %v581 = vmul.f32 %v483, %v568
        %v582 = vmul.f32 %v483, %v572
        %v583 = vmul.f32 %v483, %v576
        %v584 = vmul.f32 %v483, %v580
        %v585 = vmul.f32 %v487, %v568
        %v586 = vmul.f32 %v487, %v572
        %v587 = vmul.f32 %v487, %v576
        %v588 = vmul.f32 %v487, %v580
        %v589 = vmul.f32 %v491, %v568
        %v590 = vmul.f32 %v491, %v572
        %v591 = vmul.f32 %v491, %v576
        %v592 = vmul.f32 %v491, %v580
        %v593 = vmul.f32 %v495, %v568
        %v594 = vmul.f32 %v495, %v572
        %v595 = vmul.f32 %v495, %v576
        %v596 = vmul.f32 %v495, %v580
        %v597 = vmul.f32 %v499, %v568
        %v598 = vmul.f32 %v499, %v572
        %v599 = vmul.f32 %v499, %v576
        %v600 = vmul.f32 %v499, %v580
        %v601 = vmul.f32 %v503, %v568
        %v602 = vmul.f32 %v503, %v572
        %v603 = vmul.f32 %v503, %v576
        %v604 = vmul.f32 %v503, %v580
        %v605 = vmul.f32 %v507, %v568
        %v606 = vmul.f32 %v507, %v572
        %v607 = vmul.f32 %v507, %v576
        %v608 = vmul.f32 %v507, %v580
        %v609 = vmul.f32 %v511, %v568
        %v610 = vmul.f32 %v511, %v572
        %v611 = vmul.f32 %v511, %v576
        %v612 = vmul.f32 %v511, %v580
        %v613 = vmul.f32 %v515, %v568
        %v614 = vmul.f32 %v515, %v572
        %v615 = vmul.f32 %v515, %v576
        %v616 = vmul.f32 %v515, %v580
        %v617 = vmul.f32 %v519, %v568
        %v618 = vmul.f32 %v519, %v572
        %v619 = vmul.f32 %v519, %v576
        %v620 = vmul.f32 %v519, %v580
        %v621 = vmul.f32 %v523, %v568
        %v622 = vmul.f32 %v523, %v572
        %v623 = vmul.f32 %v523, %v576
        %v624 = vmul.f32 %v523, %v580
        %v625 = vmul.f32 %v527, %v568
        %v626 = vmul.f32 %v527, %v572
        %v627 = vmul.f32 %v527, %v576
        %v628 = vmul.f32 %v527, %v580
        %v629 = vmul.f32 %v531, %v568
        %v630 = vmul.f32 %v531, %v572
        %v631 = vmul.f32 %v531, %v576
        %v632 = vmul.f32 %v531, %v580
        %v633 = vmul.f32 %v535, %v568
        %v634 = vmul.f32 %v535, %v572
        %v635 = vmul.f32 %v535, %v576
        %v636 = vmul.f32 %v535, %v580
        %v637 = vmul.f32 %v539, %v568
        %v638 = vmul.f32 %v539, %v572
        %v639 = vmul.f32 %v539, %v576
        %v640 = vmul.f32 %v539, %v580
        %v641 = vmul.f32 %v543, %v568
        %v642 = vmul.f32 %v543, %v572
        %v643 = vmul.f32 %v543, %v576
        %v644 = vmul.f32 %v543, %v580
        %v645 = vadd.f32 %v417, %v581
        %v646 = vadd.f32 %v418, %v582
        %v647 = vadd.f32 %v419, %v583
        %v648 = vadd.f32 %v420, %v584
        %v649 = vadd.f32 %v421, %v585
        %v650 = vadd.f32 %v422, %v586
        %v651 = vadd.f32 %v423, %v587
        %v652 = vadd.f32 %v424, %v588
        %v653 = vadd.f32 %v425, %v589
        %v654 = vadd.f32 %v426, %v590
        %v655 = vadd.f32 %v427, %v591
        %v656 = vadd.f32 %v428, %v592
        %v657 = vadd.f32 %v429, %v593
        %v658 = vadd.f32 %v430, %v594
        %v659 = vadd.f32 %v431, %v595
        %v660 = vadd.f32 %v432, %v596
        %v661 = vadd.f32 %v433, %v597
        %v662 = vadd.f32 %v434, %v598
        %v663 = vadd.f32 %v435, %v599
        %v664 = vadd.f32 %v436, %v600
        %v665 = vadd.f32 %v437, %v601
        %v666 = vadd.f32 %v438, %v602
        %v667 = vadd.f32 %v439, %v603
        %v668 = vadd.f32 %v440, %v604
        %v669 = vadd.f32 %v441, %v605
        %v670 = vadd.f32 %v442, %v606
        %v671 = vadd.f32 %v443, %v607
        %v672 = vadd.f32 %v444, %v608
        %v673 = vadd.f32 %v445, %v609
        %v674 = vadd.f32 %v446, %v610
        %v675 = vadd.f32 %v447, %v611
        %v676 = vadd.f32 %v448, %v612
        %v677 = vadd.f32 %v449, %v613
        %v678 = vadd.f32 %v450, %v614
        %v679 = vadd.f32 %v451, %v615
        %v680 = vadd.f32 %v452, %v616
        %v681 = vadd.f32 %v453, %v617
        %v682 = vadd.f32 %v454, %v618
        %v683 = vadd.f32 %v455, %v619
        %v684 = vadd.f32 %v456, %v620
        %v685 = vadd.f32 %v457, %v621
        %v686 = vadd.f32 %v458, %v622
        %v687 = vadd.f32 %v459, %v623
        %v688 = vadd.f32 %v460, %v624
        %v689 = vadd.f32 %v461, %v625
        %v690 = vadd.f32 %v462, %v626
        %v691 = vadd.f32 %v463, %v627
        %v692 = vadd.f32 %v464, %v628
        %v693 = vadd.f32 %v465, %v629
        %v694 = vadd.f32 %v466, %v630
        %v695 = vadd.f32 %v467, %v631
        %v696 = vadd.f32 %v468, %v632
        %v697 = vadd.f32 %v469, %v633
        %v698 = vadd.f32 %v470, %v634
        %v699 = vadd.f32 %v471, %v635
        %v700 = vadd.f32 %v472, %v636
        %v701 = vadd.f32 %v473, %v637
        %v702 = vadd.f32 %v474, %v638
        %v703 = vadd.f32 %v475, %v639
        %v704 = vadd.f32 %v476, %v640
        %v705 = vadd.f32 %v477, %v641
        %v706 = vadd.f32 %v478, %v642
        %v707 = vadd.f32 %v479, %v643
        %v708 = vadd.f32 %v480, %v644
        %v709 = vld [vmem:[%s2] sm:$0xff]
        %v710 = vld [vmem:[%s2 + $0x8] sm:$0xff]
        %v711 = vld [vmem:[%s2 + $0x10] sm:$0xff]
        %v712 = vld [vmem:[%s2 + $0x18] sm:$0xff]
        %v713 = vld [vmem:[%s2 + $0x20] sm:$0xff]
        %v714 = vld [vmem:[%s2 + $0x28] sm:$0xff]
        %v715 = vld [vmem:[%s2 + $0x30] sm:$0xff]
        %v716 = vld [vmem:[%s2 + $0x38] sm:$0xff]
        %v717 = vld [vmem:[%s2 + $0x40] sm:$0xff]
        %v718 = vld [vmem:[%s2 + $0x48] sm:$0xff]
        %v719 = vld [vmem:[%s2 + $0x50] sm:$0xff]
        %v720 = vld [vmem:[%s2 + $0x58] sm:$0xff]
        %v721 = vld [vmem:[%s2 + $0x60] sm:$0xff]
        %v722 = vld [vmem:[%s2 + $0x68] sm:$0xff]
        %v723 = vld [vmem:[%s2 + $0x70] sm:$0xff]
        %v724 = vld [vmem:[%s2 + $0x78] sm:$0xff]
        %726 = vset.pattern.permute.xlu0 0
        %727 = vperm.xlu0 %726, %v709
        %v728 = vpop.permute.xlu0 %727
        %731 = vset.pattern.permute.xlu0 0
        %732 = vperm.xlu0 %731, %v710
        %v733 = vpop.permute.xlu0 %732
        %736 = vset.pattern.permute.xlu0 0
        %737 = vperm.xlu0 %736, %v711
        %v738 = vpop.permute.xlu0 %737
        %741 = vset.pattern.permute.xlu0 0
        %742 = vperm.xlu0 %741, %v712
        %v743 = vpop.permute.xlu0 %742
        %746 = vset.pattern.permute.xlu0 0
        %747 = vperm.xlu0 %746, %v713
        %v748 = vpop.permute.xlu0 %747
        %751 = vset.pattern.permute.xlu0 0
        %752 = vperm.xlu0 %751, %v714
        %v753 = vpop.permute.xlu0 %752
        %756 = vset.pattern.permute.xlu0 0
        %757 = vperm.xlu0 %756, %v715
        %v758 = vpop.permute.xlu0 %757
        %761 = vset.pattern.permute.xlu0 0
        %762 = vperm.xlu0 %761, %v716
        %v763 = vpop.permute.xlu0 %762
        %766 = vset.pattern.permute.xlu0 0
        %767 = vperm.xlu0 %766, %v717
        %v768 = vpop.permute.xlu0 %767
        %771 = vset.pattern.permute.xlu0 0
        %772 = vperm.xlu0 %771, %v718
        %v773 = vpop.permute.xlu0 %772
        %776 = vset.pattern.permute.xlu0 0
        %777 = vperm.xlu0 %776, %v719
        %v778 = vpop.permute.xlu0 %777
        %781 = vset.pattern.permute.xlu0 0
        %782 = vperm.xlu0 %781, %v720
        %v783 = vpop.permute.xlu0 %782
        %786 = vset.pattern.permute.xlu0 0
        %787 = vperm.xlu0 %786, %v721
        %v788 = vpop.permute.xlu0 %787
        %791 = vset.pattern.permute.xlu0 0
        %792 = vperm.xlu0 %791, %v722
        %v793 = vpop.permute.xlu0 %792
        %796 = vset.pattern.permute.xlu0 0
        %797 = vperm.xlu0 %796, %v723
        %v798 = vpop.permute.xlu0 %797
        %801 = vset.pattern.permute.xlu0 0
        %802 = vperm.xlu0 %801, %v724
        %v803 = vpop.permute.xlu0 %802
        %v805 = vadd.f32 %v645, %v728
        %v806 = vadd.f32 %v646, %v728
        %v807 = vadd.f32 %v647, %v728
        %v808 = vadd.f32 %v648, %v728
        %v809 = vadd.f32 %v649, %v733
        %v810 = vadd.f32 %v650, %v733
        %v811 = vadd.f32 %v651, %v733
        %v812 = vadd.f32 %v652, %v733
        %v813 = vadd.f32 %v653, %v738
        %v814 = vadd.f32 %v654, %v738
        %v815 = vadd.f32 %v655, %v738
        %v816 = vadd.f32 %v656, %v738
        %v817 = vadd.f32 %v657, %v743
        %v818 = vadd.f32 %v658, %v743
        %v819 = vadd.f32 %v659, %v743
        %v820 = vadd.f32 %v660, %v743
        %v821 = vadd.f32 %v661, %v748
        %v822 = vadd.f32 %v662, %v748
        %v823 = vadd.f32 %v663, %v748
        %v824 = vadd.f32 %v664, %v748
        %v825 = vadd.f32 %v665, %v753
        %v826 = vadd.f32 %v666, %v753
        %v827 = vadd.f32 %v667, %v753
        %v828 = vadd.f32 %v668, %v753
        %v829 = vadd.f32 %v669, %v758
        %v830 = vadd.f32 %v670, %v758
        %v831 = vadd.f32 %v671, %v758
        %v832 = vadd.f32 %v672, %v758
        %v833 = vadd.f32 %v673, %v763
        %v834 = vadd.f32 %v674, %v763
        %v835 = vadd.f32 %v675, %v763
        %v836 = vadd.f32 %v676, %v763
        %v837 = vadd.f32 %v677, %v768
        %v838 = vadd.f32 %v678, %v768
        %v839 = vadd.f32 %v679, %v768
        %v840 = vadd.f32 %v680, %v768
        %v841 = vadd.f32 %v681, %v773
        %v842 = vadd.f32 %v682, %v773
        %v843 = vadd.f32 %v683, %v773
        %v844 = vadd.f32 %v684, %v773
        %v845 = vadd.f32 %v685, %v778
        %v846 = vadd.f32 %v686, %v778
        %v847 = vadd.f32 %v687, %v778
        %v848 = vadd.f32 %v688, %v778
        %v849 = vadd.f32 %v689, %v783
        %v850 = vadd.f32 %v690, %v783
        %v851 = vadd.f32 %v691, %v783
        %v852 = vadd.f32 %v692, %v783
        %v853 = vadd.f32 %v693, %v788
        %v854 = vadd.f32 %v694, %v788
        %v855 = vadd.f32 %v695, %v788
        %v856 = vadd.f32 %v696, %v788
        %v857 = vadd.f32 %v697, %v793
        %v858 = vadd.f32 %v698, %v793
        %v859 = vadd.f32 %v699, %v793
        %v860 = vadd.f32 %v700, %v793
        %v861 = vadd.f32 %v701, %v798
        %v862 = vadd.f32 %v702, %v798
        %v863 = vadd.f32 %v703, %v798
        %v864 = vadd.f32 %v704, %v798
        %v865 = vadd.f32 %v705, %v803
        %v866 = vadd.f32 %v706, %v803
        %v867 = vadd.f32 %v707, %v803
        %v868 = vadd.f32 %v708, %v803
        %v869 = vmul.f32 %v805, 0.5
        %v870 = vmul.f32 %v806, 0.5
        %v871 = vmul.f32 %v807, 0.5
        %v872 = vmul.f32 %v808, 0.5
        %v873 = vmul.f32 %v809, 0.5
        %v874 = vmul.f32 %v810, 0.5
        %v875 = vmul.f32 %v811, 0.5
        %v876 = vmul.f32 %v812, 0.5
        %v877 = vmul.f32 %v813, 0.5
        %v878 = vmul.f32 %v814, 0.5
        %v879 = vmul.f32 %v815, 0.5
        %v880 = vmul.f32 %v816, 0.5
        %v881 = vmul.f32 %v817, 0.5
        %v882 = vmul.f32 %v818, 0.5
        %v883 = vmul.f32 %v819, 0.5
        %v884 = vmul.f32 %v820, 0.5
        %v885 = vmul.f32 %v821, 0.5
        %v886 = vmul.f32 %v822, 0.5
        %v887 = vmul.f32 %v823, 0.5
        %v888 = vmul.f32 %v824, 0.5
        %v889 = vmul.f32 %v825, 0.5
        %v890 = vmul.f32 %v826, 0.5
        %v891 = vmul.f32 %v827, 0.5
        %v892 = vmul.f32 %v828, 0.5
        %v893 = vmul.f32 %v829, 0.5
        %v894 = vmul.f32 %v830, 0.5
        %v895 = vmul.f32 %v831, 0.5
        %v896 = vmul.f32 %v832, 0.5
        %v897 = vmul.f32 %v833, 0.5
        %v898 = vmul.f32 %v834, 0.5
        %v899 = vmul.f32 %v835, 0.5
        %v900 = vmul.f32 %v836, 0.5
        %v901 = vmul.f32 %v837, 0.5
        %v902 = vmul.f32 %v838, 0.5
        %v903 = vmul.f32 %v839, 0.5
        %v904 = vmul.f32 %v840, 0.5
        %v905 = vmul.f32 %v841, 0.5
        %v906 = vmul.f32 %v842, 0.5
        %v907 = vmul.f32 %v843, 0.5
        %v908 = vmul.f32 %v844, 0.5
        %v909 = vmul.f32 %v845, 0.5
        %v910 = vmul.f32 %v846, 0.5
        %v911 = vmul.f32 %v847, 0.5
        %v912 = vmul.f32 %v848, 0.5
        %v913 = vmul.f32 %v849, 0.5
        %v914 = vmul.f32 %v850, 0.5
        %v915 = vmul.f32 %v851, 0.5
        %v916 = vmul.f32 %v852, 0.5
        %v917 = vmul.f32 %v853, 0.5
        %v918 = vmul.f32 %v854, 0.5
        %v919 = vmul.f32 %v855, 0.5
        %v920 = vmul.f32 %v856, 0.5
        %v921 = vmul.f32 %v857, 0.5
        %v922 = vmul.f32 %v858, 0.5
        %v923 = vmul.f32 %v859, 0.5
        %v924 = vmul.f32 %v860, 0.5
        %v925 = vmul.f32 %v861, 0.5
        %v926 = vmul.f32 %v862, 0.5
        %v927 = vmul.f32 %v863, 0.5
        %v928 = vmul.f32 %v864, 0.5
        %v929 = vmul.f32 %v865, 0.5
        %v930 = vmul.f32 %v866, 0.5
        %v931 = vmul.f32 %v867, 0.5
        %v932 = vmul.f32 %v868, 0.5
        %v933 = vmul.f32 %v805, %v805
        %v934 = vmul.f32 %v806, %v806
        %v935 = vmul.f32 %v807, %v807
        %v936 = vmul.f32 %v808, %v808
        %v937 = vmul.f32 %v809, %v809
        %v938 = vmul.f32 %v810, %v810
        %v939 = vmul.f32 %v811, %v811
        %v940 = vmul.f32 %v812, %v812
        %v941 = vmul.f32 %v813, %v813
        %v942 = vmul.f32 %v814, %v814
        %v943 = vmul.f32 %v815, %v815
        %v944 = vmul.f32 %v816, %v816
        %v945 = vmul.f32 %v817, %v817
        %v946 = vmul.f32 %v818, %v818
        %v947 = vmul.f32 %v819, %v819
        %v948 = vmul.f32 %v820, %v820
        %v949 = vmul.f32 %v821, %v821
        %v950 = vmul.f32 %v822, %v822
        %v951 = vmul.f32 %v823, %v823
        %v952 = vmul.f32 %v824, %v824
        %v953 = vmul.f32 %v825, %v825
        %v954 = vmul.f32 %v826, %v826
        %v955 = vmul.f32 %v827, %v827
        %v956 = vmul.f32 %v828, %v828
        %v957 = vmul.f32 %v829, %v829
        %v958 = vmul.f32 %v830, %v830
        %v959 = vmul.f32 %v831, %v831
        %v960 = vmul.f32 %v832, %v832
        %v961 = vmul.f32 %v833, %v833
        %v962 = vmul.f32 %v834, %v834
        %v963 = vmul.f32 %v835, %v835
        %v964 = vmul.f32 %v836, %v836
        %v965 = vmul.f32 %v837, %v837
        %v966 = vmul.f32 %v838, %v838
        %v967 = vmul.f32 %v839, %v839
        %v968 = vmul.f32 %v840, %v840
        %v969 = vmul.f32 %v841, %v841
        %v970 = vmul.f32 %v842, %v842
        %v971 = vmul.f32 %v843, %v843
        %v972 = vmul.f32 %v844, %v844
        %v973 = vmul.f32 %v845, %v845
        %v974 = vmul.f32 %v846, %v846
        %v975 = vmul.f32 %v847, %v847
        %v976 = vmul.f32 %v848, %v848
        %v977 = vmul.f32 %v849, %v849
        %v978 = vmul.f32 %v850, %v850
        %v979 = vmul.f32 %v851, %v851
        %v980 = vmul.f32 %v852, %v852
        %v981 = vmul.f32 %v853, %v853
        %v982 = vmul.f32 %v854, %v854
        %v983 = vmul.f32 %v855, %v855
        %v984 = vmul.f32 %v856, %v856
        %v985 = vmul.f32 %v857, %v857
        %v986 = vmul.f32 %v858, %v858
        %v987 = vmul.f32 %v859, %v859
        %v988 = vmul.f32 %v860, %v860
        %v989 = vmul.f32 %v861, %v861
        %v990 = vmul.f32 %v862, %v862
        %v991 = vmul.f32 %v863, %v863
        %v992 = vmul.f32 %v864, %v864
        %v993 = vmul.f32 %v865, %v865
        %v994 = vmul.f32 %v866, %v866
        %v995 = vmul.f32 %v867, %v867
        %v996 = vmul.f32 %v868, %v868
        %v997 = vmul.f32 %v933, %v805
        %v998 = vmul.f32 %v934, %v806
        %v999 = vmul.f32 %v935, %v807
        %v1000 = vmul.f32 %v936, %v808
        %v1001 = vmul.f32 %v937, %v809
        %v1002 = vmul.f32 %v938, %v810
        %v1003 = vmul.f32 %v939, %v811
        %v1004 = vmul.f32 %v940, %v812
        %v1005 = vmul.f32 %v941, %v813
        %v1006 = vmul.f32 %v942, %v814
        %v1007 = vmul.f32 %v943, %v815
        %v1008 = vmul.f32 %v944, %v816
        %v1009 = vmul.f32 %v945, %v817
        %v1010 = vmul.f32 %v946, %v818
        %v1011 = vmul.f32 %v947, %v819
        %v1012 = vmul.f32 %v948, %v820
        %v1013 = vmul.f32 %v949, %v821
        %v1014 = vmul.f32 %v950, %v822
        %v1015 = vmul.f32 %v951, %v823
        %v1016 = vmul.f32 %v952, %v824
        %v1017 = vmul.f32 %v953, %v825
        %v1018 = vmul.f32 %v954, %v826
        %v1019 = vmul.f32 %v955, %v827
        %v1020 = vmul.f32 %v956, %v828
        %v1021 = vmul.f32 %v957, %v829
        %v1022 = vmul.f32 %v958, %v830
        %v1023 = vmul.f32 %v959, %v831
        %v1024 = vmul.f32 %v960, %v832
        %v1025 = vmul.f32 %v961, %v833
        %v1026 = vmul.f32 %v962, %v834
        %v1027 = vmul.f32 %v963, %v835
        %v1028 = vmul.f32 %v964, %v836
        %v1029 = vmul.f32 %v965, %v837
        %v1030 = vmul.f32 %v966, %v838
        %v1031 = vmul.f32 %v967, %v839
        %v1032 = vmul.f32 %v968, %v840
        %v1033 = vmul.f32 %v969, %v841
        %v1034 = vmul.f32 %v970, %v842
        %v1035 = vmul.f32 %v971, %v843
        %v1036 = vmul.f32 %v972, %v844
        %v1037 = vmul.f32 %v973, %v845
        %v1038 = vmul.f32 %v974, %v846
        %v1039 = vmul.f32 %v975, %v847
        %v1040 = vmul.f32 %v976, %v848
        %v1041 = vmul.f32 %v977, %v849
        %v1042 = vmul.f32 %v978, %v850
        %v1043 = vmul.f32 %v979, %v851
        %v1044 = vmul.f32 %v980, %v852
        %v1045 = vmul.f32 %v981, %v853
        %v1046 = vmul.f32 %v982, %v854
        %v1047 = vmul.f32 %v983, %v855
        %v1048 = vmul.f32 %v984, %v856
        %v1049 = vmul.f32 %v985, %v857
        %v1050 = vmul.f32 %v986, %v858
        %v1051 = vmul.f32 %v987, %v859
        %v1052 = vmul.f32 %v988, %v860
        %v1053 = vmul.f32 %v989, %v861
        %v1054 = vmul.f32 %v990, %v862
        %v1055 = vmul.f32 %v991, %v863
        %v1056 = vmul.f32 %v992, %v864
        %v1057 = vmul.f32 %v993, %v865
        %v1058 = vmul.f32 %v994, %v866
        %v1059 = vmul.f32 %v995, %v867
        %v1060 = vmul.f32 %v996, %v868
        %v1061 = vmul.f32 %v997, 0.044715
        %v1062 = vmul.f32 %v998, 0.044715
        %v1063 = vmul.f32 %v999, 0.044715
        %v1064 = vmul.f32 %v1000, 0.044715
        %v1065 = vmul.f32 %v1001, 0.044715
        %v1066 = vmul.f32 %v1002, 0.044715
        %v1067 = vmul.f32 %v1003, 0.044715
        %v1068 = vmul.f32 %v1004, 0.044715
        %v1069 = vmul.f32 %v1005, 0.044715
        %v1070 = vmul.f32 %v1006, 0.044715
        %v1071 = vmul.f32 %v1007, 0.044715
        %v1072 = vmul.f32 %v1008, 0.044715
        %v1073 = vmul.f32 %v1009, 0.044715
        %v1074 = vmul.f32 %v1010, 0.044715
        %v1075 = vmul.f32 %v1011, 0.044715
        %v1076 = vmul.f32 %v1012, 0.044715
        %v1077 = vmul.f32 %v1013, 0.044715
        %v1078 = vmul.f32 %v1014, 0.044715
        %v1079 = vmul.f32 %v1015, 0.044715
        %v1080 = vmul.f32 %v1016, 0.044715
        %v1081 = vmul.f32 %v1017, 0.044715
        %v1082 = vmul.f32 %v1018, 0.044715
        %v1083 = vmul.f32 %v1019, 0.044715
        %v1084 = vmul.f32 %v1020, 0.044715
        %v1085 = vmul.f32 %v1021, 0.044715
        %v1086 = vmul.f32 %v1022, 0.044715
        %v1087 = vmul.f32 %v1023, 0.044715
        %v1088 = vmul.f32 %v1024, 0.044715
        %v1089 = vmul.f32 %v1025, 0.044715
        %v1090 = vmul.f32 %v1026, 0.044715
        %v1091 = vmul.f32 %v1027, 0.044715
        %v1092 = vmul.f32 %v1028, 0.044715
        %v1093 = vmul.f32 %v1029, 0.044715
        %v1094 = vmul.f32 %v1030, 0.044715
        %v1095 = vmul.f32 %v1031, 0.044715
        %v1096 = vmul.f32 %v1032, 0.044715
        %v1097 = vmul.f32 %v1033, 0.044715
        %v1098 = vmul.f32 %v1034, 0.044715
        %v1099 = vmul.f32 %v1035, 0.044715
        %v1100 = vmul.f32 %v1036, 0.044715
        %v1101 = vmul.f32 %v1037, 0.044715
        %v1102 = vmul.f32 %v1038, 0.044715
        %v1103 = vmul.f32 %v1039, 0.044715
        %v1104 = vmul.f32 %v1040, 0.044715
        %v1105 = vmul.f32 %v1041, 0.044715
        %v1106 = vmul.f32 %v1042, 0.044715
        %v1107 = vmul.f32 %v1043, 0.044715
        %v1108 = vmul.f32 %v1044, 0.044715
        %v1109 = vmul.f32 %v1045, 0.044715
        %v1110 = vmul.f32 %v1046, 0.044715
        %v1111 = vmul.f32 %v1047, 0.044715
        %v1112 = vmul.f32 %v1048, 0.044715
        %v1113 = vmul.f32 %v1049, 0.044715
        %v1114 = vmul.f32 %v1050, 0.044715
        %v1115 = vmul.f32 %v1051, 0.044715
        %v1116 = vmul.f32 %v1052, 0.044715
        %v1117 = vmul.f32 %v1053, 0.044715
        %v1118 = vmul.f32 %v1054, 0.044715
        %v1119 = vmul.f32 %v1055, 0.044715
        %v1120 = vmul.f32 %v1056, 0.044715
        %v1121 = vmul.f32 %v1057, 0.044715
        %v1122 = vmul.f32 %v1058, 0.044715
        %v1123 = vmul.f32 %v1059, 0.044715
        %v1124 = vmul.f32 %v1060, 0.044715
        %v1125 = vadd.f32 %v805, %v1061
        %v1126 = vadd.f32 %v806, %v1062
        %v1127 = vadd.f32 %v807, %v1063
        %v1128 = vadd.f32 %v808, %v1064
        %v1129 = vadd.f32 %v809, %v1065
        %v1130 = vadd.f32 %v810, %v1066
        %v1131 = vadd.f32 %v811, %v1067
        %v1132 = vadd.f32 %v812, %v1068
        %v1133 = vadd.f32 %v813, %v1069
        %v1134 = vadd.f32 %v814, %v1070
        %v1135 = vadd.f32 %v815, %v1071
        %v1136 = vadd.f32 %v816, %v1072
        %v1137 = vadd.f32 %v817, %v1073
        %v1138 = vadd.f32 %v818, %v1074
        %v1139 = vadd.f32 %v819, %v1075
        %v1140 = vadd.f32 %v820, %v1076
        %v1141 = vadd.f32 %v821, %v1077
        %v1142 = vadd.f32 %v822, %v1078
        %v1143 = vadd.f32 %v823, %v1079
        %v1144 = vadd.f32 %v824, %v1080
        %v1145 = vadd.f32 %v825, %v1081
        %v1146 = vadd.f32 %v826, %v1082
        %v1147 = vadd.f32 %v827, %v1083
        %v1148 = vadd.f32 %v828, %v1084
        %v1149 = vadd.f32 %v829, %v1085
        %v1150 = vadd.f32 %v830, %v1086
        %v1151 = vadd.f32 %v831, %v1087
        %v1152 = vadd.f32 %v832, %v1088
        %v1153 = vadd.f32 %v833, %v1089
        %v1154 = vadd.f32 %v834, %v1090
        %v1155 = vadd.f32 %v835, %v1091
        %v1156 = vadd.f32 %v836, %v1092
        %v1157 = vadd.f32 %v837, %v1093
        %v1158 = vadd.f32 %v838, %v1094
        %v1159 = vadd.f32 %v839, %v1095
        %v1160 = vadd.f32 %v840, %v1096
        %v1161 = vadd.f32 %v841, %v1097
        %v1162 = vadd.f32 %v842, %v1098
        %v1163 = vadd.f32 %v843, %v1099
        %v1164 = vadd.f32 %v844, %v1100
        %v1165 = vadd.f32 %v845, %v1101
        %v1166 = vadd.f32 %v846, %v1102
        %v1167 = vadd.f32 %v847, %v1103
        %v1168 = vadd.f32 %v848, %v1104
        %v1169 = vadd.f32 %v849, %v1105
        %v1170 = vadd.f32 %v850, %v1106
        %v1171 = vadd.f32 %v851, %v1107
        %v1172 = vadd.f32 %v852, %v1108
        %v1173 = vadd.f32 %v853, %v1109
        %v1174 = vadd.f32 %v854, %v1110
        %v1175 = vadd.f32 %v855, %v1111
        %v1176 = vadd.f32 %v856, %v1112
        %v1177 = vadd.f32 %v857, %v1113
        %v1178 = vadd.f32 %v858, %v1114
        %v1179 = vadd.f32 %v859, %v1115
        %v1180 = vadd.f32 %v860, %v1116
        %v1181 = vadd.f32 %v861, %v1117
        %v1182 = vadd.f32 %v862, %v1118
        %v1183 = vadd.f32 %v863, %v1119
        %v1184 = vadd.f32 %v864, %v1120
        %v1185 = vadd.f32 %v865, %v1121
        %v1186 = vadd.f32 %v866, %v1122
        %v1187 = vadd.f32 %v867, %v1123
        %v1188 = vadd.f32 %v868, %v1124
        %v1189 = vmul.f32 %v1125, 0.7978846
        %v1190 = vmul.f32 %v1126, 0.7978846
        %v1191 = vmul.f32 %v1127, 0.7978846
        %v1192 = vmul.f32 %v1128, 0.7978846
        %v1193 = vmul.f32 %v1129, 0.7978846
        %v1194 = vmul.f32 %v1130, 0.7978846
        %v1195 = vmul.f32 %v1131, 0.7978846
        %v1196 = vmul.f32 %v1132, 0.7978846
        %v1197 = vmul.f32 %v1133, 0.7978846
        %v1198 = vmul.f32 %v1134, 0.7978846
        %v1199 = vmul.f32 %v1135, 0.7978846
        %v1200 = vmul.f32 %v1136, 0.7978846
        %v1201 = vmul.f32 %v1137, 0.7978846
        %v1202 = vmul.f32 %v1138, 0.7978846
        %v1203 = vmul.f32 %v1139, 0.7978846
        %v1204 = vmul.f32 %v1140, 0.7978846
        %v1205 = vmul.f32 %v1141, 0.7978846
        %v1206 = vmul.f32 %v1142, 0.7978846
        %v1207 = vmul.f32 %v1143, 0.7978846
        %v1208 = vmul.f32 %v1144, 0.7978846
        %v1209 = vmul.f32 %v1145, 0.7978846
        %v1210 = vmul.f32 %v1146, 0.7978846
        %v1211 = vmul.f32 %v1147, 0.7978846
        %v1212 = vmul.f32 %v1148, 0.7978846
        %v1213 = vmul.f32 %v1149, 0.7978846
        %v1214 = vmul.f32 %v1150, 0.7978846
        %v1215 = vmul.f32 %v1151, 0.7978846
        %v1216 = vmul.f32 %v1152, 0.7978846
        %v1217 = vmul.f32 %v1153, 0.7978846
        %v1218 = vmul.f32 %v1154, 0.7978846
        %v1219 = vmul.f32 %v1155, 0.7978846
        %v1220 = vmul.f32 %v1156, 0.7978846
        %v1221 = vmul.f32 %v1157, 0.7978846
        %v1222 = vmul.f32 %v1158, 0.7978846
        %v1223 = vmul.f32 %v1159, 0.7978846
        %v1224 = vmul.f32 %v1160, 0.7978846
        %v1225 = vmul.f32 %v1161, 0.7978846
        %v1226 = vmul.f32 %v1162, 0.7978846
        %v1227 = vmul.f32 %v1163, 0.7978846
        %v1228 = vmul.f32 %v1164, 0.7978846
        %v1229 = vmul.f32 %v1165, 0.7978846
        %v1230 = vmul.f32 %v1166, 0.7978846
        %v1231 = vmul.f32 %v1167, 0.7978846
        %v1232 = vmul.f32 %v1168, 0.7978846
        %v1233 = vmul.f32 %v1169, 0.7978846
        %v1234 = vmul.f32 %v1170, 0.7978846
        %v1235 = vmul.f32 %v1171, 0.7978846
        %v1236 = vmul.f32 %v1172, 0.7978846
        %v1237 = vmul.f32 %v1173, 0.7978846
        %v1238 = vmul.f32 %v1174, 0.7978846
        %v1239 = vmul.f32 %v1175, 0.7978846
        %v1240 = vmul.f32 %v1176, 0.7978846
        %v1241 = vmul.f32 %v1177, 0.7978846
        %v1242 = vmul.f32 %v1178, 0.7978846
        %v1243 = vmul.f32 %v1179, 0.7978846
        %v1244 = vmul.f32 %v1180, 0.7978846
        %v1245 = vmul.f32 %v1181, 0.7978846
        %v1246 = vmul.f32 %v1182, 0.7978846
        %v1247 = vmul.f32 %v1183, 0.7978846
        %v1248 = vmul.f32 %v1184, 0.7978846
        %v1249 = vmul.f32 %v1185, 0.7978846
        %v1250 = vmul.f32 %v1186, 0.7978846
        %v1251 = vmul.f32 %v1187, 0.7978846
        %v1252 = vmul.f32 %v1188, 0.7978846
        %v1253 = vtanh.pop %v1189
        %v1254 = vtanh.pop %v1190
        %v1255 = vtanh.pop %v1191
        %v1256 = vtanh.pop %v1192
        %v1257 = vtanh.pop %v1193
        %v1258 = vtanh.pop %v1194
        %v1259 = vtanh.pop %v1195
        %v1260 = vtanh.pop %v1196
        %v1261 = vtanh.pop %v1197
        %v1262 = vtanh.pop %v1198
        %v1263 = vtanh.pop %v1199
        %v1264 = vtanh.pop %v1200
        %v1265 = vtanh.pop %v1201
        %v1266 = vtanh.pop %v1202
        %v1267 = vtanh.pop %v1203
        %v1268 = vtanh.pop %v1204
        %v1269 = vtanh.pop %v1205
        %v1270 = vtanh.pop %v1206
        %v1271 = vtanh.pop %v1207
        %v1272 = vtanh.pop %v1208
        %v1273 = vtanh.pop %v1209
        %v1274 = vtanh.pop %v1210
        %v1275 = vtanh.pop %v1211
        %v1276 = vtanh.pop %v1212
        %v1277 = vtanh.pop %v1213
        %v1278 = vtanh.pop %v1214
        %v1279 = vtanh.pop %v1215
        %v1280 = vtanh.pop %v1216
        %v1281 = vtanh.pop %v1217
        %v1282 = vtanh.pop %v1218
        %v1283 = vtanh.pop %v1219
        %v1284 = vtanh.pop %v1220
        %v1285 = vtanh.pop %v1221
        %v1286 = vtanh.pop %v1222
        %v1287 = vtanh.pop %v1223
        %v1288 = vtanh.pop %v1224
        %v1289 = vtanh.pop %v1225
        %v1290 = vtanh.pop %v1226
        %v1291 = vtanh.pop %v1227
        %v1292 = vtanh.pop %v1228
        %v1293 = vtanh.pop %v1229
        %v1294 = vtanh.pop %v1230
        %v1295 = vtanh.pop %v1231
        %v1296 = vtanh.pop %v1232
        %v1297 = vtanh.pop %v1233
        %v1298 = vtanh.pop %v1234
        %v1299 = vtanh.pop %v1235
        %v1300 = vtanh.pop %v1236
        %v1301 = vtanh.pop %v1237
        %v1302 = vtanh.pop %v1238
        %v1303 = vtanh.pop %v1239
        %v1304 = vtanh.pop %v1240
        %v1305 = vtanh.pop %v1241
        %v1306 = vtanh.pop %v1242
        %v1307 = vtanh.pop %v1243
        %v1308 = vtanh.pop %v1244
        %v1309 = vtanh.pop %v1245
        %v1310 = vtanh.pop %v1246
        %v1311 = vtanh.pop %v1247
        %v1312 = vtanh.pop %v1248
        %v1313 = vtanh.pop %v1249
        %v1314 = vtanh.pop %v1250
        %v1315 = vtanh.pop %v1251
        %v1316 = vtanh.pop %v1252
        %v1317 = vadd.f32 %v1253, 1.0
        %v1318 = vadd.f32 %v1254, 1.0
        %v1319 = vadd.f32 %v1255, 1.0
        %v1320 = vadd.f32 %v1256, 1.0
        %v1321 = vadd.f32 %v1257, 1.0
        %v1322 = vadd.f32 %v1258, 1.0
        %v1323 = vadd.f32 %v1259, 1.0
        %v1324 = vadd.f32 %v1260, 1.0
        %v1325 = vadd.f32 %v1261, 1.0
        %v1326 = vadd.f32 %v1262, 1.0
        %v1327 = vadd.f32 %v1263, 1.0
        %v1328 = vadd.f32 %v1264, 1.0
        %v1329 = vadd.f32 %v1265, 1.0
        %v1330 = vadd.f32 %v1266, 1.0
        %v1331 = vadd.f32 %v1267, 1.0
        %v1332 = vadd.f32 %v1268, 1.0
        %v1333 = vadd.f32 %v1269, 1.0
        %v1334 = vadd.f32 %v1270, 1.0
        %v1335 = vadd.f32 %v1271, 1.0
        %v1336 = vadd.f32 %v1272, 1.0
        %v1337 = vadd.f32 %v1273, 1.0
        %v1338 = vadd.f32 %v1274, 1.0
        %v1339 = vadd.f32 %v1275, 1.0
        %v1340 = vadd.f32 %v1276, 1.0
        %v1341 = vadd.f32 %v1277, 1.0
        %v1342 = vadd.f32 %v1278, 1.0
        %v1343 = vadd.f32 %v1279, 1.0
        %v1344 = vadd.f32 %v1280, 1.0
        %v1345 = vadd.f32 %v1281, 1.0
        %v1346 = vadd.f32 %v1282, 1.0
        %v1347 = vadd.f32 %v1283, 1.0
        %v1348 = vadd.f32 %v1284, 1.0
        %v1349 = vadd.f32 %v1285, 1.0
        %v1350 = vadd.f32 %v1286, 1.0
        %v1351 = vadd.f32 %v1287, 1.0
        %v1352 = vadd.f32 %v1288, 1.0
        %v1353 = vadd.f32 %v1289, 1.0
        %v1354 = vadd.f32 %v1290, 1.0
        %v1355 = vadd.f32 %v1291, 1.0
        %v1356 = vadd.f32 %v1292, 1.0
        %v1357 = vadd.f32 %v1293, 1.0
        %v1358 = vadd.f32 %v1294, 1.0
        %v1359 = vadd.f32 %v1295, 1.0
        %v1360 = vadd.f32 %v1296, 1.0
        %v1361 = vadd.f32 %v1297, 1.0
        %v1362 = vadd.f32 %v1298, 1.0
        %v1363 = vadd.f32 %v1299, 1.0
        %v1364 = vadd.f32 %v1300, 1.0
        %v1365 = vadd.f32 %v1301, 1.0
        %v1366 = vadd.f32 %v1302, 1.0
        %v1367 = vadd.f32 %v1303, 1.0
        %v1368 = vadd.f32 %v1304, 1.0
        %v1369 = vadd.f32 %v1305, 1.0
        %v1370 = vadd.f32 %v1306, 1.0
        %v1371 = vadd.f32 %v1307, 1.0
        %v1372 = vadd.f32 %v1308, 1.0
        %v1373 = vadd.f32 %v1309, 1.0
        %v1374 = vadd.f32 %v1310, 1.0
        %v1375 = vadd.f32 %v1311, 1.0
        %v1376 = vadd.f32 %v1312, 1.0
        %v1377 = vadd.f32 %v1313, 1.0
        %v1378 = vadd.f32 %v1314, 1.0
        %v1379 = vadd.f32 %v1315, 1.0
        %v1380 = vadd.f32 %v1316, 1.0
        %v1381 = vmul.f32 %v869, %v1317
        %v1382 = vmul.f32 %v870, %v1318
        %v1383 = vmul.f32 %v871, %v1319
        %v1384 = vmul.f32 %v872, %v1320
        %v1385 = vmul.f32 %v873, %v1321
        %v1386 = vmul.f32 %v874, %v1322
        %v1387 = vmul.f32 %v875, %v1323
        %v1388 = vmul.f32 %v876, %v1324
        %v1389 = vmul.f32 %v877, %v1325
        %v1390 = vmul.f32 %v878, %v1326
        %v1391 = vmul.f32 %v879, %v1327
        %v1392 = vmul.f32 %v880, %v1328
        %v1393 = vmul.f32 %v881, %v1329
        %v1394 = vmul.f32 %v882, %v1330
        %v1395 = vmul.f32 %v883, %v1331
        %v1396 = vmul.f32 %v884, %v1332
        %v1397 = vmul.f32 %v885, %v1333
        %v1398 = vmul.f32 %v886, %v1334
        %v1399 = vmul.f32 %v887, %v1335
        %v1400 = vmul.f32 %v888, %v1336
        %v1401 = vmul.f32 %v889, %v1337
        %v1402 = vmul.f32 %v890, %v1338
        %v1403 = vmul.f32 %v891, %v1339
        %v1404 = vmul.f32 %v892, %v1340
        %v1405 = vmul.f32 %v893, %v1341
        %v1406 = vmul.f32 %v894, %v1342
        %v1407 = vmul.f32 %v895, %v1343
        %v1408 = vmul.f32 %v896, %v1344
        %v1409 = vmul.f32 %v897, %v1345
        %v1410 = vmul.f32 %v898, %v1346
        %v1411 = vmul.f32 %v899, %v1347
        %v1412 = vmul.f32 %v900, %v1348
        %v1413 = vmul.f32 %v901, %v1349
        %v1414 = vmul.f32 %v902, %v1350
        %v1415 = vmul.f32 %v903, %v1351
        %v1416 = vmul.f32 %v904, %v1352
        %v1417 = vmul.f32 %v905, %v1353
        %v1418 = vmul.f32 %v906, %v1354
        %v1419 = vmul.f32 %v907, %v1355
        %v1420 = vmul.f32 %v908, %v1356
        %v1421 = vmul.f32 %v909, %v1357
        %v1422 = vmul.f32 %v910, %v1358
        %v1423 = vmul.f32 %v911, %v1359
        %v1424 = vmul.f32 %v912, %v1360
        %v1425 = vmul.f32 %v913, %v1361
        %v1426 = vmul.f32 %v914, %v1362
        %v1427 = vmul.f32 %v915, %v1363
        %v1428 = vmul.f32 %v916, %v1364
        %v1429 = vmul.f32 %v917, %v1365
        %v1430 = vmul.f32 %v918, %v1366
        %v1431 = vmul.f32 %v919, %v1367
        %v1432 = vmul.f32 %v920, %v1368
        %v1433 = vmul.f32 %v921, %v1369
        %v1434 = vmul.f32 %v922, %v1370
        %v1435 = vmul.f32 %v923, %v1371
        %v1436 = vmul.f32 %v924, %v1372
        %v1437 = vmul.f32 %v925, %v1373
        %v1438 = vmul.f32 %v926, %v1374
        %v1439 = vmul.f32 %v927, %v1375
        %v1440 = vmul.f32 %v928, %v1376
        %v1441 = vmul.f32 %v929, %v1377
        %v1442 = vmul.f32 %v930, %v1378
        %v1443 = vmul.f32 %v931, %v1379
        %v1444 = vmul.f32 %v932, %v1380
        %v1445 = vld [vmem:[%s3] sm:$0xf]
        %v1446 = vld [vmem:[%s3 + $0x4] sm:$0xf]
        %v1447 = vld [vmem:[%s3 + $0x8] sm:$0xf]
        %v1448 = vld [vmem:[%s3 + $0xc] sm:$0xf]
        %v1449 = vld [vmem:[%s3 + $0x10] sm:$0xf]
        %v1450 = vld [vmem:[%s3 + $0x14] sm:$0xf]
        %v1451 = vld [vmem:[%s3 + $0x18] sm:$0xf]
        %v1452 = vld [vmem:[%s3 + $0x1c] sm:$0xf]
        %v1453 = vld [vmem:[%s3 + $0x20] sm:$0xf]
        %v1454 = vld [vmem:[%s3 + $0x24] sm:$0xf]
        %v1455 = vld [vmem:[%s3 + $0x28] sm:$0xf]
        %v1456 = vld [vmem:[%s3 + $0x2c] sm:$0xf]
        %v1457 = vld [vmem:[%s3 + $0x30] sm:$0xf]
        %v1458 = vld [vmem:[%s3 + $0x34] sm:$0xf]
        %v1459 = vld [vmem:[%s3 + $0x38] sm:$0xf]
        %v1460 = vld [vmem:[%s3 + $0x3c] sm:$0xf]
        %v1461 = vpack.c.bf16 %v1385, %v1381
        %v1462 = vpack.c.bf16 %v1386, %v1382
        %v1463 = vpack.c.bf16 %v1387, %v1383
        %v1464 = vpack.c.bf16 %v1388, %v1384
        %v1465 = vpack.c.bf16 %v1393, %v1389
        %v1466 = vpack.c.bf16 %v1394, %v1390
        %v1467 = vpack.c.bf16 %v1395, %v1391
        %v1468 = vpack.c.bf16 %v1396, %v1392
        %v1469 = vpack.c.bf16 %v1401, %v1397
        %v1470 = vpack.c.bf16 %v1402, %v1398
        %v1471 = vpack.c.bf16 %v1403, %v1399
        %v1472 = vpack.c.bf16 %v1404, %v1400
        %v1473 = vpack.c.bf16 %v1409, %v1405
        %v1474 = vpack.c.bf16 %v1410, %v1406
        %v1475 = vpack.c.bf16 %v1411, %v1407
        %v1476 = vpack.c.bf16 %v1412, %v1408
        %v1477 = vpack.c.bf16 %v1417, %v1413
        %v1478 = vpack.c.bf16 %v1418, %v1414
        %v1479 = vpack.c.bf16 %v1419, %v1415
        %v1480 = vpack.c.bf16 %v1420, %v1416
        %v1481 = vpack.c.bf16 %v1425, %v1421
        %v1482 = vpack.c.bf16 %v1426, %v1422
        %v1483 = vpack.c.bf16 %v1427, %v1423
        %v1484 = vpack.c.bf16 %v1428, %v1424
        %v1485 = vpack.c.bf16 %v1433, %v1429
        %v1486 = vpack.c.bf16 %v1434, %v1430
        %v1487 = vpack.c.bf16 %v1435, %v1431
        %v1488 = vpack.c.bf16 %v1436, %v1432
        %v1489 = vpack.c.bf16 %v1441, %v1437
        %v1490 = vpack.c.bf16 %v1442, %v1438
        %v1491 = vpack.c.bf16 %v1443, %v1439
        %v1492 = vpack.c.bf16 %v1444, %v1440
        %v1493 = vld [vmem:[%s4] sm:$0xff]
        %v1494 = vld [vmem:[%s4 + $0x8] sm:$0xff]
        %v1495 = vld [vmem:[%s4 + $0x10] sm:$0xff]
        %v1496 = vld [vmem:[%s4 + $0x18] sm:$0xff]
        %v1497 = vld [vmem:[%s4 + $0x20] sm:$0xff]
        %v1498 = vld [vmem:[%s4 + $0x28] sm:$0xff]
        %v1499 = vld [vmem:[%s4 + $0x30] sm:$0xff]
        %v1500 = vld [vmem:[%s4 + $0x38] sm:$0xff]
        %v1501 = vld [vmem:[%s4 + $0x40] sm:$0xff]
        %v1502 = vld [vmem:[%s4 + $0x48] sm:$0xff]
        %v1503 = vld [vmem:[%s4 + $0x50] sm:$0xff]
        %v1504 = vld [vmem:[%s4 + $0x58] sm:$0xff]
        %v1505 = vld [vmem:[%s4 + $0x60] sm:$0xff]
        %v1506 = vld [vmem:[%s4 + $0x68] sm:$0xff]
        %v1507 = vld [vmem:[%s4 + $0x70] sm:$0xff]
        %v1508 = vld [vmem:[%s4 + $0x78] sm:$0xff]
        %1510 = vset.pattern.permute.xlu0 0
        %1511 = vperm.xlu0 %1510, %v1493
        %v1512 = vpop.permute.xlu0 %1511
        %1515 = vset.pattern.permute.xlu0 0
        %1516 = vperm.xlu0 %1515, %v1494
        %v1517 = vpop.permute.xlu0 %1516
        %1520 = vset.pattern.permute.xlu0 0
        %1521 = vperm.xlu0 %1520, %v1495
        %v1522 = vpop.permute.xlu0 %1521
        %1525 = vset.pattern.permute.xlu0 0
        %1526 = vperm.xlu0 %1525, %v1496
        %v1527 = vpop.permute.xlu0 %1526
        %1530 = vset.pattern.permute.xlu0 0
        %1531 = vperm.xlu0 %1530, %v1497
        %v1532 = vpop.permute.xlu0 %1531
        %1535 = vset.pattern.permute.xlu0 0
        %1536 = vperm.xlu0 %1535, %v1498
        %v1537 = vpop.permute.xlu0 %1536
        %1540 = vset.pattern.permute.xlu0 0
        %1541 = vperm.xlu0 %1540, %v1499
        %v1542 = vpop.permute.xlu0 %1541
        %1545 = vset.pattern.permute.xlu0 0
        %1546 = vperm.xlu0 %1545, %v1500
        %v1547 = vpop.permute.xlu0 %1546
        %1550 = vset.pattern.permute.xlu0 0
        %1551 = vperm.xlu0 %1550, %v1501
        %v1552 = vpop.permute.xlu0 %1551
        %1555 = vset.pattern.permute.xlu0 0
        %1556 = vperm.xlu0 %1555, %v1502
        %v1557 = vpop.permute.xlu0 %1556
        %1560 = vset.pattern.permute.xlu0 0
        %1561 = vperm.xlu0 %1560, %v1503
        %v1562 = vpop.permute.xlu0 %1561
        %1565 = vset.pattern.permute.xlu0 0
        %1566 = vperm.xlu0 %1565, %v1504
        %v1567 = vpop.permute.xlu0 %1566
        %1570 = vset.pattern.permute.xlu0 0
        %1571 = vperm.xlu0 %1570, %v1505
        %v1572 = vpop.permute.xlu0 %1571
        %1575 = vset.pattern.permute.xlu0 0
        %1576 = vperm.xlu0 %1575, %v1506
        %v1577 = vpop.permute.xlu0 %1576
        %1580 = vset.pattern.permute.xlu0 0
        %1581 = vperm.xlu0 %1580, %v1507
        %v1582 = vpop.permute.xlu0 %1581
        %1585 = vset.pattern.permute.xlu0 0
        %1586 = vperm.xlu0 %1585, %v1508
        %v1587 = vpop.permute.xlu0 %1586
        %v1605 = vunpack.c.l.b16 %v1445
        %v1606 = vunpack.c.l.b16 %v1446
        %v1607 = vunpack.c.l.b16 %v1447
        %v1608 = vunpack.c.l.b16 %v1448
        %v1609 = vunpack.c.l.b16 %v1449
        %v1610 = vunpack.c.l.b16 %v1450
        %v1611 = vunpack.c.l.b16 %v1451
        %v1612 = vunpack.c.l.b16 %v1452
        %v1613 = vunpack.c.l.b16 %v1453
        %v1614 = vunpack.c.l.b16 %v1454
        %v1615 = vunpack.c.l.b16 %v1455
        %v1616 = vunpack.c.l.b16 %v1456
        %v1617 = vunpack.c.l.b16 %v1457
        %v1618 = vunpack.c.l.b16 %v1458
        %v1619 = vunpack.c.l.b16 %v1459
        %v1620 = vunpack.c.l.b16 %v1460
        %v1621 = vpack.c.b16 %v1606, %v1605
        %v1622 = vpack.c.b16 %v1608, %v1607
        %v1623 = vpack.c.b16 %v1610, %v1609
        %v1624 = vpack.c.b16 %v1612, %v1611
        %v1625 = vpack.c.b16 %v1614, %v1613
        %v1626 = vpack.c.b16 %v1616, %v1615
        %v1627 = vpack.c.b16 %v1618, %v1617
        %v1628 = vpack.c.b16 %v1620, %v1619
        %1637 = vmatprep.subr.bf16.mxu0 %v1462
        %1638 = vmatpush1.bf16.msra.mxu0 %v1461
        %1639 = vmatprep.subr.bf16.mxu0 %v1466
        %1640 = vmatpush1.bf16.msra.mxu0 %v1465
        %1641 = vmatprep.subr.bf16.mxu0 %v1470
        %1642 = vmatpush1.bf16.msra.mxu0 %v1469
        %1643 = vmatprep.subr.bf16.mxu0 %v1474
        %1644 = vmatpush1.bf16.msra.mxu0 %v1473
        %1645 = vmatprep.subr.bf16.mxu0 %v1478
        %1646 = vmatpush1.bf16.msra.mxu0 %v1477
        %1647 = vmatprep.subr.bf16.mxu0 %v1482
        %1648 = vmatpush1.bf16.msra.mxu0 %v1481
        %1649 = vmatprep.subr.bf16.mxu0 %v1486
        %1650 = vmatpush1.bf16.msra.mxu0 %v1485
        %1651 = vmatprep.subr.bf16.mxu0 %v1490
        %1652 = vmatpush1.bf16.msra.mxu0 %v1489
        %1653 = vmatprep.subr.bf16.mxu0 0
        %1654 = vmatpush1.bf16.msra.mxu0 0
        %1655 = vmatprep.subr.bf16.mxu0 0
        %1656 = vmatpush1.bf16.msra.mxu0 0
        %1657 = vmatprep.subr.bf16.mxu0 0
        %1658 = vmatpush1.bf16.msra.mxu0 0
        %1659 = vmatprep.subr.bf16.mxu0 0
        %1660 = vmatpush1.bf16.msra.mxu0 0
        %1661 = vmatprep.subr.bf16.mxu0 0
        %1662 = vmatpush1.bf16.msra.mxu0 0
        %1663 = vmatprep.subr.bf16.mxu0 0
        %1664 = vmatpush1.bf16.msra.mxu0 0
        %1665 = vmatprep.subr.bf16.mxu0 0
        %1666 = vmatpush1.bf16.msra.mxu0 0
        %1667 = vmatprep.subr.bf16.mxu0 0
        %1668 = vmatpush1.bf16.msra.mxu0 0
        %1669 = vmatprep.mubr.bf16.mxu0 0
        %1670 = vmatmul.mubr.bf16.gmra.mrb[0].mxu0 %v1621
        %v1671 = vpop.f32.mrb[0].mxu0
        %v1672 = vadd.f32 %v1512, %v1671
        %v1673 = vpop.f32.mrb[0].mxu0
        %v1674 = vadd.f32 %v1512, %v1673
        %v1675 = vpop.f32.mrb[0].mxu0
        %v1676 = vadd.f32 %v1517, %v1675
        %v1677 = vpop.f32.mrb[0].mxu0
        %v1678 = vadd.f32 %v1517, %v1677
        %1679 = vmatprep.mubr.bf16.mxu0 0
        %1680 = vmatmul.mubr.bf16.gmra.mrb[0].mxu0 %v1622
        %v1681 = vpop.f32.mrb[0].mxu0
        %v1682 = vadd.f32 %v1522, %v1681
        %v1683 = vpop.f32.mrb[0].mxu0
        %v1684 = vadd.f32 %v1522, %v1683
        %v1685 = vpop.f32.mrb[0].mxu0
        %v1686 = vadd.f32 %v1527, %v1685
        %v1687 = vpop.f32.mrb[0].mxu0
        %v1688 = vadd.f32 %v1527, %v1687
        %1689 = vmatprep.mubr.bf16.mxu0 0
        %1690 = vmatmul.mubr.bf16.gmra.mrb[0].mxu0 %v1623
        %v1691 = vpop.f32.mrb[0].mxu0
        %v1692 = vadd.f32 %v1532, %v1691
        %v1693 = vpop.f32.mrb[0].mxu0
        %v1694 = vadd.f32 %v1532, %v1693
        %v1695 = vpop.f32.mrb[0].mxu0
        %v1696 = vadd.f32 %v1537, %v1695
        %v1697 = vpop.f32.mrb[0].mxu0
        %v1698 = vadd.f32 %v1537, %v1697
        %1699 = vmatprep.mubr.bf16.mxu0 0
        %1700 = vmatmul.mubr.bf16.gmra.mrb[0].mxu0 %v1624
        %v1701 = vpop.f32.mrb[0].mxu0
        %v1702 = vadd.f32 %v1542, %v1701
        %v1703 = vpop.f32.mrb[0].mxu0
        %v1704 = vadd.f32 %v1542, %v1703
        %v1705 = vpop.f32.mrb[0].mxu0
        %v1706 = vadd.f32 %v1547, %v1705
        %v1707 = vpop.f32.mrb[0].mxu0
        %v1708 = vadd.f32 %v1547, %v1707
        %1709 = vmatprep.mubr.bf16.mxu0 0
        %1710 = vmatmul.mubr.bf16.gmra.mrb[0].mxu0 %v1625
        %v1711 = vpop.f32.mrb[0].mxu0
        %v1712 = vadd.f32 %v1552, %v1711
        %v1713 = vpop.f32.mrb[0].mxu0
        %v1714 = vadd.f32 %v1552, %v1713
        %v1715 = vpop.f32.mrb[0].mxu0
        %v1716 = vadd.f32 %v1557, %v1715
        %v1717 = vpop.f32.mrb[0].mxu0
        %v1718 = vadd.f32 %v1557, %v1717
        %1719 = vmatprep.mubr.bf16.mxu0 0
        %1720 = vmatmul.mubr.bf16.gmra.mrb[0].mxu0 %v1626
        %v1721 = vpop.f32.mrb[0].mxu0
        %v1722 = vadd.f32 %v1562, %v1721
        %v1723 = vpop.f32.mrb[0].mxu0
        %v1724 = vadd.f32 %v1562, %v1723
        %v1725 = vpop.f32.mrb[0].mxu0
        %v1726 = vadd.f32 %v1567, %v1725
        %v1727 = vpop.f32.mrb[0].mxu0
        %v1728 = vadd.f32 %v1567, %v1727
        %1729 = vmatprep.mubr.bf16.mxu0 0
        %1730 = vmatmul.mubr.bf16.gmra.mrb[0].mxu0 %v1627
        %v1731 = vpop.f32.mrb[0].mxu0
        %v1732 = vadd.f32 %v1572, %v1731
        %v1733 = vpop.f32.mrb[0].mxu0
        %v1734 = vadd.f32 %v1572, %v1733
        %v1735 = vpop.f32.mrb[0].mxu0
        %v1736 = vadd.f32 %v1577, %v1735
        %v1737 = vpop.f32.mrb[0].mxu0
        %v1738 = vadd.f32 %v1577, %v1737
        %1739 = vmatprep.mubr.bf16.mxu0 0
        %1740 = vmatmul.mubr.bf16.gmra.mrb[0].mxu0 %v1628
        %v1741 = vpop.f32.mrb[0].mxu0
        %v1742 = vadd.f32 %v1582, %v1741
        %v1743 = vpop.f32.mrb[0].mxu0
        %v1744 = vadd.f32 %v1582, %v1743
        %v1745 = vpop.f32.mrb[0].mxu0
        %v1746 = vadd.f32 %v1587, %v1745
        %v1747 = vpop.f32.mrb[0].mxu0
        %v1748 = vadd.f32 %v1587, %v1747
        %1749 = vdwg.mxu0
        %1750 = vmatprep.subr.bf16.mxu0 %v1464
        %1751 = vmatpush1.bf16.msra.mxu0 %v1463
        %1752 = vmatprep.subr.bf16.mxu0 %v1468
        %1753 = vmatpush1.bf16.msra.mxu0 %v1467
        %1754 = vmatprep.subr.bf16.mxu0 %v1472
        %1755 = vmatpush1.bf16.msra.mxu0 %v1471
        %1756 = vmatprep.subr.bf16.mxu0 %v1476
        %1757 = vmatpush1.bf16.msra.mxu0 %v1475
        %1758 = vmatprep.subr.bf16.mxu0 %v1480
        %1759 = vmatpush1.bf16.msra.mxu0 %v1479
        %1760 = vmatprep.subr.bf16.mxu0 %v1484
        %1761 = vmatpush1.bf16.msra.mxu0 %v1483
        %1762 = vmatprep.subr.bf16.mxu0 %v1488
        %1763 = vmatpush1.bf16.msra.mxu0 %v1487
        %1764 = vmatprep.subr.bf16.mxu0 %v1492
        %1765 = vmatpush1.bf16.msra.mxu0 %v1491
        %1766 = vmatprep.subr.bf16.mxu0 0
        %1767 = vmatpush1.bf16.msra.mxu0 0
        %1768 = vmatprep.subr.bf16.mxu0 0
        %1769 = vmatpush1.bf16.msra.mxu0 0
        %1770 = vmatprep.subr.bf16.mxu0 0
        %1771 = vmatpush1.bf16.msra.mxu0 0
        %1772 = vmatprep.subr.bf16.mxu0 0
        %1773 = vmatpush1.bf16.msra.mxu0 0
        %1774 = vmatprep.subr.bf16.mxu0 0
        %1775 = vmatpush1.bf16.msra.mxu0 0
        %1776 = vmatprep.subr.bf16.mxu0 0
        %1777 = vmatpush1.bf16.msra.mxu0 0
        %1778 = vmatprep.subr.bf16.mxu0 0
        %1779 = vmatpush1.bf16.msra.mxu0 0
        %1780 = vmatprep.subr.bf16.mxu0 0
        %1781 = vmatpush1.bf16.msra.mxu0 0
        %1782 = vmatprep.mubr.bf16.mxu0 0
        %1783 = vmatmul.mubr.bf16.gmra.mrb[0].mxu0 %v1621
        %v1784 = vpop.f32.mrb[0].mxu0
        %v1785 = vadd.f32 %v1512, %v1784
        %v1786 = vpop.f32.mrb[0].mxu0
        %v1787 = vadd.f32 %v1512, %v1786
        %v1788 = vpop.f32.mrb[0].mxu0
        %v1789 = vadd.f32 %v1517, %v1788
        %v1790 = vpop.f32.mrb[0].mxu0
        %v1791 = vadd.f32 %v1517, %v1790
        %1792 = vmatprep.mubr.bf16.mxu0 0
        %1793 = vmatmul.mubr.bf16.gmra.mrb[0].mxu0 %v1622
        %v1794 = vpop.f32.mrb[0].mxu0
        %v1795 = vadd.f32 %v1522, %v1794
        %v1796 = vpop.f32.mrb[0].mxu0
        %v1797 = vadd.f32 %v1522, %v1796
        %v1798 = vpop.f32.mrb[0].mxu0
        %v1799 = vadd.f32 %v1527, %v1798
        %v1800 = vpop.f32.mrb[0].mxu0
        %v1801 = vadd.f32 %v1527, %v1800
        %1802 = vmatprep.mubr.bf16.mxu0 0
        %1803 = vmatmul.mubr.bf16.gmra.mrb[0].mxu0 %v1623
        %v1804 = vpop.f32.mrb[0].mxu0
        %v1805 = vadd.f32 %v1532, %v1804
        %v1806 = vpop.f32.mrb[0].mxu0
        %v1807 = vadd.f32 %v1532, %v1806
        %v1808 = vpop.f32.mrb[0].mxu0
        %v1809 = vadd.f32 %v1537, %v1808
        %v1810 = vpop.f32.mrb[0].mxu0
        %v1811 = vadd.f32 %v1537, %v1810
        %1812 = vmatprep.mubr.bf16.mxu0 0
        %1813 = vmatmul.mubr.bf16.gmra.mrb[0].mxu0 %v1624
        %v1814 = vpop.f32.mrb[0].mxu0
        %v1815 = vadd.f32 %v1542, %v1814
        %v1816 = vpop.f32.mrb[0].mxu0
        %v1817 = vadd.f32 %v1542, %v1816
        %v1818 = vpop.f32.mrb[0].mxu0
        %v1819 = vadd.f32 %v1547, %v1818
        %v1820 = vpop.f32.mrb[0].mxu0
        %v1821 = vadd.f32 %v1547, %v1820
        %1822 = vmatprep.mubr.bf16.mxu0 0
        %1823 = vmatmul.mubr.bf16.gmra.mrb[0].mxu0 %v1625
        %v1824 = vpop.f32.mrb[0].mxu0
        %v1825 = vadd.f32 %v1552, %v1824
        %v1826 = vpop.f32.mrb[0].mxu0
        %v1827 = vadd.f32 %v1552, %v1826
        %v1828 = vpop.f32.mrb[0].mxu0
        %v1829 = vadd.f32 %v1557, %v1828
        %v1830 = vpop.f32.mrb[0].mxu0
        %v1831 = vadd.f32 %v1557, %v1830
        %1832 = vmatprep.mubr.bf16.mxu0 0
        %1833 = vmatmul.mubr.bf16.gmra.mrb[0].mxu0 %v1626
        %v1834 = vpop.f32.mrb[0].mxu0
        %v1835 = vadd.f32 %v1562, %v1834
        %v1836 = vpop.f32.mrb[0].mxu0
        %v1837 = vadd.f32 %v1562, %v1836
        %v1838 = vpop.f32.mrb[0].mxu0
        %v1839 = vadd.f32 %v1567, %v1838
        %v1840 = vpop.f32.mrb[0].mxu0
        %v1841 = vadd.f32 %v1567, %v1840
        %1842 = vmatprep.mubr.bf16.mxu0 0
        %1843 = vmatmul.mubr.bf16.gmra.mrb[0].mxu0 %v1627
        %v1844 = vpop.f32.mrb[0].mxu0
        %v1845 = vadd.f32 %v1572, %v1844
        %v1846 = vpop.f32.mrb[0].mxu0
        %v1847 = vadd.f32 %v1572, %v1846
        %v1848 = vpop.f32.mrb[0].mxu0
        %v1849 = vadd.f32 %v1577, %v1848
        %v1850 = vpop.f32.mrb[0].mxu0
        %v1851 = vadd.f32 %v1577, %v1850
        %1852 = vmatprep.mubr.bf16.mxu0 0
        %1853 = vmatmul.mubr.bf16.gmra.mrb[0].mxu0 %v1628
        %v1854 = vpop.f32.mrb[0].mxu0
        %v1855 = vadd.f32 %v1582, %v1854
        %v1856 = vpop.f32.mrb[0].mxu0
        %v1857 = vadd.f32 %v1582, %v1856
        %v1858 = vpop.f32.mrb[0].mxu0
        %v1859 = vadd.f32 %v1587, %v1858
        %v1860 = vpop.f32.mrb[0].mxu0
        %v1861 = vadd.f32 %v1587, %v1860
        %1862 = vdwg.mxu0
        %v1863 = vmul.f32 %v1672, 0.5
        %v1864 = vmul.f32 %v1674, 0.5
        %v1865 = vmul.f32 %v1785, 0.5
        %v1866 = vmul.f32 %v1787, 0.5
        %v1867 = vmul.f32 %v1676, 0.5
        %v1868 = vmul.f32 %v1678, 0.5
        %v1869 = vmul.f32 %v1789, 0.5
        %v1870 = vmul.f32 %v1791, 0.5
        %v1871 = vmul.f32 %v1682, 0.5
        %v1872 = vmul.f32 %v1684, 0.5
        %v1873 = vmul.f32 %v1795, 0.5
        %v1874 = vmul.f32 %v1797, 0.5
        %v1875 = vmul.f32 %v1686, 0.5
        %v1876 = vmul.f32 %v1688, 0.5
        %v1877 = vmul.f32 %v1799, 0.5
        %v1878 = vmul.f32 %v1801, 0.5
        %v1879 = vmul.f32 %v1692, 0.5
        %v1880 = vmul.f32 %v1694, 0.5
        %v1881 = vmul.f32 %v1805, 0.5
        %v1882 = vmul.f32 %v1807, 0.5
        %v1883 = vmul.f32 %v1696, 0.5
        %v1884 = vmul.f32 %v1698, 0.5
        %v1885 = vmul.f32 %v1809, 0.5
        %v1886 = vmul.f32 %v1811, 0.5
        %v1887 = vmul.f32 %v1702, 0.5
        %v1888 = vmul.f32 %v1704, 0.5
        %v1889 = vmul.f32 %v1815, 0.5
        %v1890 = vmul.f32 %v1817, 0.5
        %v1891 = vmul.f32 %v1706, 0.5
        %v1892 = vmul.f32 %v1708, 0.5
        %v1893 = vmul.f32 %v1819, 0.5
        %v1894 = vmul.f32 %v1821, 0.5
        %v1895 = vmul.f32 %v1712, 0.5
        %v1896 = vmul.f32 %v1714, 0.5
        %v1897 = vmul.f32 %v1825, 0.5
        %v1898 = vmul.f32 %v1827, 0.5
        %v1899 = vmul.f32 %v1716, 0.5
        %v1900 = vmul.f32 %v1718, 0.5
        %v1901 = vmul.f32 %v1829, 0.5
        %v1902 = vmul.f32 %v1831, 0.5
        %v1903 = vmul.f32 %v1722, 0.5
        %v1904 = vmul.f32 %v1724, 0.5
        %v1905 = vmul.f32 %v1835, 0.5
        %v1906 = vmul.f32 %v1837, 0.5
        %v1907 = vmul.f32 %v1726, 0.5
        %v1908 = vmul.f32 %v1728, 0.5
        %v1909 = vmul.f32 %v1839, 0.5
        %v1910 = vmul.f32 %v1841, 0.5
        %v1911 = vmul.f32 %v1732, 0.5
        %v1912 = vmul.f32 %v1734, 0.5
        %v1913 = vmul.f32 %v1845, 0.5
        %v1914 = vmul.f32 %v1847, 0.5
        %v1915 = vmul.f32 %v1736, 0.5
        %v1916 = vmul.f32 %v1738, 0.5
        %v1917 = vmul.f32 %v1849, 0.5
        %v1918 = vmul.f32 %v1851, 0.5
        %v1919 = vmul.f32 %v1742, 0.5
        %v1920 = vmul.f32 %v1744, 0.5
        %v1921 = vmul.f32 %v1855, 0.5
        %v1922 = vmul.f32 %v1857, 0.5
        %v1923 = vmul.f32 %v1746, 0.5
        %v1924 = vmul.f32 %v1748, 0.5
        %v1925 = vmul.f32 %v1859, 0.5
        %v1926 = vmul.f32 %v1861, 0.5
        %v1927 = vmul.f32 %v1672, %v1672
        %v1928 = vmul.f32 %v1674, %v1674
        %v1929 = vmul.f32 %v1785, %v1785
        %v1930 = vmul.f32 %v1787, %v1787
        %v1931 = vmul.f32 %v1676, %v1676
        %v1932 = vmul.f32 %v1678, %v1678
        %v1933 = vmul.f32 %v1789, %v1789
        %v1934 = vmul.f32 %v1791, %v1791
        %v1935 = vmul.f32 %v1682, %v1682
        %v1936 = vmul.f32 %v1684, %v1684
        %v1937 = vmul.f32 %v1795, %v1795
        %v1938 = vmul.f32 %v1797, %v1797
        %v1939 = vmul.f32 %v1686, %v1686
        %v1940 = vmul.f32 %v1688, %v1688
        %v1941 = vmul.f32 %v1799, %v1799
        %v1942 = vmul.f32 %v1801, %v1801
        %v1943 = vmul.f32 %v1692, %v1692
        %v1944 = vmul.f32 %v1694, %v1694
        %v1945 = vmul.f32 %v1805, %v1805
        %v1946 = vmul.f32 %v1807, %v1807
        %v1947 = vmul.f32 %v1696, %v1696
        %v1948 = vmul.f32 %v1698, %v1698
        %v1949 = vmul.f32 %v1809, %v1809
        %v1950 = vmul.f32 %v1811, %v1811
        %v1951 = vmul.f32 %v1702, %v1702
        %v1952 = vmul.f32 %v1704, %v1704
        %v1953 = vmul.f32 %v1815, %v1815
        %v1954 = vmul.f32 %v1817, %v1817
        %v1955 = vmul.f32 %v1706, %v1706
        %v1956 = vmul.f32 %v1708, %v1708
        %v1957 = vmul.f32 %v1819, %v1819
        %v1958 = vmul.f32 %v1821, %v1821
        %v1959 = vmul.f32 %v1712, %v1712
        %v1960 = vmul.f32 %v1714, %v1714
        %v1961 = vmul.f32 %v1825, %v1825
        %v1962 = vmul.f32 %v1827, %v1827
        %v1963 = vmul.f32 %v1716, %v1716
        %v1964 = vmul.f32 %v1718, %v1718
        %v1965 = vmul.f32 %v1829, %v1829
        %v1966 = vmul.f32 %v1831, %v1831
        %v1967 = vmul.f32 %v1722, %v1722
        %v1968 = vmul.f32 %v1724, %v1724
        %v1969 = vmul.f32 %v1835, %v1835
        %v1970 = vmul.f32 %v1837, %v1837
        %v1971 = vmul.f32 %v1726, %v1726
        %v1972 = vmul.f32 %v1728, %v1728
        %v1973 = vmul.f32 %v1839, %v1839
        %v1974 = vmul.f32 %v1841, %v1841
        %v1975 = vmul.f32 %v1732, %v1732
        %v1976 = vmul.f32 %v1734, %v1734
        %v1977 = vmul.f32 %v1845, %v1845
        %v1978 = vmul.f32 %v1847, %v1847
        %v1979 = vmul.f32 %v1736, %v1736
        %v1980 = vmul.f32 %v1738, %v1738
        %v1981 = vmul.f32 %v1849, %v1849
        %v1982 = vmul.f32 %v1851, %v1851
        %v1983 = vmul.f32 %v1742, %v1742
        %v1984 = vmul.f32 %v1744, %v1744
        %v1985 = vmul.f32 %v1855, %v1855
        %v1986 = vmul.f32 %v1857, %v1857
        %v1987 = vmul.f32 %v1746, %v1746
        %v1988 = vmul.f32 %v1748, %v1748
        %v1989 = vmul.f32 %v1859, %v1859
        %v1990 = vmul.f32 %v1861, %v1861
        %v1991 = vmul.f32 %v1927, %v1672
        %v1992 = vmul.f32 %v1928, %v1674
        %v1993 = vmul.f32 %v1929, %v1785
        %v1994 = vmul.f32 %v1930, %v1787
        %v1995 = vmul.f32 %v1931, %v1676
        %v1996 = vmul.f32 %v1932, %v1678
        %v1997 = vmul.f32 %v1933, %v1789
        %v1998 = vmul.f32 %v1934, %v1791
        %v1999 = vmul.f32 %v1935, %v1682
        %v2000 = vmul.f32 %v1936, %v1684
        %v2001 = vmul.f32 %v1937, %v1795
        %v2002 = vmul.f32 %v1938, %v1797
        %v2003 = vmul.f32 %v1939, %v1686
        %v2004 = vmul.f32 %v1940, %v1688
        %v2005 = vmul.f32 %v1941, %v1799
        %v2006 = vmul.f32 %v1942, %v1801
        %v2007 = vmul.f32 %v1943, %v1692
        %v2008 = vmul.f32 %v1944, %v1694
        %v2009 = vmul.f32 %v1945, %v1805
        %v2010 = vmul.f32 %v1946, %v1807
        %v2011 = vmul.f32 %v1947, %v1696
        %v2012 = vmul.f32 %v1948, %v1698
        %v2013 = vmul.f32 %v1949, %v1809
        %v2014 = vmul.f32 %v1950, %v1811
        %v2015 = vmul.f32 %v1951, %v1702
        %v2016 = vmul.f32 %v1952, %v1704
        %v2017 = vmul.f32 %v1953, %v1815
        %v2018 = vmul.f32 %v1954, %v1817
        %v2019 = vmul.f32 %v1955, %v1706
        %v2020 = vmul.f32 %v1956, %v1708
        %v2021 = vmul.f32 %v1957, %v1819
        %v2022 = vmul.f32 %v1958, %v1821
        %v2023 = vmul.f32 %v1959, %v1712
        %v2024 = vmul.f32 %v1960, %v1714
        %v2025 = vmul.f32 %v1961, %v1825
        %v2026 = vmul.f32 %v1962, %v1827
        %v2027 = vmul.f32 %v1963, %v1716
        %v2028 = vmul.f32 %v1964, %v1718
        %v2029 = vmul.f32 %v1965, %v1829
        %v2030 = vmul.f32 %v1966, %v1831
        %v2031 = vmul.f32 %v1967, %v1722
        %v2032 = vmul.f32 %v1968, %v1724
        %v2033 = vmul.f32 %v1969, %v1835
        %v2034 = vmul.f32 %v1970, %v1837
        %v2035 = vmul.f32 %v1971, %v1726
        %v2036 = vmul.f32 %v1972, %v1728
        %v2037 = vmul.f32 %v1973, %v1839
        %v2038 = vmul.f32 %v1974, %v1841
        %v2039 = vmul.f32 %v1975, %v1732
        %v2040 = vmul.f32 %v1976, %v1734
        %v2041 = vmul.f32 %v1977, %v1845
        %v2042 = vmul.f32 %v1978, %v1847
        %v2043 = vmul.f32 %v1979, %v1736
        %v2044 = vmul.f32 %v1980, %v1738
        %v2045 = vmul.f32 %v1981, %v1849
        %v2046 = vmul.f32 %v1982, %v1851
        %v2047 = vmul.f32 %v1983, %v1742
        %v2048 = vmul.f32 %v1984, %v1744
        %v2049 = vmul.f32 %v1985, %v1855
        %v2050 = vmul.f32 %v1986, %v1857
        %v2051 = vmul.f32 %v1987, %v1746
        %v2052 = vmul.f32 %v1988, %v1748
        %v2053 = vmul.f32 %v1989, %v1859
        %v2054 = vmul.f32 %v1990, %v1861
        %v2055 = vmul.f32 %v1991, 0.044715
        %v2056 = vmul.f32 %v1992, 0.044715
        %v2057 = vmul.f32 %v1993, 0.044715
        %v2058 = vmul.f32 %v1994, 0.044715
        %v2059 = vmul.f32 %v1995, 0.044715
        %v2060 = vmul.f32 %v1996, 0.044715
        %v2061 = vmul.f32 %v1997, 0.044715
        %v2062 = vmul.f32 %v1998, 0.044715
        %v2063 = vmul.f32 %v1999, 0.044715
        %v2064 = vmul.f32 %v2000, 0.044715
        %v2065 = vmul.f32 %v2001, 0.044715
        %v2066 = vmul.f32 %v2002, 0.044715
        %v2067 = vmul.f32 %v2003, 0.044715
        %v2068 = vmul.f32 %v2004, 0.044715
        %v2069 = vmul.f32 %v2005, 0.044715
        %v2070 = vmul.f32 %v2006, 0.044715
        %v2071 = vmul.f32 %v2007, 0.044715
        %v2072 = vmul.f32 %v2008, 0.044715
        %v2073 = vmul.f32 %v2009, 0.044715
        %v2074 = vmul.f32 %v2010, 0.044715
        %v2075 = vmul.f32 %v2011, 0.044715
        %v2076 = vmul.f32 %v2012, 0.044715
        %v2077 = vmul.f32 %v2013, 0.044715
        %v2078 = vmul.f32 %v2014, 0.044715
        %v2079 = vmul.f32 %v2015, 0.044715
        %v2080 = vmul.f32 %v2016, 0.044715
        %v2081 = vmul.f32 %v2017, 0.044715
        %v2082 = vmul.f32 %v2018, 0.044715
        %v2083 = vmul.f32 %v2019, 0.044715
        %v2084 = vmul.f32 %v2020, 0.044715
        %v2085 = vmul.f32 %v2021, 0.044715
        %v2086 = vmul.f32 %v2022, 0.044715
        %v2087 = vmul.f32 %v2023, 0.044715
        %v2088 = vmul.f32 %v2024, 0.044715
        %v2089 = vmul.f32 %v2025, 0.044715
        %v2090 = vmul.f32 %v2026, 0.044715
        %v2091 = vmul.f32 %v2027, 0.044715
        %v2092 = vmul.f32 %v2028, 0.044715
        %v2093 = vmul.f32 %v2029, 0.044715
        %v2094 = vmul.f32 %v2030, 0.044715
        %v2095 = vmul.f32 %v2031, 0.044715
        %v2096 = vmul.f32 %v2032, 0.044715
        %v2097 = vmul.f32 %v2033, 0.044715
        %v2098 = vmul.f32 %v2034, 0.044715
        %v2099 = vmul.f32 %v2035, 0.044715
        %v2100 = vmul.f32 %v2036, 0.044715
        %v2101 = vmul.f32 %v2037, 0.044715
        %v2102 = vmul.f32 %v2038, 0.044715
        %v2103 = vmul.f32 %v2039, 0.044715
        %v2104 = vmul.f32 %v2040, 0.044715
        %v2105 = vmul.f32 %v2041, 0.044715
        %v2106 = vmul.f32 %v2042, 0.044715
        %v2107 = vmul.f32 %v2043, 0.044715
        %v2108 = vmul.f32 %v2044, 0.044715
        %v2109 = vmul.f32 %v2045, 0.044715
        %v2110 = vmul.f32 %v2046, 0.044715
        %v2111 = vmul.f32 %v2047, 0.044715
        %v2112 = vmul.f32 %v2048, 0.044715
        %v2113 = vmul.f32 %v2049, 0.044715
        %v2114 = vmul.f32 %v2050, 0.044715
        %v2115 = vmul.f32 %v2051, 0.044715
        %v2116 = vmul.f32 %v2052, 0.044715
        %v2117 = vmul.f32 %v2053, 0.044715
        %v2118 = vmul.f32 %v2054, 0.044715
        %v2119 = vadd.f32 %v1672, %v2055
        %v2120 = vadd.f32 %v1674, %v2056
        %v2121 = vadd.f32 %v1785, %v2057
        %v2122 = vadd.f32 %v1787, %v2058
        %v2123 = vadd.f32 %v1676, %v2059
        %v2124 = vadd.f32 %v1678, %v2060
        %v2125 = vadd.f32 %v1789, %v2061
        %v2126 = vadd.f32 %v1791, %v2062
        %v2127 = vadd.f32 %v1682, %v2063
        %v2128 = vadd.f32 %v1684, %v2064
        %v2129 = vadd.f32 %v1795, %v2065
        %v2130 = vadd.f32 %v1797, %v2066
        %v2131 = vadd.f32 %v1686, %v2067
        %v2132 = vadd.f32 %v1688, %v2068
        %v2133 = vadd.f32 %v1799, %v2069
        %v2134 = vadd.f32 %v1801, %v2070
        %v2135 = vadd.f32 %v1692, %v2071
        %v2136 = vadd.f32 %v1694, %v2072
        %v2137 = vadd.f32 %v1805, %v2073
        %v2138 = vadd.f32 %v1807, %v2074
        %v2139 = vadd.f32 %v1696, %v2075
        %v2140 = vadd.f32 %v1698, %v2076
        %v2141 = vadd.f32 %v1809, %v2077
        %v2142 = vadd.f32 %v1811, %v2078
        %v2143 = vadd.f32 %v1702, %v2079
        %v2144 = vadd.f32 %v1704, %v2080
        %v2145 = vadd.f32 %v1815, %v2081
        %v2146 = vadd.f32 %v1817, %v2082
        %v2147 = vadd.f32 %v1706, %v2083
        %v2148 = vadd.f32 %v1708, %v2084
        %v2149 = vadd.f32 %v1819, %v2085
        %v2150 = vadd.f32 %v1821, %v2086
        %v2151 = vadd.f32 %v1712, %v2087
        %v2152 = vadd.f32 %v1714, %v2088
        %v2153 = vadd.f32 %v1825, %v2089
        %v2154 = vadd.f32 %v1827, %v2090
        %v2155 = vadd.f32 %v1716, %v2091
        %v2156 = vadd.f32 %v1718, %v2092
        %v2157 = vadd.f32 %v1829, %v2093
        %v2158 = vadd.f32 %v1831, %v2094
        %v2159 = vadd.f32 %v1722, %v2095
        %v2160 = vadd.f32 %v1724, %v2096
        %v2161 = vadd.f32 %v1835, %v2097
        %v2162 = vadd.f32 %v1837, %v2098
        %v2163 = vadd.f32 %v1726, %v2099
        %v2164 = vadd.f32 %v1728, %v2100
        %v2165 = vadd.f32 %v1839, %v2101
        %v2166 = vadd.f32 %v1841, %v2102
        %v2167 = vadd.f32 %v1732, %v2103
        %v2168 = vadd.f32 %v1734, %v2104
        %v2169 = vadd.f32 %v1845, %v2105
        %v2170 = vadd.f32 %v1847, %v2106
        %v2171 = vadd.f32 %v1736, %v2107
        %v2172 = vadd.f32 %v1738, %v2108
        %v2173 = vadd.f32 %v1849, %v2109
        %v2174 = vadd.f32 %v1851, %v2110
        %v2175 = vadd.f32 %v1742, %v2111
        %v2176 = vadd.f32 %v1744, %v2112
        %v2177 = vadd.f32 %v1855, %v2113
        %v2178 = vadd.f32 %v1857, %v2114
        %v2179 = vadd.f32 %v1746, %v2115
        %v2180 = vadd.f32 %v1748, %v2116
        %v2181 = vadd.f32 %v1859, %v2117
        %v2182 = vadd.f32 %v1861, %v2118
        %v2183 = vmul.f32 %v2119, 0.7978846
        %v2184 = vmul.f32 %v2120, 0.7978846
        %v2185 = vmul.f32 %v2121, 0.7978846
        %v2186 = vmul.f32 %v2122, 0.7978846
        %v2187 = vmul.f32 %v2123, 0.7978846
        %v2188 = vmul.f32 %v2124, 0.7978846
        %v2189 = vmul.f32 %v2125, 0.7978846
        %v2190 = vmul.f32 %v2126, 0.7978846
        %v2191 = vmul.f32 %v2127, 0.7978846
        %v2192 = vmul.f32 %v2128, 0.7978846
        %v2193 = vmul.f32 %v2129, 0.7978846
        %v2194 = vmul.f32 %v2130, 0.7978846
        %v2195 = vmul.f32 %v2131, 0.7978846
        %v2196 = vmul.f32 %v2132, 0.7978846
        %v2197 = vmul.f32 %v2133, 0.7978846
        %v2198 = vmul.f32 %v2134, 0.7978846
        %v2199 = vmul.f32 %v2135, 0.7978846
        %v2200 = vmul.f32 %v2136, 0.7978846
        %v2201 = vmul.f32 %v2137, 0.7978846
        %v2202 = vmul.f32 %v2138, 0.7978846
        %v2203 = vmul.f32 %v2139, 0.7978846
        %v2204 = vmul.f32 %v2140, 0.7978846
        %v2205 = vmul.f32 %v2141, 0.7978846
        %v2206 = vmul.f32 %v2142, 0.7978846
        %v2207 = vmul.f32 %v2143, 0.7978846
        %v2208 = vmul.f32 %v2144, 0.7978846
        %v2209 = vmul.f32 %v2145, 0.7978846
        %v2210 = vmul.f32 %v2146, 0.7978846
        %v2211 = vmul.f32 %v2147, 0.7978846
        %v2212 = vmul.f32 %v2148, 0.7978846
        %v2213 = vmul.f32 %v2149, 0.7978846
        %v2214 = vmul.f32 %v2150, 0.7978846
        %v2215 = vmul.f32 %v2151, 0.7978846
        %v2216 = vmul.f32 %v2152, 0.7978846
        %v2217 = vmul.f32 %v2153, 0.7978846
        %v2218 = vmul.f32 %v2154, 0.7978846
        %v2219 = vmul.f32 %v2155, 0.7978846
        %v2220 = vmul.f32 %v2156, 0.7978846
        %v2221 = vmul.f32 %v2157, 0.7978846
        %v2222 = vmul.f32 %v2158, 0.7978846
        %v2223 = vmul.f32 %v2159, 0.7978846
        %v2224 = vmul.f32 %v2160, 0.7978846
        %v2225 = vmul.f32 %v2161, 0.7978846
        %v2226 = vmul.f32 %v2162, 0.7978846
        %v2227 = vmul.f32 %v2163, 0.7978846
        %v2228 = vmul.f32 %v2164, 0.7978846
        %v2229 = vmul.f32 %v2165, 0.7978846
        %v2230 = vmul.f32 %v2166, 0.7978846
        %v2231 = vmul.f32 %v2167, 0.7978846
        %v2232 = vmul.f32 %v2168, 0.7978846
        %v2233 = vmul.f32 %v2169, 0.7978846
        %v2234 = vmul.f32 %v2170, 0.7978846
        %v2235 = vmul.f32 %v2171, 0.7978846
        %v2236 = vmul.f32 %v2172, 0.7978846
        %v2237 = vmul.f32 %v2173, 0.7978846
        %v2238 = vmul.f32 %v2174, 0.7978846
        %v2239 = vmul.f32 %v2175, 0.7978846
        %v2240 = vmul.f32 %v2176, 0.7978846
        %v2241 = vmul.f32 %v2177, 0.7978846
        %v2242 = vmul.f32 %v2178, 0.7978846
        %v2243 = vmul.f32 %v2179, 0.7978846
        %v2244 = vmul.f32 %v2180, 0.7978846
        %v2245 = vmul.f32 %v2181, 0.7978846
        %v2246 = vmul.f32 %v2182, 0.7978846
        %v2247 = vtanh.pop %v2183
        %v2248 = vtanh.pop %v2184
        %v2249 = vtanh.pop %v2185
        %v2250 = vtanh.pop %v2186
        %v2251 = vtanh.pop %v2187
        %v2252 = vtanh.pop %v2188
        %v2253 = vtanh.pop %v2189
        %v2254 = vtanh.pop %v2190
        %v2255 = vtanh.pop %v2191
        %v2256 = vtanh.pop %v2192
        %v2257 = vtanh.pop %v2193
        %v2258 = vtanh.pop %v2194
        %v2259 = vtanh.pop %v2195
        %v2260 = vtanh.pop %v2196
        %v2261 = vtanh.pop %v2197
        %v2262 = vtanh.pop %v2198
        %v2263 = vtanh.pop %v2199
        %v2264 = vtanh.pop %v2200
        %v2265 = vtanh.pop %v2201
        %v2266 = vtanh.pop %v2202
        %v2267 = vtanh.pop %v2203
        %v2268 = vtanh.pop %v2204
        %v2269 = vtanh.pop %v2205
        %v2270 = vtanh.pop %v2206
        %v2271 = vtanh.pop %v2207
        %v2272 = vtanh.pop %v2208
        %v2273 = vtanh.pop %v2209
        %v2274 = vtanh.pop %v2210
        %v2275 = vtanh.pop %v2211
        %v2276 = vtanh.pop %v2212
        %v2277 = vtanh.pop %v2213
        %v2278 = vtanh.pop %v2214
        %v2279 = vtanh.pop %v2215
        %v2280 = vtanh.pop %v2216
        %v2281 = vtanh.pop %v2217
        %v2282 = vtanh.pop %v2218
        %v2283 = vtanh.pop %v2219
        %v2284 = vtanh.pop %v2220
        %v2285 = vtanh.pop %v2221
        %v2286 = vtanh.pop %v2222
        %v2287 = vtanh.pop %v2223
        %v2288 = vtanh.pop %v2224
        %v2289 = vtanh.pop %v2225
        %v2290 = vtanh.pop %v2226
        %v2291 = vtanh.pop %v2227
        %v2292 = vtanh.pop %v2228
        %v2293 = vtanh.pop %v2229
        %v2294 = vtanh.pop %v2230
        %v2295 = vtanh.pop %v2231
        %v2296 = vtanh.pop %v2232
        %v2297 = vtanh.pop %v2233
        %v2298 = vtanh.pop %v2234
        %v2299 = vtanh.pop %v2235
        %v2300 = vtanh.pop %v2236
        %v2301 = vtanh.pop %v2237
        %v2302 = vtanh.pop %v2238
        %v2303 = vtanh.pop %v2239
        %v2304 = vtanh.pop %v2240
        %v2305 = vtanh.pop %v2241
        %v2306 = vtanh.pop %v2242
        %v2307 = vtanh.pop %v2243
        %v2308 = vtanh.pop %v2244
        %v2309 = vtanh.pop %v2245
        %v2310 = vtanh.pop %v2246
        %v2311 = vadd.f32 %v2247, 1.0
        %v2312 = vadd.f32 %v2248, 1.0
        %v2313 = vadd.f32 %v2249, 1.0
        %v2314 = vadd.f32 %v2250, 1.0
        %v2315 = vadd.f32 %v2251, 1.0
        %v2316 = vadd.f32 %v2252, 1.0
        %v2317 = vadd.f32 %v2253, 1.0
        %v2318 = vadd.f32 %v2254, 1.0
        %v2319 = vadd.f32 %v2255, 1.0
        %v2320 = vadd.f32 %v2256, 1.0
        %v2321 = vadd.f32 %v2257, 1.0
        %v2322 = vadd.f32 %v2258, 1.0
        %v2323 = vadd.f32 %v2259, 1.0
        %v2324 = vadd.f32 %v2260, 1.0
        %v2325 = vadd.f32 %v2261, 1.0
        %v2326 = vadd.f32 %v2262, 1.0
        %v2327 = vadd.f32 %v2263, 1.0
        %v2328 = vadd.f32 %v2264, 1.0
        %v2329 = vadd.f32 %v2265, 1.0
        %v2330 = vadd.f32 %v2266, 1.0
        %v2331 = vadd.f32 %v2267, 1.0
        %v2332 = vadd.f32 %v2268, 1.0
        %v2333 = vadd.f32 %v2269, 1.0
        %v2334 = vadd.f32 %v2270, 1.0
        %v2335 = vadd.f32 %v2271, 1.0
        %v2336 = vadd.f32 %v2272, 1.0
        %v2337 = vadd.f32 %v2273, 1.0
        %v2338 = vadd.f32 %v2274, 1.0
        %v2339 = vadd.f32 %v2275, 1.0
        %v2340 = vadd.f32 %v2276, 1.0
        %v2341 = vadd.f32 %v2277, 1.0
        %v2342 = vadd.f32 %v2278, 1.0
        %v2343 = vadd.f32 %v2279, 1.0
        %v2344 = vadd.f32 %v2280, 1.0
        %v2345 = vadd.f32 %v2281, 1.0
        %v2346 = vadd.f32 %v2282, 1.0
        %v2347 = vadd.f32 %v2283, 1.0
        %v2348 = vadd.f32 %v2284, 1.0
        %v2349 = vadd.f32 %v2285, 1.0
        %v2350 = vadd.f32 %v2286, 1.0
        %v2351 = vadd.f32 %v2287, 1.0
        %v2352 = vadd.f32 %v2288, 1.0
        %v2353 = vadd.f32 %v2289, 1.0
        %v2354 = vadd.f32 %v2290, 1.0
        %v2355 = vadd.f32 %v2291, 1.0
        %v2356 = vadd.f32 %v2292, 1.0
        %v2357 = vadd.f32 %v2293, 1.0
        %v2358 = vadd.f32 %v2294, 1.0
        %v2359 = vadd.f32 %v2295, 1.0
        %v2360 = vadd.f32 %v2296, 1.0
        %v2361 = vadd.f32 %v2297, 1.0
        %v2362 = vadd.f32 %v2298, 1.0
        %v2363 = vadd.f32 %v2299, 1.0
        %v2364 = vadd.f32 %v2300, 1.0
        %v2365 = vadd.f32 %v2301, 1.0
        %v2366 = vadd.f32 %v2302, 1.0
        %v2367 = vadd.f32 %v2303, 1.0
        %v2368 = vadd.f32 %v2304, 1.0
        %v2369 = vadd.f32 %v2305, 1.0
        %v2370 = vadd.f32 %v2306, 1.0
        %v2371 = vadd.f32 %v2307, 1.0
        %v2372 = vadd.f32 %v2308, 1.0
        %v2373 = vadd.f32 %v2309, 1.0
        %v2374 = vadd.f32 %v2310, 1.0
        %v2375 = vmul.f32 %v1863, %v2311
        %v2376 = vmul.f32 %v1864, %v2312
        %v2377 = vmul.f32 %v1865, %v2313
        %v2378 = vmul.f32 %v1866, %v2314
        %v2379 = vmul.f32 %v1867, %v2315
        %v2380 = vmul.f32 %v1868, %v2316
        %v2381 = vmul.f32 %v1869, %v2317
        %v2382 = vmul.f32 %v1870, %v2318
        %v2383 = vmul.f32 %v1871, %v2319
        %v2384 = vmul.f32 %v1872, %v2320
        %v2385 = vmul.f32 %v1873, %v2321
        %v2386 = vmul.f32 %v1874, %v2322
        %v2387 = vmul.f32 %v1875, %v2323
        %v2388 = vmul.f32 %v1876, %v2324
        %v2389 = vmul.f32 %v1877, %v2325
        %v2390 = vmul.f32 %v1878, %v2326
        %v2391 = vmul.f32 %v1879, %v2327
        %v2392 = vmul.f32 %v1880, %v2328
        %v2393 = vmul.f32 %v1881, %v2329
        %v2394 = vmul.f32 %v1882, %v2330
        %v2395 = vmul.f32 %v1883, %v2331
        %v2396 = vmul.f32 %v1884, %v2332
        %v2397 = vmul.f32 %v1885, %v2333
        %v2398 = vmul.f32 %v1886, %v2334
        %v2399 = vmul.f32 %v1887, %v2335
        %v2400 = vmul.f32 %v1888, %v2336
        %v2401 = vmul.f32 %v1889, %v2337
        %v2402 = vmul.f32 %v1890, %v2338
        %v2403 = vmul.f32 %v1891, %v2339
        %v2404 = vmul.f32 %v1892, %v2340
        %v2405 = vmul.f32 %v1893, %v2341
        %v2406 = vmul.f32 %v1894, %v2342
        %v2407 = vmul.f32 %v1895, %v2343
        %v2408 = vmul.f32 %v1896, %v2344
        %v2409 = vmul.f32 %v1897, %v2345
        %v2410 = vmul.f32 %v1898, %v2346
        %v2411 = vmul.f32 %v1899, %v2347
        %v2412 = vmul.f32 %v1900, %v2348
        %v2413 = vmul.f32 %v1901, %v2349
        %v2414 = vmul.f32 %v1902, %v2350
        %v2415 = vmul.f32 %v1903, %v2351
        %v2416 = vmul.f32 %v1904, %v2352
        %v2417 = vmul.f32 %v1905, %v2353
        %v2418 = vmul.f32 %v1906, %v2354
        %v2419 = vmul.f32 %v1907, %v2355
        %v2420 = vmul.f32 %v1908, %v2356
        %v2421 = vmul.f32 %v1909, %v2357
        %v2422 = vmul.f32 %v1910, %v2358
        %v2423 = vmul.f32 %v1911, %v2359
        %v2424 = vmul.f32 %v1912, %v2360
        %v2425 = vmul.f32 %v1913, %v2361
        %v2426 = vmul.f32 %v1914, %v2362
        %v2427 = vmul.f32 %v1915, %v2363
        %v2428 = vmul.f32 %v1916, %v2364
        %v2429 = vmul.f32 %v1917, %v2365
        %v2430 = vmul.f32 %v1918, %v2366
        %v2431 = vmul.f32 %v1919, %v2367
        %v2432 = vmul.f32 %v1920, %v2368
        %v2433 = vmul.f32 %v1921, %v2369
        %v2434 = vmul.f32 %v1922, %v2370
        %v2435 = vmul.f32 %v1923, %v2371
        %v2436 = vmul.f32 %v1924, %v2372
        %v2437 = vmul.f32 %v1925, %v2373
        %v2438 = vmul.f32 %v1926, %v2374
        %s2439 = scalar_lea.vmem %s3, 64
        %v2440 = vld [vmem:[%s2439] sm:$0xf]
        %v2441 = vld [vmem:[%s2439 + $0x4] sm:$0xf]
        %v2442 = vld [vmem:[%s2439 + $0x8] sm:$0xf]
        %v2443 = vld [vmem:[%s2439 + $0xc] sm:$0xf]
        %v2444 = vld [vmem:[%s2439 + $0x10] sm:$0xf]
        %v2445 = vld [vmem:[%s2439 + $0x14] sm:$0xf]
        %v2446 = vld [vmem:[%s2439 + $0x18] sm:$0xf]
        %v2447 = vld [vmem:[%s2439 + $0x1c] sm:$0xf]
        %v2448 = vld [vmem:[%s2439 + $0x20] sm:$0xf]
        %v2449 = vld [vmem:[%s2439 + $0x24] sm:$0xf]
        %v2450 = vld [vmem:[%s2439 + $0x28] sm:$0xf]
        %v2451 = vld [vmem:[%s2439 + $0x2c] sm:$0xf]
        %v2452 = vld [vmem:[%s2439 + $0x30] sm:$0xf]
        %v2453 = vld [vmem:[%s2439 + $0x34] sm:$0xf]
        %v2454 = vld [vmem:[%s2439 + $0x38] sm:$0xf]
        %v2455 = vld [vmem:[%s2439 + $0x3c] sm:$0xf]
        %v2456 = vpack.c.bf16 %v2379, %v2375
        %v2457 = vpack.c.bf16 %v2380, %v2376
        %v2458 = vpack.c.bf16 %v2381, %v2377
        %v2459 = vpack.c.bf16 %v2382, %v2378
        %v2460 = vpack.c.bf16 %v2387, %v2383
        %v2461 = vpack.c.bf16 %v2388, %v2384
        %v2462 = vpack.c.bf16 %v2389, %v2385
        %v2463 = vpack.c.bf16 %v2390, %v2386
        %v2464 = vpack.c.bf16 %v2395, %v2391
        %v2465 = vpack.c.bf16 %v2396, %v2392
        %v2466 = vpack.c.bf16 %v2397, %v2393
        %v2467 = vpack.c.bf16 %v2398, %v2394
        %v2468 = vpack.c.bf16 %v2403, %v2399
        %v2469 = vpack.c.bf16 %v2404, %v2400
        %v2470 = vpack.c.bf16 %v2405, %v2401
        %v2471 = vpack.c.bf16 %v2406, %v2402
        %v2472 = vpack.c.bf16 %v2411, %v2407
        %v2473 = vpack.c.bf16 %v2412, %v2408
        %v2474 = vpack.c.bf16 %v2413, %v2409
        %v2475 = vpack.c.bf16 %v2414, %v2410
        %v2476 = vpack.c.bf16 %v2419, %v2415
        %v2477 = vpack.c.bf16 %v2420, %v2416
        %v2478 = vpack.c.bf16 %v2421, %v2417
        %v2479 = vpack.c.bf16 %v2422, %v2418
        %v2480 = vpack.c.bf16 %v2427, %v2423
        %v2481 = vpack.c.bf16 %v2428, %v2424
        %v2482 = vpack.c.bf16 %v2429, %v2425
        %v2483 = vpack.c.bf16 %v2430, %v2426
        %v2484 = vpack.c.bf16 %v2435, %v2431
        %v2485 = vpack.c.bf16 %v2436, %v2432
        %v2486 = vpack.c.bf16 %v2437, %v2433
        %v2487 = vpack.c.bf16 %v2438, %v2434
        %s2488 = scalar_lea.vmem %s4, 128
        %v2489 = vld [vmem:[%s2488] sm:$0xff]
        %v2490 = vld [vmem:[%s2488 + $0x8] sm:$0xff]
        %v2491 = vld [vmem:[%s2488 + $0x10] sm:$0xff]
        %v2492 = vld [vmem:[%s2488 + $0x18] sm:$0xff]
        %v2493 = vld [vmem:[%s2488 + $0x20] sm:$0xff]
        %v2494 = vld [vmem:[%s2488 + $0x28] sm:$0xff]
        %v2495 = vld [vmem:[%s2488 + $0x30] sm:$0xff]
        %v2496 = vld [vmem:[%s2488 + $0x38] sm:$0xff]
        %v2497 = vld [vmem:[%s2488 + $0x40] sm:$0xff]
        %v2498 = vld [vmem:[%s2488 + $0x48] sm:$0xff]
        %v2499 = vld [vmem:[%s2488 + $0x50] sm:$0xff]
        %v2500 = vld [vmem:[%s2488 + $0x58] sm:$0xff]
        %v2501 = vld [vmem:[%s2488 + $0x60] sm:$0xff]
        %v2502 = vld [vmem:[%s2488 + $0x68] sm:$0xff]
        %v2503 = vld [vmem:[%s2488 + $0x70] sm:$0xff]
        %v2504 = vld [vmem:[%s2488 + $0x78] sm:$0xff]
        %2506 = vset.pattern.permute.xlu0 0
        %2507 = vperm.xlu0 %2506, %v2489
        %v2508 = vpop.permute.xlu0 %2507
        %2511 = vset.pattern.permute.xlu0 0
        %2512 = vperm.xlu0 %2511, %v2490
        %v2513 = vpop.permute.xlu0 %2512
        %2516 = vset.pattern.permute.xlu0 0
        %2517 = vperm.xlu0 %2516, %v2491
        %v2518 = vpop.permute.xlu0 %2517
        %2521 = vset.pattern.permute.xlu0 0
        %2522 = vperm.xlu0 %2521, %v2492
        %v2523 = vpop.permute.xlu0 %2522
        %2526 = vset.pattern.permute.xlu0 0
        %2527 = vperm.xlu0 %2526, %v2493
        %v2528 = vpop.permute.xlu0 %2527
        %2531 = vset.pattern.permute.xlu0 0
        %2532 = vperm.xlu0 %2531, %v2494
        %v2533 = vpop.permute.xlu0 %2532
        %2536 = vset.pattern.permute.xlu0 0
        %2537 = vperm.xlu0 %2536, %v2495
        %v2538 = vpop.permute.xlu0 %2537
        %2541 = vset.pattern.permute.xlu0 0
        %2542 = vperm.xlu0 %2541, %v2496
        %v2543 = vpop.permute.xlu0 %2542
        %2546 = vset.pattern.permute.xlu0 0
        %2547 = vperm.xlu0 %2546, %v2497
        %v2548 = vpop.permute.xlu0 %2547
        %2551 = vset.pattern.permute.xlu0 0
        %2552 = vperm.xlu0 %2551, %v2498
        %v2553 = vpop.permute.xlu0 %2552
        %2556 = vset.pattern.permute.xlu0 0
        %2557 = vperm.xlu0 %2556, %v2499
        %v2558 = vpop.permute.xlu0 %2557
        %2561 = vset.pattern.permute.xlu0 0
        %2562 = vperm.xlu0 %2561, %v2500
        %v2563 = vpop.permute.xlu0 %2562
        %2566 = vset.pattern.permute.xlu0 0
        %2567 = vperm.xlu0 %2566, %v2501
        %v2568 = vpop.permute.xlu0 %2567
        %2571 = vset.pattern.permute.xlu0 0
        %2572 = vperm.xlu0 %2571, %v2502
        %v2573 = vpop.permute.xlu0 %2572
        %2576 = vset.pattern.permute.xlu0 0
        %2577 = vperm.xlu0 %2576, %v2503
        %v2578 = vpop.permute.xlu0 %2577
        %2581 = vset.pattern.permute.xlu0 0
        %2582 = vperm.xlu0 %2581, %v2504
        %v2583 = vpop.permute.xlu0 %2582
        %v2601 = vunpack.c.l.b16 %v2440
        %v2602 = vunpack.c.l.b16 %v2441
        %v2603 = vunpack.c.l.b16 %v2442
        %v2604 = vunpack.c.l.b16 %v2443
        %v2605 = vunpack.c.l.b16 %v2444
        %v2606 = vunpack.c.l.b16 %v2445
        %v2607 = vunpack.c.l.b16 %v2446
        %v2608 = vunpack.c.l.b16 %v2447
        %v2609 = vunpack.c.l.b16 %v2448
        %v2610 = vunpack.c.l.b16 %v2449
        %v2611 = vunpack.c.l.b16 %v2450
        %v2612 = vunpack.c.l.b16 %v2451
        %v2613 = vunpack.c.l.b16 %v2452
        %v2614 = vunpack.c.l.b16 %v2453
        %v2615 = vunpack.c.l.b16 %v2454
        %v2616 = vunpack.c.l.b16 %v2455
        %v2617 = vpack.c.b16 %v2602, %v2601
        %v2618 = vpack.c.b16 %v2604, %v2603
        %v2619 = vpack.c.b16 %v2606, %v2605
        %v2620 = vpack.c.b16 %v2608, %v2607
        %v2621 = vpack.c.b16 %v2610, %v2609
        %v2622 = vpack.c.b16 %v2612, %v2611
        %v2623 = vpack.c.b16 %v2614, %v2613
        %v2624 = vpack.c.b16 %v2616, %v2615
        %2633 = vmatprep.subr.bf16.mxu0 %v2457
        %2634 = vmatpush1.bf16.msra.mxu0 %v2456
        %2635 = vmatprep.subr.bf16.mxu0 %v2461
        %2636 = vmatpush1.bf16.msra.mxu0 %v2460
        %2637 = vmatprep.subr.bf16.mxu0 %v2465
        %2638 = vmatpush1.bf16.msra.mxu0 %v2464
        %2639 = vmatprep.subr.bf16.mxu0 %v2469
        %2640 = vmatpush1.bf16.msra.mxu0 %v2468
        %2641 = vmatprep.subr.bf16.mxu0 %v2473
        %2642 = vmatpush1.bf16.msra.mxu0 %v2472
        %2643 = vmatprep.subr.bf16.mxu0 %v2477
        %2644 = vmatpush1.bf16.msra.mxu0 %v2476
        %2645 = vmatprep.subr.bf16.mxu0 %v2481
        %2646 = vmatpush1.bf16.msra.mxu0 %v2480
        %2647 = vmatprep.subr.bf16.mxu0 %v2485
        %2648 = vmatpush1.bf16.msra.mxu0 %v2484
        %2649 = vmatprep.subr.bf16.mxu0 0
        %2650 = vmatpush1.bf16.msra.mxu0 0
        %2651 = vmatprep.subr.bf16.mxu0 0
        %2652 = vmatpush1.bf16.msra.mxu0 0
        %2653 = vmatprep.subr.bf16.mxu0 0
        %2654 = vmatpush1.bf16.msra.mxu0 0
        %2655 = vmatprep.subr.bf16.mxu0 0
        %2656 = vmatpush1.bf16.msra.mxu0 0
        %2657 = vmatprep.subr.bf16.mxu0 0
        %2658 = vmatpush1.bf16.msra.mxu0 0
        %2659 = vmatprep.subr.bf16.mxu0 0
        %2660 = vmatpush1.bf16.msra.mxu0 0
        %2661 = vmatprep.subr.bf16.mxu0 0
        %2662 = vmatpush1.bf16.msra.mxu0 0
        %2663 = vmatprep.subr.bf16.mxu0 0
        %2664 = vmatpush1.bf16.msra.mxu0 0
        %2665 = vmatprep.mubr.bf16.mxu0 0
        %2666 = vmatmul.mubr.bf16.gmra.mrb[0].mxu0 %v2617
        %v2667 = vpop.f32.mrb[0].mxu0
        %v2668 = vadd.f32 %v2508, %v2667
        %v2669 = vpop.f32.mrb[0].mxu0
        %v2670 = vadd.f32 %v2508, %v2669
        %v2671 = vpop.f32.mrb[0].mxu0
        %v2672 = vadd.f32 %v2513, %v2671
        %v2673 = vpop.f32.mrb[0].mxu0
        %v2674 = vadd.f32 %v2513, %v2673
        %2675 = vmatprep.mubr.bf16.mxu0 0
        %2676 = vmatmul.mubr.bf16.gmra.mrb[0].mxu0 %v2618
        %v2677 = vpop.f32.mrb[0].mxu0
        %v2678 = vadd.f32 %v2518, %v2677
        %v2679 = vpop.f32.mrb[0].mxu0
        %v2680 = vadd.f32 %v2518, %v2679
        %v2681 = vpop.f32.mrb[0].mxu0
        %v2682 = vadd.f32 %v2523, %v2681
        %v2683 = vpop.f32.mrb[0].mxu0
        %v2684 = vadd.f32 %v2523, %v2683
        %2685 = vmatprep.mubr.bf16.mxu0 0
        %2686 = vmatmul.mubr.bf16.gmra.mrb[0].mxu0 %v2619
        %v2687 = vpop.f32.mrb[0].mxu0
        %v2688 = vadd.f32 %v2528, %v2687
        %v2689 = vpop.f32.mrb[0].mxu0
        %v2690 = vadd.f32 %v2528, %v2689
        %v2691 = vpop.f32.mrb[0].mxu0
        %v2692 = vadd.f32 %v2533, %v2691
        %v2693 = vpop.f32.mrb[0].mxu0
        %v2694 = vadd.f32 %v2533, %v2693
        %2695 = vmatprep.mubr.bf16.mxu0 0
        %2696 = vmatmul.mubr.bf16.gmra.mrb[0].mxu0 %v2620
        %v2697 = vpop.f32.mrb[0].mxu0
        %v2698 = vadd.f32 %v2538, %v2697
        %v2699 = vpop.f32.mrb[0].mxu0
        %v2700 = vadd.f32 %v2538, %v2699
        %v2701 = vpop.f32.mrb[0].mxu0
        %v2702 = vadd.f32 %v2543, %v2701
        %v2703 = vpop.f32.mrb[0].mxu0
        %v2704 = vadd.f32 %v2543, %v2703
        %2705 = vmatprep.mubr.bf16.mxu0 0
        %2706 = vmatmul.mubr.bf16.gmra.mrb[0].mxu0 %v2621
        %v2707 = vpop.f32.mrb[0].mxu0
        %v2708 = vadd.f32 %v2548, %v2707
        %v2709 = vpop.f32.mrb[0].mxu0
        %v2710 = vadd.f32 %v2548, %v2709
        %v2711 = vpop.f32.mrb[0].mxu0
        %v2712 = vadd.f32 %v2553, %v2711
        %v2713 = vpop.f32.mrb[0].mxu0
        %v2714 = vadd.f32 %v2553, %v2713
        %2715 = vmatprep.mubr.bf16.mxu0 0
        %2716 = vmatmul.mubr.bf16.gmra.mrb[0].mxu0 %v2622
        %v2717 = vpop.f32.mrb[0].mxu0
        %v2718 = vadd.f32 %v2558, %v2717
        %v2719 = vpop.f32.mrb[0].mxu0
        %v2720 = vadd.f32 %v2558, %v2719
        %v2721 = vpop.f32.mrb[0].mxu0
        %v2722 = vadd.f32 %v2563, %v2721
        %v2723 = vpop.f32.mrb[0].mxu0
        %v2724 = vadd.f32 %v2563, %v2723
        %2725 = vmatprep.mubr.bf16.mxu0 0
        %2726 = vmatmul.mubr.bf16.gmra.mrb[0].mxu0 %v2623
        %v2727 = vpop.f32.mrb[0].mxu0
        %v2728 = vadd.f32 %v2568, %v2727
        %v2729 = vpop.f32.mrb[0].mxu0
        %v2730 = vadd.f32 %v2568, %v2729
        %v2731 = vpop.f32.mrb[0].mxu0
        %v2732 = vadd.f32 %v2573, %v2731
        %v2733 = vpop.f32.mrb[0].mxu0
        %v2734 = vadd.f32 %v2573, %v2733
        %2735 = vmatprep.mubr.bf16.mxu0 0
        %2736 = vmatmul.mubr.bf16.gmra.mrb[0].mxu0 %v2624
        %v2737 = vpop.f32.mrb[0].mxu0
        %v2738 = vadd.f32 %v2578, %v2737
        %v2739 = vpop.f32.mrb[0].mxu0
        %v2740 = vadd.f32 %v2578, %v2739
        %v2741 = vpop.f32.mrb[0].mxu0
        %v2742 = vadd.f32 %v2583, %v2741
        %v2743 = vpop.f32.mrb[0].mxu0
        %v2744 = vadd.f32 %v2583, %v2743
        %2745 = vdwg.mxu0
        %2746 = vmatprep.subr.bf16.mxu0 %v2459
        %2747 = vmatpush1.bf16.msra.mxu0 %v2458
        %2748 = vmatprep.subr.bf16.mxu0 %v2463
        %2749 = vmatpush1.bf16.msra.mxu0 %v2462
        %2750 = vmatprep.subr.bf16.mxu0 %v2467
        %2751 = vmatpush1.bf16.msra.mxu0 %v2466
        %2752 = vmatprep.subr.bf16.mxu0 %v2471
        %2753 = vmatpush1.bf16.msra.mxu0 %v2470
        %2754 = vmatprep.subr.bf16.mxu0 %v2475
        %2755 = vmatpush1.bf16.msra.mxu0 %v2474
        %2756 = vmatprep.subr.bf16.mxu0 %v2479
        %2757 = vmatpush1.bf16.msra.mxu0 %v2478
        %2758 = vmatprep.subr.bf16.mxu0 %v2483
        %2759 = vmatpush1.bf16.msra.mxu0 %v2482
        %2760 = vmatprep.subr.bf16.mxu0 %v2487
        %2761 = vmatpush1.bf16.msra.mxu0 %v2486
        %2762 = vmatprep.subr.bf16.mxu0 0
        %2763 = vmatpush1.bf16.msra.mxu0 0
        %2764 = vmatprep.subr.bf16.mxu0 0
        %2765 = vmatpush1.bf16.msra.mxu0 0
        %2766 = vmatprep.subr.bf16.mxu0 0
        %2767 = vmatpush1.bf16.msra.mxu0 0
        %2768 = vmatprep.subr.bf16.mxu0 0
        %2769 = vmatpush1.bf16.msra.mxu0 0
        %2770 = vmatprep.subr.bf16.mxu0 0
        %2771 = vmatpush1.bf16.msra.mxu0 0
        %2772 = vmatprep.subr.bf16.mxu0 0
        %2773 = vmatpush1.bf16.msra.mxu0 0
        %2774 = vmatprep.subr.bf16.mxu0 0
        %2775 = vmatpush1.bf16.msra.mxu0 0
        %2776 = vmatprep.subr.bf16.mxu0 0
        %2777 = vmatpush1.bf16.msra.mxu0 0
        %2778 = vmatprep.mubr.bf16.mxu0 0
        %2779 = vmatmul.mubr.bf16.gmra.mrb[0].mxu0 %v2617
        %v2780 = vpop.f32.mrb[0].mxu0
        %v2781 = vadd.f32 %v2508, %v2780
        %v2782 = vpop.f32.mrb[0].mxu0
        %v2783 = vadd.f32 %v2508, %v2782
        %v2784 = vpop.f32.mrb[0].mxu0
        %v2785 = vadd.f32 %v2513, %v2784
        %v2786 = vpop.f32.mrb[0].mxu0
        %v2787 = vadd.f32 %v2513, %v2786
        %2788 = vmatprep.mubr.bf16.mxu0 0
        %2789 = vmatmul.mubr.bf16.gmra.mrb[0].mxu0 %v2618
        %v2790 = vpop.f32.mrb[0].mxu0
        %v2791 = vadd.f32 %v2518, %v2790
        %v2792 = vpop.f32.mrb[0].mxu0
        %v2793 = vadd.f32 %v2518, %v2792
        %v2794 = vpop.f32.mrb[0].mxu0
        %v2795 = vadd.f32 %v2523, %v2794
        %v2796 = vpop.f32.mrb[0].mxu0
        %v2797 = vadd.f32 %v2523, %v2796
        %2798 = vmatprep.mubr.bf16.mxu0 0
        %2799 = vmatmul.mubr.bf16.gmra.mrb[0].mxu0 %v2619
        %v2800 = vpop.f32.mrb[0].mxu0
        %v2801 = vadd.f32 %v2528, %v2800
        %v2802 = vpop.f32.mrb[0].mxu0
        %v2803 = vadd.f32 %v2528, %v2802
        %v2804 = vpop.f32.mrb[0].mxu0
        %v2805 = vadd.f32 %v2533, %v2804
        %v2806 = vpop.f32.mrb[0].mxu0
        %v2807 = vadd.f32 %v2533, %v2806
        %2808 = vmatprep.mubr.bf16.mxu0 0
        %2809 = vmatmul.mubr.bf16.gmra.mrb[0].mxu0 %v2620
        %v2810 = vpop.f32.mrb[0].mxu0
        %v2811 = vadd.f32 %v2538, %v2810
        %v2812 = vpop.f32.mrb[0].mxu0
        %v2813 = vadd.f32 %v2538, %v2812
        %v2814 = vpop.f32.mrb[0].mxu0
        %v2815 = vadd.f32 %v2543, %v2814
        %v2816 = vpop.f32.mrb[0].mxu0
        %v2817 = vadd.f32 %v2543, %v2816
        %2818 = vmatprep.mubr.bf16.mxu0 0
        %2819 = vmatmul.mubr.bf16.gmra.mrb[0].mxu0 %v2621
        %v2820 = vpop.f32.mrb[0].mxu0
        %v2821 = vadd.f32 %v2548, %v2820
        %v2822 = vpop.f32.mrb[0].mxu0
        %v2823 = vadd.f32 %v2548, %v2822
        %v2824 = vpop.f32.mrb[0].mxu0
        %v2825 = vadd.f32 %v2553, %v2824
        %v2826 = vpop.f32.mrb[0].mxu0
        %v2827 = vadd.f32 %v2553, %v2826
        %2828 = vmatprep.mubr.bf16.mxu0 0
        %2829 = vmatmul.mubr.bf16.gmra.mrb[0].mxu0 %v2622
        %v2830 = vpop.f32.mrb[0].mxu0
        %v2831 = vadd.f32 %v2558, %v2830
        %v2832 = vpop.f32.mrb[0].mxu0
        %v2833 = vadd.f32 %v2558, %v2832
        %v2834 = vpop.f32.mrb[0].mxu0
        %v2835 = vadd.f32 %v2563, %v2834
        %v2836 = vpop.f32.mrb[0].mxu0
        %v2837 = vadd.f32 %v2563, %v2836
        %2838 = vmatprep.mubr.bf16.mxu0 0
        %2839 = vmatmul.mubr.bf16.gmra.mrb[0].mxu0 %v2623
        %v2840 = vpop.f32.mrb[0].mxu0
        %v2841 = vadd.f32 %v2568, %v2840
        %v2842 = vpop.f32.mrb[0].mxu0
        %v2843 = vadd.f32 %v2568, %v2842
        %v2844 = vpop.f32.mrb[0].mxu0
        %v2845 = vadd.f32 %v2573, %v2844
        %v2846 = vpop.f32.mrb[0].mxu0
        %v2847 = vadd.f32 %v2573, %v2846
        %2848 = vmatprep.mubr.bf16.mxu0 0
        %2849 = vmatmul.mubr.bf16.gmra.mrb[0].mxu0 %v2624
        %v2850 = vpop.f32.mrb[0].mxu0
        %v2851 = vadd.f32 %v2578, %v2850
        %v2852 = vpop.f32.mrb[0].mxu0
        %v2853 = vadd.f32 %v2578, %v2852
        %v2854 = vpop.f32.mrb[0].mxu0
        %v2855 = vadd.f32 %v2583, %v2854
        %v2856 = vpop.f32.mrb[0].mxu0
        %v2857 = vadd.f32 %v2583, %v2856
        %2858 = vdwg.mxu0
        %v2859 = vmul.f32 %v2668, 0.5
        %v2860 = vmul.f32 %v2670, 0.5
        %v2861 = vmul.f32 %v2781, 0.5
        %v2862 = vmul.f32 %v2783, 0.5
        %v2863 = vmul.f32 %v2672, 0.5
        %v2864 = vmul.f32 %v2674, 0.5
        %v2865 = vmul.f32 %v2785, 0.5
        %v2866 = vmul.f32 %v2787, 0.5
        %v2867 = vmul.f32 %v2678, 0.5
        %v2868 = vmul.f32 %v2680, 0.5
        %v2869 = vmul.f32 %v2791, 0.5
        %v2870 = vmul.f32 %v2793, 0.5
        %v2871 = vmul.f32 %v2682, 0.5
        %v2872 = vmul.f32 %v2684, 0.5
        %v2873 = vmul.f32 %v2795, 0.5
        %v2874 = vmul.f32 %v2797, 0.5
        %v2875 = vmul.f32 %v2688, 0.5
        %v2876 = vmul.f32 %v2690, 0.5
        %v2877 = vmul.f32 %v2801, 0.5
        %v2878 = vmul.f32 %v2803, 0.5
        %v2879 = vmul.f32 %v2692, 0.5
        %v2880 = vmul.f32 %v2694, 0.5
        %v2881 = vmul.f32 %v2805, 0.5
        %v2882 = vmul.f32 %v2807, 0.5
        %v2883 = vmul.f32 %v2698, 0.5
        %v2884 = vmul.f32 %v2700, 0.5
        %v2885 = vmul.f32 %v2811, 0.5
        %v2886 = vmul.f32 %v2813, 0.5
        %v2887 = vmul.f32 %v2702, 0.5
        %v2888 = vmul.f32 %v2704, 0.5
        %v2889 = vmul.f32 %v2815, 0.5
        %v2890 = vmul.f32 %v2817, 0.5
        %v2891 = vmul.f32 %v2708, 0.5
        %v2892 = vmul.f32 %v2710, 0.5
        %v2893 = vmul.f32 %v2821, 0.5
        %v2894 = vmul.f32 %v2823, 0.5
        %v2895 = vmul.f32 %v2712, 0.5
        %v2896 = vmul.f32 %v2714, 0.5
        %v2897 = vmul.f32 %v2825, 0.5
        %v2898 = vmul.f32 %v2827, 0.5
        %v2899 = vmul.f32 %v2718, 0.5
        %v2900 = vmul.f32 %v2720, 0.5
        %v2901 = vmul.f32 %v2831, 0.5
        %v2902 = vmul.f32 %v2833, 0.5
        %v2903 = vmul.f32 %v2722, 0.5
        %v2904 = vmul.f32 %v2724, 0.5
        %v2905 = vmul.f32 %v2835, 0.5
        %v2906 = vmul.f32 %v2837, 0.5
        %v2907 = vmul.f32 %v2728, 0.5
        %v2908 = vmul.f32 %v2730, 0.5
        %v2909 = vmul.f32 %v2841, 0.5
        %v2910 = vmul.f32 %v2843, 0.5
        %v2911 = vmul.f32 %v2732, 0.5
        %v2912 = vmul.f32 %v2734, 0.5
        %v2913 = vmul.f32 %v2845, 0.5
        %v2914 = vmul.f32 %v2847, 0.5
        %v2915 = vmul.f32 %v2738, 0.5
        %v2916 = vmul.f32 %v2740, 0.5
        %v2917 = vmul.f32 %v2851, 0.5
        %v2918 = vmul.f32 %v2853, 0.5
        %v2919 = vmul.f32 %v2742, 0.5
        %v2920 = vmul.f32 %v2744, 0.5
        %v2921 = vmul.f32 %v2855, 0.5
        %v2922 = vmul.f32 %v2857, 0.5
        %v2923 = vmul.f32 %v2668, %v2668
        %v2924 = vmul.f32 %v2670, %v2670
        %v2925 = vmul.f32 %v2781, %v2781
        %v2926 = vmul.f32 %v2783, %v2783
        %v2927 = vmul.f32 %v2672, %v2672
        %v2928 = vmul.f32 %v2674, %v2674
        %v2929 = vmul.f32 %v2785, %v2785
        %v2930 = vmul.f32 %v2787, %v2787
        %v2931 = vmul.f32 %v2678, %v2678
        %v2932 = vmul.f32 %v2680, %v2680
        %v2933 = vmul.f32 %v2791, %v2791
        %v2934 = vmul.f32 %v2793, %v2793
        %v2935 = vmul.f32 %v2682, %v2682
        %v2936 = vmul.f32 %v2684, %v2684
        %v2937 = vmul.f32 %v2795, %v2795
        %v2938 = vmul.f32 %v2797, %v2797
        %v2939 = vmul.f32 %v2688, %v2688
        %v2940 = vmul.f32 %v2690, %v2690
        %v2941 = vmul.f32 %v2801, %v2801
        %v2942 = vmul.f32 %v2803, %v2803
        %v2943 = vmul.f32 %v2692, %v2692
        %v2944 = vmul.f32 %v2694, %v2694
        %v2945 = vmul.f32 %v2805, %v2805
        %v2946 = vmul.f32 %v2807, %v2807
        %v2947 = vmul.f32 %v2698, %v2698
        %v2948 = vmul.f32 %v2700, %v2700
        %v2949 = vmul.f32 %v2811, %v2811
        %v2950 = vmul.f32 %v2813, %v2813
        %v2951 = vmul.f32 %v2702, %v2702
        %v2952 = vmul.f32 %v2704, %v2704
        %v2953 = vmul.f32 %v2815, %v2815
        %v2954 = vmul.f32 %v2817, %v2817
        %v2955 = vmul.f32 %v2708, %v2708
        %v2956 = vmul.f32 %v2710, %v2710
        %v2957 = vmul.f32 %v2821, %v2821
        %v2958 = vmul.f32 %v2823, %v2823
        %v2959 = vmul.f32 %v2712, %v2712
        %v2960 = vmul.f32 %v2714, %v2714
        %v2961 = vmul.f32 %v2825, %v2825
        %v2962 = vmul.f32 %v2827, %v2827
        %v2963 = vmul.f32 %v2718, %v2718
        %v2964 = vmul.f32 %v2720, %v2720
        %v2965 = vmul.f32 %v2831, %v2831
        %v2966 = vmul.f32 %v2833, %v2833
        %v2967 = vmul.f32 %v2722, %v2722
        %v2968 = vmul.f32 %v2724, %v2724
        %v2969 = vmul.f32 %v2835, %v2835
        %v2970 = vmul.f32 %v2837, %v2837
        %v2971 = vmul.f32 %v2728, %v2728
        %v2972 = vmul.f32 %v2730, %v2730
        %v2973 = vmul.f32 %v2841, %v2841
        %v2974 = vmul.f32 %v2843, %v2843
        %v2975 = vmul.f32 %v2732, %v2732
        %v2976 = vmul.f32 %v2734, %v2734
        %v2977 = vmul.f32 %v2845, %v2845
        %v2978 = vmul.f32 %v2847, %v2847
        %v2979 = vmul.f32 %v2738, %v2738
        %v2980 = vmul.f32 %v2740, %v2740
        %v2981 = vmul.f32 %v2851, %v2851
        %v2982 = vmul.f32 %v2853, %v2853
        %v2983 = vmul.f32 %v2742, %v2742
        %v2984 = vmul.f32 %v2744, %v2744
        %v2985 = vmul.f32 %v2855, %v2855
        %v2986 = vmul.f32 %v2857, %v2857
        %v2987 = vmul.f32 %v2923, %v2668
        %v2988 = vmul.f32 %v2924, %v2670
        %v2989 = vmul.f32 %v2925, %v2781
        %v2990 = vmul.f32 %v2926, %v2783
        %v2991 = vmul.f32 %v2927, %v2672
        %v2992 = vmul.f32 %v2928, %v2674
        %v2993 = vmul.f32 %v2929, %v2785
        %v2994 = vmul.f32 %v2930, %v2787
        %v2995 = vmul.f32 %v2931, %v2678
        %v2996 = vmul.f32 %v2932, %v2680
        %v2997 = vmul.f32 %v2933, %v2791
        %v2998 = vmul.f32 %v2934, %v2793
        %v2999 = vmul.f32 %v2935, %v2682
        %v3000 = vmul.f32 %v2936, %v2684
        %v3001 = vmul.f32 %v2937, %v2795
        %v3002 = vmul.f32 %v2938, %v2797
        %v3003 = vmul.f32 %v2939, %v2688
        %v3004 = vmul.f32 %v2940, %v2690
        %v3005 = vmul.f32 %v2941, %v2801
        %v3006 = vmul.f32 %v2942, %v2803
        %v3007 = vmul.f32 %v2943, %v2692
        %v3008 = vmul.f32 %v2944, %v2694
        %v3009 = vmul.f32 %v2945, %v2805
        %v3010 = vmul.f32 %v2946, %v2807
        %v3011 = vmul.f32 %v2947, %v2698
        %v3012 = vmul.f32 %v2948, %v2700
        %v3013 = vmul.f32 %v2949, %v2811
        %v3014 = vmul.f32 %v2950, %v2813
        %v3015 = vmul.f32 %v2951, %v2702
        %v3016 = vmul.f32 %v2952, %v2704
        %v3017 = vmul.f32 %v2953, %v2815
        %v3018 = vmul.f32 %v2954, %v2817
        %v3019 = vmul.f32 %v2955, %v2708
        %v3020 = vmul.f32 %v2956, %v2710
        %v3021 = vmul.f32 %v2957, %v2821
        %v3022 = vmul.f32 %v2958, %v2823
        %v3023 = vmul.f32 %v2959, %v2712
        %v3024 = vmul.f32 %v2960, %v2714
        %v3025 = vmul.f32 %v2961, %v2825
        %v3026 = vmul.f32 %v2962, %v2827
        %v3027 = vmul.f32 %v2963, %v2718
        %v3028 = vmul.f32 %v2964, %v2720
        %v3029 = vmul.f32 %v2965, %v2831
        %v3030 = vmul.f32 %v2966, %v2833
        %v3031 = vmul.f32 %v2967, %v2722
        %v3032 = vmul.f32 %v2968, %v2724
        %v3033 = vmul.f32 %v2969, %v2835
        %v3034 = vmul.f32 %v2970, %v2837
        %v3035 = vmul.f32 %v2971, %v2728
        %v3036 = vmul.f32 %v2972, %v2730
        %v3037 = vmul.f32 %v2973, %v2841
        %v3038 = vmul.f32 %v2974, %v2843
        %v3039 = vmul.f32 %v2975, %v2732
        %v3040 = vmul.f32 %v2976, %v2734
        %v3041 = vmul.f32 %v2977, %v2845
        %v3042 = vmul.f32 %v2978, %v2847
        %v3043 = vmul.f32 %v2979, %v2738
        %v3044 = vmul.f32 %v2980, %v2740
        %v3045 = vmul.f32 %v2981, %v2851
        %v3046 = vmul.f32 %v2982, %v2853
        %v3047 = vmul.f32 %v2983, %v2742
        %v3048 = vmul.f32 %v2984, %v2744
        %v3049 = vmul.f32 %v2985, %v2855
        %v3050 = vmul.f32 %v2986, %v2857
        %v3051 = vmul.f32 %v2987, 0.044715
        %v3052 = vmul.f32 %v2988, 0.044715
        %v3053 = vmul.f32 %v2989, 0.044715
        %v3054 = vmul.f32 %v2990, 0.044715
        %v3055 = vmul.f32 %v2991, 0.044715
        %v3056 = vmul.f32 %v2992, 0.044715
        %v3057 = vmul.f32 %v2993, 0.044715
        %v3058 = vmul.f32 %v2994, 0.044715
        %v3059 = vmul.f32 %v2995, 0.044715
        %v3060 = vmul.f32 %v2996, 0.044715
        %v3061 = vmul.f32 %v2997, 0.044715
        %v3062 = vmul.f32 %v2998, 0.044715
        %v3063 = vmul.f32 %v2999, 0.044715
        %v3064 = vmul.f32 %v3000, 0.044715
        %v3065 = vmul.f32 %v3001, 0.044715
        %v3066 = vmul.f32 %v3002, 0.044715
        %v3067 = vmul.f32 %v3003, 0.044715
        %v3068 = vmul.f32 %v3004, 0.044715
        %v3069 = vmul.f32 %v3005, 0.044715
        %v3070 = vmul.f32 %v3006, 0.044715
        %v3071 = vmul.f32 %v3007, 0.044715
        %v3072 = vmul.f32 %v3008, 0.044715
        %v3073 = vmul.f32 %v3009, 0.044715
        %v3074 = vmul.f32 %v3010, 0.044715
        %v3075 = vmul.f32 %v3011, 0.044715
        %v3076 = vmul.f32 %v3012, 0.044715
        %v3077 = vmul.f32 %v3013, 0.044715
        %v3078 = vmul.f32 %v3014, 0.044715
        %v3079 = vmul.f32 %v3015, 0.044715
        %v3080 = vmul.f32 %v3016, 0.044715
        %v3081 = vmul.f32 %v3017, 0.044715
        %v3082 = vmul.f32 %v3018, 0.044715
        %v3083 = vmul.f32 %v3019, 0.044715
        %v3084 = vmul.f32 %v3020, 0.044715
        %v3085 = vmul.f32 %v3021, 0.044715
        %v3086 = vmul.f32 %v3022, 0.044715
        %v3087 = vmul.f32 %v3023, 0.044715
        %v3088 = vmul.f32 %v3024, 0.044715
        %v3089 = vmul.f32 %v3025, 0.044715
        %v3090 = vmul.f32 %v3026, 0.044715
        %v3091 = vmul.f32 %v3027, 0.044715
        %v3092 = vmul.f32 %v3028, 0.044715
        %v3093 = vmul.f32 %v3029, 0.044715
        %v3094 = vmul.f32 %v3030, 0.044715
        %v3095 = vmul.f32 %v3031, 0.044715
        %v3096 = vmul.f32 %v3032, 0.044715
        %v3097 = vmul.f32 %v3033, 0.044715
        %v3098 = vmul.f32 %v3034, 0.044715
        %v3099 = vmul.f32 %v3035, 0.044715
        %v3100 = vmul.f32 %v3036, 0.044715
        %v3101 = vmul.f32 %v3037, 0.044715
        %v3102 = vmul.f32 %v3038, 0.044715
        %v3103 = vmul.f32 %v3039, 0.044715
        %v3104 = vmul.f32 %v3040, 0.044715
        %v3105 = vmul.f32 %v3041, 0.044715
        %v3106 = vmul.f32 %v3042, 0.044715
        %v3107 = vmul.f32 %v3043, 0.044715
        %v3108 = vmul.f32 %v3044, 0.044715
        %v3109 = vmul.f32 %v3045, 0.044715
        %v3110 = vmul.f32 %v3046, 0.044715
        %v3111 = vmul.f32 %v3047, 0.044715
        %v3112 = vmul.f32 %v3048, 0.044715
        %v3113 = vmul.f32 %v3049, 0.044715
        %v3114 = vmul.f32 %v3050, 0.044715
        %v3115 = vadd.f32 %v2668, %v3051
        %v3116 = vadd.f32 %v2670, %v3052
        %v3117 = vadd.f32 %v2781, %v3053
        %v3118 = vadd.f32 %v2783, %v3054
        %v3119 = vadd.f32 %v2672, %v3055
        %v3120 = vadd.f32 %v2674, %v3056
        %v3121 = vadd.f32 %v2785, %v3057
        %v3122 = vadd.f32 %v2787, %v3058
        %v3123 = vadd.f32 %v2678, %v3059
        %v3124 = vadd.f32 %v2680, %v3060
        %v3125 = vadd.f32 %v2791, %v3061
        %v3126 = vadd.f32 %v2793, %v3062
        %v3127 = vadd.f32 %v2682, %v3063
        %v3128 = vadd.f32 %v2684, %v3064
        %v3129 = vadd.f32 %v2795, %v3065
        %v3130 = vadd.f32 %v2797, %v3066
        %v3131 = vadd.f32 %v2688, %v3067
        %v3132 = vadd.f32 %v2690, %v3068
        %v3133 = vadd.f32 %v2801, %v3069
        %v3134 = vadd.f32 %v2803, %v3070
        %v3135 = vadd.f32 %v2692, %v3071
        %v3136 = vadd.f32 %v2694, %v3072
        %v3137 = vadd.f32 %v2805, %v3073
        %v3138 = vadd.f32 %v2807, %v3074
        %v3139 = vadd.f32 %v2698, %v3075
        %v3140 = vadd.f32 %v2700, %v3076
        %v3141 = vadd.f32 %v2811, %v3077
        %v3142 = vadd.f32 %v2813, %v3078
        %v3143 = vadd.f32 %v2702, %v3079
        %v3144 = vadd.f32 %v2704, %v3080
        %v3145 = vadd.f32 %v2815, %v3081
        %v3146 = vadd.f32 %v2817, %v3082
        %v3147 = vadd.f32 %v2708, %v3083
        %v3148 = vadd.f32 %v2710, %v3084
        %v3149 = vadd.f32 %v2821, %v3085
        %v3150 = vadd.f32 %v2823, %v3086
        %v3151 = vadd.f32 %v2712, %v3087
        %v3152 = vadd.f32 %v2714, %v3088
        %v3153 = vadd.f32 %v2825, %v3089
        %v3154 = vadd.f32 %v2827, %v3090
        %v3155 = vadd.f32 %v2718, %v3091
        %v3156 = vadd.f32 %v2720, %v3092
        %v3157 = vadd.f32 %v2831, %v3093
        %v3158 = vadd.f32 %v2833, %v3094
        %v3159 = vadd.f32 %v2722, %v3095
        %v3160 = vadd.f32 %v2724, %v3096
        %v3161 = vadd.f32 %v2835, %v3097
        %v3162 = vadd.f32 %v2837, %v3098
        %v3163 = vadd.f32 %v2728, %v3099
        %v3164 = vadd.f32 %v2730, %v3100
        %v3165 = vadd.f32 %v2841, %v3101
        %v3166 = vadd.f32 %v2843, %v3102
        %v3167 = vadd.f32 %v2732, %v3103
        %v3168 = vadd.f32 %v2734, %v3104
        %v3169 = vadd.f32 %v2845, %v3105
        %v3170 = vadd.f32 %v2847, %v3106
        %v3171 = vadd.f32 %v2738, %v3107
        %v3172 = vadd.f32 %v2740, %v3108
        %v3173 = vadd.f32 %v2851, %v3109
        %v3174 = vadd.f32 %v2853, %v3110
        %v3175 = vadd.f32 %v2742, %v3111
        %v3176 = vadd.f32 %v2744, %v3112
        %v3177 = vadd.f32 %v2855, %v3113
        %v3178 = vadd.f32 %v2857, %v3114
        %v3179 = vmul.f32 %v3115, 0.7978846
        %v3180 = vmul.f32 %v3116, 0.7978846
        %v3181 = vmul.f32 %v3117, 0.7978846
        %v3182 = vmul.f32 %v3118, 0.7978846
        %v3183 = vmul.f32 %v3119, 0.7978846
        %v3184 = vmul.f32 %v3120, 0.7978846
        %v3185 = vmul.f32 %v3121, 0.7978846
        %v3186 = vmul.f32 %v3122, 0.7978846
        %v3187 = vmul.f32 %v3123, 0.7978846
        %v3188 = vmul.f32 %v3124, 0.7978846
        %v3189 = vmul.f32 %v3125, 0.7978846
        %v3190 = vmul.f32 %v3126, 0.7978846
        %v3191 = vmul.f32 %v3127, 0.7978846
        %v3192 = vmul.f32 %v3128, 0.7978846
        %v3193 = vmul.f32 %v3129, 0.7978846
        %v3194 = vmul.f32 %v3130, 0.7978846
        %v3195 = vmul.f32 %v3131, 0.7978846
        %v3196 = vmul.f32 %v3132, 0.7978846
        %v3197 = vmul.f32 %v3133, 0.7978846
        %v3198 = vmul.f32 %v3134, 0.7978846
        %v3199 = vmul.f32 %v3135, 0.7978846
        %v3200 = vmul.f32 %v3136, 0.7978846
        %v3201 = vmul.f32 %v3137, 0.7978846
        %v3202 = vmul.f32 %v3138, 0.7978846
        %v3203 = vmul.f32 %v3139, 0.7978846
        %v3204 = vmul.f32 %v3140, 0.7978846
        %v3205 = vmul.f32 %v3141, 0.7978846
        %v3206 = vmul.f32 %v3142, 0.7978846
        %v3207 = vmul.f32 %v3143, 0.7978846
        %v3208 = vmul.f32 %v3144, 0.7978846
        %v3209 = vmul.f32 %v3145, 0.7978846
        %v3210 = vmul.f32 %v3146, 0.7978846
        %v3211 = vmul.f32 %v3147, 0.7978846
        %v3212 = vmul.f32 %v3148, 0.7978846
        %v3213 = vmul.f32 %v3149, 0.7978846
        %v3214 = vmul.f32 %v3150, 0.7978846
        %v3215 = vmul.f32 %v3151, 0.7978846
        %v3216 = vmul.f32 %v3152, 0.7978846
        %v3217 = vmul.f32 %v3153, 0.7978846
        %v3218 = vmul.f32 %v3154, 0.7978846
        %v3219 = vmul.f32 %v3155, 0.7978846
        %v3220 = vmul.f32 %v3156, 0.7978846
        %v3221 = vmul.f32 %v3157, 0.7978846
        %v3222 = vmul.f32 %v3158, 0.7978846
        %v3223 = vmul.f32 %v3159, 0.7978846
        %v3224 = vmul.f32 %v3160, 0.7978846
        %v3225 = vmul.f32 %v3161, 0.7978846
        %v3226 = vmul.f32 %v3162, 0.7978846
        %v3227 = vmul.f32 %v3163, 0.7978846
        %v3228 = vmul.f32 %v3164, 0.7978846
        %v3229 = vmul.f32 %v3165, 0.7978846
        %v3230 = vmul.f32 %v3166, 0.7978846
        %v3231 = vmul.f32 %v3167, 0.7978846
        %v3232 = vmul.f32 %v3168, 0.7978846
        %v3233 = vmul.f32 %v3169, 0.7978846
        %v3234 = vmul.f32 %v3170, 0.7978846
        %v3235 = vmul.f32 %v3171, 0.7978846
        %v3236 = vmul.f32 %v3172, 0.7978846
        %v3237 = vmul.f32 %v3173, 0.7978846
        %v3238 = vmul.f32 %v3174, 0.7978846
        %v3239 = vmul.f32 %v3175, 0.7978846
        %v3240 = vmul.f32 %v3176, 0.7978846
        %v3241 = vmul.f32 %v3177, 0.7978846
        %v3242 = vmul.f32 %v3178, 0.7978846
        %v3243 = vtanh.pop %v3179
        %v3244 = vtanh.pop %v3180
        %v3245 = vtanh.pop %v3181
        %v3246 = vtanh.pop %v3182
        %v3247 = vtanh.pop %v3183
        %v3248 = vtanh.pop %v3184
        %v3249 = vtanh.pop %v3185
        %v3250 = vtanh.pop %v3186
        %v3251 = vtanh.pop %v3187
        %v3252 = vtanh.pop %v3188
        %v3253 = vtanh.pop %v3189
        %v3254 = vtanh.pop %v3190
        %v3255 = vtanh.pop %v3191
        %v3256 = vtanh.pop %v3192
        %v3257 = vtanh.pop %v3193
        %v3258 = vtanh.pop %v3194
        %v3259 = vtanh.pop %v3195
        %v3260 = vtanh.pop %v3196
        %v3261 = vtanh.pop %v3197
        %v3262 = vtanh.pop %v3198
        %v3263 = vtanh.pop %v3199
        %v3264 = vtanh.pop %v3200
        %v3265 = vtanh.pop %v3201
        %v3266 = vtanh.pop %v3202
        %v3267 = vtanh.pop %v3203
        %v3268 = vtanh.pop %v3204
        %v3269 = vtanh.pop %v3205
        %v3270 = vtanh.pop %v3206
        %v3271 = vtanh.pop %v3207
        %v3272 = vtanh.pop %v3208
        %v3273 = vtanh.pop %v3209
        %v3274 = vtanh.pop %v3210
        %v3275 = vtanh.pop %v3211
        %v3276 = vtanh.pop %v3212
        %v3277 = vtanh.pop %v3213
        %v3278 = vtanh.pop %v3214
        %v3279 = vtanh.pop %v3215
        %v3280 = vtanh.pop %v3216
        %v3281 = vtanh.pop %v3217
        %v3282 = vtanh.pop %v3218
        %v3283 = vtanh.pop %v3219
        %v3284 = vtanh.pop %v3220
        %v3285 = vtanh.pop %v3221
        %v3286 = vtanh.pop %v3222
        %v3287 = vtanh.pop %v3223
        %v3288 = vtanh.pop %v3224
        %v3289 = vtanh.pop %v3225
        %v3290 = vtanh.pop %v3226
        %v3291 = vtanh.pop %v3227
        %v3292 = vtanh.pop %v3228
        %v3293 = vtanh.pop %v3229
        %v3294 = vtanh.pop %v3230
        %v3295 = vtanh.pop %v3231
        %v3296 = vtanh.pop %v3232
        %v3297 = vtanh.pop %v3233
        %v3298 = vtanh.pop %v3234
        %v3299 = vtanh.pop %v3235
        %v3300 = vtanh.pop %v3236
        %v3301 = vtanh.pop %v3237
        %v3302 = vtanh.pop %v3238
        %v3303 = vtanh.pop %v3239
        %v3304 = vtanh.pop %v3240
        %v3305 = vtanh.pop %v3241
        %v3306 = vtanh.pop %v3242
        %v3307 = vadd.f32 %v3243, 1.0
        %v3308 = vadd.f32 %v3244, 1.0
        %v3309 = vadd.f32 %v3245, 1.0
        %v3310 = vadd.f32 %v3246, 1.0
        %v3311 = vadd.f32 %v3247, 1.0
        %v3312 = vadd.f32 %v3248, 1.0
        %v3313 = vadd.f32 %v3249, 1.0
        %v3314 = vadd.f32 %v3250, 1.0
        %v3315 = vadd.f32 %v3251, 1.0
        %v3316 = vadd.f32 %v3252, 1.0
        %v3317 = vadd.f32 %v3253, 1.0
        %v3318 = vadd.f32 %v3254, 1.0
        %v3319 = vadd.f32 %v3255, 1.0
        %v3320 = vadd.f32 %v3256, 1.0
        %v3321 = vadd.f32 %v3257, 1.0
        %v3322 = vadd.f32 %v3258, 1.0
        %v3323 = vadd.f32 %v3259, 1.0
        %v3324 = vadd.f32 %v3260, 1.0
        %v3325 = vadd.f32 %v3261, 1.0
        %v3326 = vadd.f32 %v3262, 1.0
        %v3327 = vadd.f32 %v3263, 1.0
        %v3328 = vadd.f32 %v3264, 1.0
        %v3329 = vadd.f32 %v3265, 1.0
        %v3330 = vadd.f32 %v3266, 1.0
        %v3331 = vadd.f32 %v3267, 1.0
        %v3332 = vadd.f32 %v3268, 1.0
        %v3333 = vadd.f32 %v3269, 1.0
        %v3334 = vadd.f32 %v3270, 1.0
        %v3335 = vadd.f32 %v3271, 1.0
        %v3336 = vadd.f32 %v3272, 1.0
        %v3337 = vadd.f32 %v3273, 1.0
        %v3338 = vadd.f32 %v3274, 1.0
        %v3339 = vadd.f32 %v3275, 1.0
        %v3340 = vadd.f32 %v3276, 1.0
        %v3341 = vadd.f32 %v3277, 1.0
        %v3342 = vadd.f32 %v3278, 1.0
        %v3343 = vadd.f32 %v3279, 1.0
        %v3344 = vadd.f32 %v3280, 1.0
        %v3345 = vadd.f32 %v3281, 1.0
        %v3346 = vadd.f32 %v3282, 1.0
        %v3347 = vadd.f32 %v3283, 1.0
        %v3348 = vadd.f32 %v3284, 1.0
        %v3349 = vadd.f32 %v3285, 1.0
        %v3350 = vadd.f32 %v3286, 1.0
        %v3351 = vadd.f32 %v3287, 1.0
        %v3352 = vadd.f32 %v3288, 1.0
        %v3353 = vadd.f32 %v3289, 1.0
        %v3354 = vadd.f32 %v3290, 1.0
        %v3355 = vadd.f32 %v3291, 1.0
        %v3356 = vadd.f32 %v3292, 1.0
        %v3357 = vadd.f32 %v3293, 1.0
        %v3358 = vadd.f32 %v3294, 1.0
        %v3359 = vadd.f32 %v3295, 1.0
        %v3360 = vadd.f32 %v3296, 1.0
        %v3361 = vadd.f32 %v3297, 1.0
        %v3362 = vadd.f32 %v3298, 1.0
        %v3363 = vadd.f32 %v3299, 1.0
        %v3364 = vadd.f32 %v3300, 1.0
        %v3365 = vadd.f32 %v3301, 1.0
        %v3366 = vadd.f32 %v3302, 1.0
        %v3367 = vadd.f32 %v3303, 1.0
        %v3368 = vadd.f32 %v3304, 1.0
        %v3369 = vadd.f32 %v3305, 1.0
        %v3370 = vadd.f32 %v3306, 1.0
        %v3371 = vmul.f32 %v2859, %v3307
        %v3372 = vmul.f32 %v2860, %v3308
        %v3373 = vmul.f32 %v2861, %v3309
        %v3374 = vmul.f32 %v2862, %v3310
        %v3375 = vmul.f32 %v2863, %v3311
        %v3376 = vmul.f32 %v2864, %v3312
        %v3377 = vmul.f32 %v2865, %v3313
        %v3378 = vmul.f32 %v2866, %v3314
        %v3379 = vmul.f32 %v2867, %v3315
        %v3380 = vmul.f32 %v2868, %v3316
        %v3381 = vmul.f32 %v2869, %v3317
        %v3382 = vmul.f32 %v2870, %v3318
        %v3383 = vmul.f32 %v2871, %v3319
        %v3384 = vmul.f32 %v2872, %v3320
        %v3385 = vmul.f32 %v2873, %v3321
        %v3386 = vmul.f32 %v2874, %v3322
        %v3387 = vmul.f32 %v2875, %v3323
        %v3388 = vmul.f32 %v2876, %v3324
        %v3389 = vmul.f32 %v2877, %v3325
        %v3390 = vmul.f32 %v2878, %v3326
        %v3391 = vmul.f32 %v2879, %v3327
        %v3392 = vmul.f32 %v2880, %v3328
        %v3393 = vmul.f32 %v2881, %v3329
        %v3394 = vmul.f32 %v2882, %v3330
        %v3395 = vmul.f32 %v2883, %v3331
        %v3396 = vmul.f32 %v2884, %v3332
        %v3397 = vmul.f32 %v2885, %v3333
        %v3398 = vmul.f32 %v2886, %v3334
        %v3399 = vmul.f32 %v2887, %v3335
        %v3400 = vmul.f32 %v2888, %v3336
        %v3401 = vmul.f32 %v2889, %v3337
        %v3402 = vmul.f32 %v2890, %v3338
        %v3403 = vmul.f32 %v2891, %v3339
        %v3404 = vmul.f32 %v2892, %v3340
        %v3405 = vmul.f32 %v2893, %v3341
        %v3406 = vmul.f32 %v2894, %v3342
        %v3407 = vmul.f32 %v2895, %v3343
        %v3408 = vmul.f32 %v2896, %v3344
        %v3409 = vmul.f32 %v2897, %v3345
        %v3410 = vmul.f32 %v2898, %v3346
        %v3411 = vmul.f32 %v2899, %v3347
        %v3412 = vmul.f32 %v2900, %v3348
        %v3413 = vmul.f32 %v2901, %v3349
        %v3414 = vmul.f32 %v2902, %v3350
        %v3415 = vmul.f32 %v2903, %v3351
        %v3416 = vmul.f32 %v2904, %v3352
        %v3417 = vmul.f32 %v2905, %v3353
        %v3418 = vmul.f32 %v2906, %v3354
        %v3419 = vmul.f32 %v2907, %v3355
        %v3420 = vmul.f32 %v2908, %v3356
        %v3421 = vmul.f32 %v2909, %v3357
        %v3422 = vmul.f32 %v2910, %v3358
        %v3423 = vmul.f32 %v2911, %v3359
        %v3424 = vmul.f32 %v2912, %v3360
        %v3425 = vmul.f32 %v2913, %v3361
        %v3426 = vmul.f32 %v2914, %v3362
        %v3427 = vmul.f32 %v2915, %v3363
        %v3428 = vmul.f32 %v2916, %v3364
        %v3429 = vmul.f32 %v2917, %v3365
        %v3430 = vmul.f32 %v2918, %v3366
        %v3431 = vmul.f32 %v2919, %v3367
        %v3432 = vmul.f32 %v2920, %v3368
        %v3433 = vmul.f32 %v2921, %v3369
        %v3434 = vmul.f32 %v2922, %v3370
        %s3435 = scalar_lea.vmem %s3, 128
        %v3436 = vld [vmem:[%s3435] sm:$0xf]
        %v3437 = vld [vmem:[%s3435 + $0x4] sm:$0xf]
        %v3438 = vld [vmem:[%s3435 + $0x8] sm:$0xf]
        %v3439 = vld [vmem:[%s3435 + $0xc] sm:$0xf]
        %v3440 = vld [vmem:[%s3435 + $0x10] sm:$0xf]
        %v3441 = vld [vmem:[%s3435 + $0x14] sm:$0xf]
        %v3442 = vld [vmem:[%s3435 + $0x18] sm:$0xf]
        %v3443 = vld [vmem:[%s3435 + $0x1c] sm:$0xf]
        %v3444 = vld [vmem:[%s3435 + $0x20] sm:$0xf]
        %v3445 = vld [vmem:[%s3435 + $0x24] sm:$0xf]
        %v3446 = vld [vmem:[%s3435 + $0x28] sm:$0xf]
        %v3447 = vld [vmem:[%s3435 + $0x2c] sm:$0xf]
        %v3448 = vld [vmem:[%s3435 + $0x30] sm:$0xf]
        %v3449 = vld [vmem:[%s3435 + $0x34] sm:$0xf]
        %v3450 = vld [vmem:[%s3435 + $0x38] sm:$0xf]
        %v3451 = vld [vmem:[%s3435 + $0x3c] sm:$0xf]
        %v3452 = vpack.c.bf16 %v3375, %v3371
        %v3453 = vpack.c.bf16 %v3376, %v3372
        %v3454 = vpack.c.bf16 %v3377, %v3373
        %v3455 = vpack.c.bf16 %v3378, %v3374
        %v3456 = vpack.c.bf16 %v3383, %v3379
        %v3457 = vpack.c.bf16 %v3384, %v3380
        %v3458 = vpack.c.bf16 %v3385, %v3381
        %v3459 = vpack.c.bf16 %v3386, %v3382
        %v3460 = vpack.c.bf16 %v3391, %v3387
        %v3461 = vpack.c.bf16 %v3392, %v3388
        %v3462 = vpack.c.bf16 %v3393, %v3389
        %v3463 = vpack.c.bf16 %v3394, %v3390
        %v3464 = vpack.c.bf16 %v3399, %v3395
        %v3465 = vpack.c.bf16 %v3400, %v3396
        %v3466 = vpack.c.bf16 %v3401, %v3397
        %v3467 = vpack.c.bf16 %v3402, %v3398
        %v3468 = vpack.c.bf16 %v3407, %v3403
        %v3469 = vpack.c.bf16 %v3408, %v3404
        %v3470 = vpack.c.bf16 %v3409, %v3405
        %v3471 = vpack.c.bf16 %v3410, %v3406
        %v3472 = vpack.c.bf16 %v3415, %v3411
        %v3473 = vpack.c.bf16 %v3416, %v3412
        %v3474 = vpack.c.bf16 %v3417, %v3413
        %v3475 = vpack.c.bf16 %v3418, %v3414
        %v3476 = vpack.c.bf16 %v3423, %v3419
        %v3477 = vpack.c.bf16 %v3424, %v3420
        %v3478 = vpack.c.bf16 %v3425, %v3421
        %v3479 = vpack.c.bf16 %v3426, %v3422
        %v3480 = vpack.c.bf16 %v3431, %v3427
        %v3481 = vpack.c.bf16 %v3432, %v3428
        %v3482 = vpack.c.bf16 %v3433, %v3429
        %v3483 = vpack.c.bf16 %v3434, %v3430
        %s3484 = scalar_lea.vmem %s4, 256
        %v3485 = vld [vmem:[%s3484] sm:$0xff]
        %v3486 = vld [vmem:[%s3484 + $0x8] sm:$0xff]
        %v3487 = vld [vmem:[%s3484 + $0x10] sm:$0xff]
        %v3488 = vld [vmem:[%s3484 + $0x18] sm:$0xff]
        %v3489 = vld [vmem:[%s3484 + $0x20] sm:$0xff]
        %v3490 = vld [vmem:[%s3484 + $0x28] sm:$0xff]
        %v3491 = vld [vmem:[%s3484 + $0x30] sm:$0xff]
        %v3492 = vld [vmem:[%s3484 + $0x38] sm:$0xff]
        %v3493 = vld [vmem:[%s3484 + $0x40] sm:$0xff]
        %v3494 = vld [vmem:[%s3484 + $0x48] sm:$0xff]
        %v3495 = vld [vmem:[%s3484 + $0x50] sm:$0xff]
        %v3496 = vld [vmem:[%s3484 + $0x58] sm:$0xff]
        %v3497 = vld [vmem:[%s3484 + $0x60] sm:$0xff]
        %v3498 = vld [vmem:[%s3484 + $0x68] sm:$0xff]
        %v3499 = vld [vmem:[%s3484 + $0x70] sm:$0xff]
        %v3500 = vld [vmem:[%s3484 + $0x78] sm:$0xff]
        %3502 = vset.pattern.permute.xlu0 0
        %3503 = vperm.xlu0 %3502, %v3485
        %v3504 = vpop.permute.xlu0 %3503
        %3507 = vset.pattern.permute.xlu0 0
        %3508 = vperm.xlu0 %3507, %v3486
        %v3509 = vpop.permute.xlu0 %3508
        %3512 = vset.pattern.permute.xlu0 0
        %3513 = vperm.xlu0 %3512, %v3487
        %v3514 = vpop.permute.xlu0 %3513
        %3517 = vset.pattern.permute.xlu0 0
        %3518 = vperm.xlu0 %3517, %v3488
        %v3519 = vpop.permute.xlu0 %3518
        %3522 = vset.pattern.permute.xlu0 0
        %3523 = vperm.xlu0 %3522, %v3489
        %v3524 = vpop.permute.xlu0 %3523
        %3527 = vset.pattern.permute.xlu0 0
        %3528 = vperm.xlu0 %3527, %v3490
        %v3529 = vpop.permute.xlu0 %3528
        %3532 = vset.pattern.permute.xlu0 0
        %3533 = vperm.xlu0 %3532, %v3491
        %v3534 = vpop.permute.xlu0 %3533
        %3537 = vset.pattern.permute.xlu0 0
        %3538 = vperm.xlu0 %3537, %v3492
        %v3539 = vpop.permute.xlu0 %3538
        %3542 = vset.pattern.permute.xlu0 0
        %3543 = vperm.xlu0 %3542, %v3493
        %v3544 = vpop.permute.xlu0 %3543
        %3547 = vset.pattern.permute.xlu0 0
        %3548 = vperm.xlu0 %3547, %v3494
        %v3549 = vpop.permute.xlu0 %3548
        %3552 = vset.pattern.permute.xlu0 0
        %3553 = vperm.xlu0 %3552, %v3495
        %v3554 = vpop.permute.xlu0 %3553
        %3557 = vset.pattern.permute.xlu0 0
        %3558 = vperm.xlu0 %3557, %v3496
        %v3559 = vpop.permute.xlu0 %3558
        %3562 = vset.pattern.permute.xlu0 0
        %3563 = vperm.xlu0 %3562, %v3497
        %v3564 = vpop.permute.xlu0 %3563
        %3567 = vset.pattern.permute.xlu0 0
        %3568 = vperm.xlu0 %3567, %v3498
        %v3569 = vpop.permute.xlu0 %3568
        %3572 = vset.pattern.permute.xlu0 0
        %3573 = vperm.xlu0 %3572, %v3499
        %v3574 = vpop.permute.xlu0 %3573
        %3577 = vset.pattern.permute.xlu0 0
        %3578 = vperm.xlu0 %3577, %v3500
        %v3579 = vpop.permute.xlu0 %3578
        %v3597 = vunpack.c.l.b16 %v3436
        %v3598 = vunpack.c.l.b16 %v3437
        %v3599 = vunpack.c.l.b16 %v3438
        %v3600 = vunpack.c.l.b16 %v3439
        %v3601 = vunpack.c.l.b16 %v3440
        %v3602 = vunpack.c.l.b16 %v3441
        %v3603 = vunpack.c.l.b16 %v3442
        %v3604 = vunpack.c.l.b16 %v3443
        %v3605 = vunpack.c.l.b16 %v3444
        %v3606 = vunpack.c.l.b16 %v3445
        %v3607 = vunpack.c.l.b16 %v3446
        %v3608 = vunpack.c.l.b16 %v3447
        %v3609 = vunpack.c.l.b16 %v3448
        %v3610 = vunpack.c.l.b16 %v3449
        %v3611 = vunpack.c.l.b16 %v3450
        %v3612 = vunpack.c.l.b16 %v3451
        %v3613 = vpack.c.b16 %v3598, %v3597
        %v3614 = vpack.c.b16 %v3600, %v3599
        %v3615 = vpack.c.b16 %v3602, %v3601
        %v3616 = vpack.c.b16 %v3604, %v3603
        %v3617 = vpack.c.b16 %v3606, %v3605
        %v3618 = vpack.c.b16 %v3608, %v3607
        %v3619 = vpack.c.b16 %v3610, %v3609
        %v3620 = vpack.c.b16 %v3612, %v3611
        %3629 = vmatprep.subr.bf16.mxu0 %v3453
        %3630 = vmatpush1.bf16.msra.mxu0 %v3452
        %3631 = vmatprep.subr.bf16.mxu0 %v3457
        %3632 = vmatpush1.bf16.msra.mxu0 %v3456
        %3633 = vmatprep.subr.bf16.mxu0 %v3461
        %3634 = vmatpush1.bf16.msra.mxu0 %v3460
        %3635 = vmatprep.subr.bf16.mxu0 %v3465
        %3636 = vmatpush1.bf16.msra.mxu0 %v3464
        %3637 = vmatprep.subr.bf16.mxu0 %v3469
        %3638 = vmatpush1.bf16.msra.mxu0 %v3468
        %3639 = vmatprep.subr.bf16.mxu0 %v3473
        %3640 = vmatpush1.bf16.msra.mxu0 %v3472
        %3641 = vmatprep.subr.bf16.mxu0 %v3477
        %3642 = vmatpush1.bf16.msra.mxu0 %v3476
        %3643 = vmatprep.subr.bf16.mxu0 %v3481
        %3644 = vmatpush1.bf16.msra.mxu0 %v3480
        %3645 = vmatprep.subr.bf16.mxu0 0
        %3646 = vmatpush1.bf16.msra.mxu0 0
        %3647 = vmatprep.subr.bf16.mxu0 0
        %3648 = vmatpush1.bf16.msra.mxu0 0
        %3649 = vmatprep.subr.bf16.mxu0 0
        %3650 = vmatpush1.bf16.msra.mxu0 0
        %3651 = vmatprep.subr.bf16.mxu0 0
        %3652 = vmatpush1.bf16.msra.mxu0 0
        %3653 = vmatprep.subr.bf16.mxu0 0
        %3654 = vmatpush1.bf16.msra.mxu0 0
        %3655 = vmatprep.subr.bf16.mxu0 0
        %3656 = vmatpush1.bf16.msra.mxu0 0
        %3657 = vmatprep.subr.bf16.mxu0 0
        %3658 = vmatpush1.bf16.msra.mxu0 0
        %3659 = vmatprep.subr.bf16.mxu0 0
        %3660 = vmatpush1.bf16.msra.mxu0 0
        %3661 = vmatprep.mubr.bf16.mxu0 0
        %3662 = vmatmul.mubr.bf16.gmra.mrb[0].mxu0 %v3613
        %v3663 = vpop.f32.mrb[0].mxu0
        %v3664 = vadd.f32 %v3504, %v3663
        %v3665 = vpop.f32.mrb[0].mxu0
        %v3666 = vadd.f32 %v3504, %v3665
        %v3667 = vpop.f32.mrb[0].mxu0
        %v3668 = vadd.f32 %v3509, %v3667
        %v3669 = vpop.f32.mrb[0].mxu0
        %v3670 = vadd.f32 %v3509, %v3669
        %3671 = vmatprep.mubr.bf16.mxu0 0
        %3672 = vmatmul.mubr.bf16.gmra.mrb[0].mxu0 %v3614
        %v3673 = vpop.f32.mrb[0].mxu0
        %v3674 = vadd.f32 %v3514, %v3673
        %v3675 = vpop.f32.mrb[0].mxu0
        %v3676 = vadd.f32 %v3514, %v3675
        %v3677 = vpop.f32.mrb[0].mxu0
        %v3678 = vadd.f32 %v3519, %v3677
        %v3679 = vpop.f32.mrb[0].mxu0
        %v3680 = vadd.f32 %v3519, %v3679
        %3681 = vmatprep.mubr.bf16.mxu0 0
        %3682 = vmatmul.mubr.bf16.gmra.mrb[0].mxu0 %v3615
        %v3683 = vpop.f32.mrb[0].mxu0
        %v3684 = vadd.f32 %v3524, %v3683
        %v3685 = vpop.f32.mrb[0].mxu0
        %v3686 = vadd.f32 %v3524, %v3685
        %v3687 = vpop.f32.mrb[0].mxu0
        %v3688 = vadd.f32 %v3529, %v3687
        %v3689 = vpop.f32.mrb[0].mxu0
        %v3690 = vadd.f32 %v3529, %v3689
        %3691 = vmatprep.mubr.bf16.mxu0 0
        %3692 = vmatmul.mubr.bf16.gmra.mrb[0].mxu0 %v3616
        %v3693 = vpop.f32.mrb[0].mxu0
        %v3694 = vadd.f32 %v3534, %v3693
        %v3695 = vpop.f32.mrb[0].mxu0
        %v3696 = vadd.f32 %v3534, %v3695
        %v3697 = vpop.f32.mrb[0].mxu0
        %v3698 = vadd.f32 %v3539, %v3697
        %v3699 = vpop.f32.mrb[0].mxu0
        %v3700 = vadd.f32 %v3539, %v3699
        %3701 = vmatprep.mubr.bf16.mxu0 0
        %3702 = vmatmul.mubr.bf16.gmra.mrb[0].mxu0 %v3617
        %v3703 = vpop.f32.mrb[0].mxu0
        %v3704 = vadd.f32 %v3544, %v3703
        %v3705 = vpop.f32.mrb[0].mxu0
        %v3706 = vadd.f32 %v3544, %v3705
        %v3707 = vpop.f32.mrb[0].mxu0
        %v3708 = vadd.f32 %v3549, %v3707
        %v3709 = vpop.f32.mrb[0].mxu0
        %v3710 = vadd.f32 %v3549, %v3709
        %3711 = vmatprep.mubr.bf16.mxu0 0
        %3712 = vmatmul.mubr.bf16.gmra.mrb[0].mxu0 %v3618
        %v3713 = vpop.f32.mrb[0].mxu0
        %v3714 = vadd.f32 %v3554, %v3713
        %v3715 = vpop.f32.mrb[0].mxu0
        %v3716 = vadd.f32 %v3554, %v3715
        %v3717 = vpop.f32.mrb[0].mxu0
        %v3718 = vadd.f32 %v3559, %v3717
        %v3719 = vpop.f32.mrb[0].mxu0
        %v3720 = vadd.f32 %v3559, %v3719
        %3721 = vmatprep.mubr.bf16.mxu0 0
        %3722 = vmatmul.mubr.bf16.gmra.mrb[0].mxu0 %v3619
        %v3723 = vpop.f32.mrb[0].mxu0
        %v3724 = vadd.f32 %v3564, %v3723
        %v3725 = vpop.f32.mrb[0].mxu0
        %v3726 = vadd.f32 %v3564, %v3725
        %v3727 = vpop.f32.mrb[0].mxu0
        %v3728 = vadd.f32 %v3569, %v3727
        %v3729 = vpop.f32.mrb[0].mxu0
        %v3730 = vadd.f32 %v3569, %v3729
        %3731 = vmatprep.mubr.bf16.mxu0 0
        %3732 = vmatmul.mubr.bf16.gmra.mrb[0].mxu0 %v3620
        %v3733 = vpop.f32.mrb[0].mxu0
        %v3734 = vadd.f32 %v3574, %v3733
        %v3735 = vpop.f32.mrb[0].mxu0
        %v3736 = vadd.f32 %v3574, %v3735
        %v3737 = vpop.f32.mrb[0].mxu0
        %v3738 = vadd.f32 %v3579, %v3737
        %v3739 = vpop.f32.mrb[0].mxu0
        %v3740 = vadd.f32 %v3579, %v3739
        %3741 = vdwg.mxu0
        %3742 = vmatprep.subr.bf16.mxu0 %v3455
        %3743 = vmatpush1.bf16.msra.mxu0 %v3454
        %3744 = vmatprep.subr.bf16.mxu0 %v3459
        %3745 = vmatpush1.bf16.msra.mxu0 %v3458
        %3746 = vmatprep.subr.bf16.mxu0 %v3463
        %3747 = vmatpush1.bf16.msra.mxu0 %v3462
        %3748 = vmatprep.subr.bf16.mxu0 %v3467
        %3749 = vmatpush1.bf16.msra.mxu0 %v3466
        %3750 = vmatprep.subr.bf16.mxu0 %v3471
        %3751 = vmatpush1.bf16.msra.mxu0 %v3470
        %3752 = vmatprep.subr.bf16.mxu0 %v3475
        %3753 = vmatpush1.bf16.msra.mxu0 %v3474
        %3754 = vmatprep.subr.bf16.mxu0 %v3479
        %3755 = vmatpush1.bf16.msra.mxu0 %v3478
        %3756 = vmatprep.subr.bf16.mxu0 %v3483
        %3757 = vmatpush1.bf16.msra.mxu0 %v3482
        %3758 = vmatprep.subr.bf16.mxu0 0
        %3759 = vmatpush1.bf16.msra.mxu0 0
        %3760 = vmatprep.subr.bf16.mxu0 0
        %3761 = vmatpush1.bf16.msra.mxu0 0
        %3762 = vmatprep.subr.bf16.mxu0 0
        %3763 = vmatpush1.bf16.msra.mxu0 0
        %3764 = vmatprep.subr.bf16.mxu0 0
        %3765 = vmatpush1.bf16.msra.mxu0 0
        %3766 = vmatprep.subr.bf16.mxu0 0
        %3767 = vmatpush1.bf16.msra.mxu0 0
        %3768 = vmatprep.subr.bf16.mxu0 0
        %3769 = vmatpush1.bf16.msra.mxu0 0
        %3770 = vmatprep.subr.bf16.mxu0 0
        %3771 = vmatpush1.bf16.msra.mxu0 0
        %3772 = vmatprep.subr.bf16.mxu0 0
        %3773 = vmatpush1.bf16.msra.mxu0 0
        %3774 = vmatprep.mubr.bf16.mxu0 0
        %3775 = vmatmul.mubr.bf16.gmra.mrb[0].mxu0 %v3613
        %v3776 = vpop.f32.mrb[0].mxu0
        %v3777 = vadd.f32 %v3504, %v3776
        %v3778 = vpop.f32.mrb[0].mxu0
        %v3779 = vadd.f32 %v3504, %v3778
        %v3780 = vpop.f32.mrb[0].mxu0
        %v3781 = vadd.f32 %v3509, %v3780
        %v3782 = vpop.f32.mrb[0].mxu0
        %v3783 = vadd.f32 %v3509, %v3782
        %3784 = vmatprep.mubr.bf16.mxu0 0
        %3785 = vmatmul.mubr.bf16.gmra.mrb[0].mxu0 %v3614
        %v3786 = vpop.f32.mrb[0].mxu0
        %v3787 = vadd.f32 %v3514, %v3786
        %v3788 = vpop.f32.mrb[0].mxu0
        %v3789 = vadd.f32 %v3514, %v3788
        %v3790 = vpop.f32.mrb[0].mxu0
        %v3791 = vadd.f32 %v3519, %v3790
        %v3792 = vpop.f32.mrb[0].mxu0
        %v3793 = vadd.f32 %v3519, %v3792
        %3794 = vmatprep.mubr.bf16.mxu0 0
        %3795 = vmatmul.mubr.bf16.gmra.mrb[0].mxu0 %v3615
        %v3796 = vpop.f32.mrb[0].mxu0
        %v3797 = vadd.f32 %v3524, %v3796
        %v3798 = vpop.f32.mrb[0].mxu0
        %v3799 = vadd.f32 %v3524, %v3798
        %v3800 = vpop.f32.mrb[0].mxu0
        %v3801 = vadd.f32 %v3529, %v3800
        %v3802 = vpop.f32.mrb[0].mxu0
        %v3803 = vadd.f32 %v3529, %v3802
        %3804 = vmatprep.mubr.bf16.mxu0 0
        %3805 = vmatmul.mubr.bf16.gmra.mrb[0].mxu0 %v3616
        %v3806 = vpop.f32.mrb[0].mxu0
        %v3807 = vadd.f32 %v3534, %v3806
        %v3808 = vpop.f32.mrb[0].mxu0
        %v3809 = vadd.f32 %v3534, %v3808
        %v3810 = vpop.f32.mrb[0].mxu0
        %v3811 = vadd.f32 %v3539, %v3810
        %v3812 = vpop.f32.mrb[0].mxu0
        %v3813 = vadd.f32 %v3539, %v3812
        %3814 = vmatprep.mubr.bf16.mxu0 0
        %3815 = vmatmul.mubr.bf16.gmra.mrb[0].mxu0 %v3617
        %v3816 = vpop.f32.mrb[0].mxu0
        %v3817 = vadd.f32 %v3544, %v3816
        %v3818 = vpop.f32.mrb[0].mxu0
        %v3819 = vadd.f32 %v3544, %v3818
        %v3820 = vpop.f32.mrb[0].mxu0
        %v3821 = vadd.f32 %v3549, %v3820
        %v3822 = vpop.f32.mrb[0].mxu0
        %v3823 = vadd.f32 %v3549, %v3822
        %3824 = vmatprep.mubr.bf16.mxu0 0
        %3825 = vmatmul.mubr.bf16.gmra.mrb[0].mxu0 %v3618
        %v3826 = vpop.f32.mrb[0].mxu0
        %v3827 = vadd.f32 %v3554, %v3826
        %v3828 = vpop.f32.mrb[0].mxu0
        %v3829 = vadd.f32 %v3554, %v3828
        %v3830 = vpop.f32.mrb[0].mxu0
        %v3831 = vadd.f32 %v3559, %v3830
        %v3832 = vpop.f32.mrb[0].mxu0
        %v3833 = vadd.f32 %v3559, %v3832
        %3834 = vmatprep.mubr.bf16.mxu0 0
        %3835 = vmatmul.mubr.bf16.gmra.mrb[0].mxu0 %v3619
        %v3836 = vpop.f32.mrb[0].mxu0
        %v3837 = vadd.f32 %v3564, %v3836
        %v3838 = vpop.f32.mrb[0].mxu0
        %v3839 = vadd.f32 %v3564, %v3838
        %v3840 = vpop.f32.mrb[0].mxu0
        %v3841 = vadd.f32 %v3569, %v3840
        %v3842 = vpop.f32.mrb[0].mxu0
        %v3843 = vadd.f32 %v3569, %v3842
        %3844 = vmatprep.mubr.bf16.mxu0 0
        %3845 = vmatmul.mubr.bf16.gmra.mrb[0].mxu0 %v3620
        %v3846 = vpop.f32.mrb[0].mxu0
        %v3847 = vadd.f32 %v3574, %v3846
        %v3848 = vpop.f32.mrb[0].mxu0
        %v3849 = vadd.f32 %v3574, %v3848
        %v3850 = vpop.f32.mrb[0].mxu0
        %v3851 = vadd.f32 %v3579, %v3850
        %v3852 = vpop.f32.mrb[0].mxu0
        %v3853 = vadd.f32 %v3579, %v3852
        %3854 = vdwg.mxu0
        %v3855 = vmul.f32 %v3664, 0.5
        %v3856 = vmul.f32 %v3666, 0.5
        %v3857 = vmul.f32 %v3777, 0.5
        %v3858 = vmul.f32 %v3779, 0.5
        %v3859 = vmul.f32 %v3668, 0.5
        %v3860 = vmul.f32 %v3670, 0.5
        %v3861 = vmul.f32 %v3781, 0.5
        %v3862 = vmul.f32 %v3783, 0.5
        %v3863 = vmul.f32 %v3674, 0.5
        %v3864 = vmul.f32 %v3676, 0.5
        %v3865 = vmul.f32 %v3787, 0.5
        %v3866 = vmul.f32 %v3789, 0.5
        %v3867 = vmul.f32 %v3678, 0.5
        %v3868 = vmul.f32 %v3680, 0.5
        %v3869 = vmul.f32 %v3791, 0.5
        %v3870 = vmul.f32 %v3793, 0.5
        %v3871 = vmul.f32 %v3684, 0.5
        %v3872 = vmul.f32 %v3686, 0.5
        %v3873 = vmul.f32 %v3797, 0.5
        %v3874 = vmul.f32 %v3799, 0.5
        %v3875 = vmul.f32 %v3688, 0.5
        %v3876 = vmul.f32 %v3690, 0.5
        %v3877 = vmul.f32 %v3801, 0.5
        %v3878 = vmul.f32 %v3803, 0.5
        %v3879 = vmul.f32 %v3694, 0.5
        %v3880 = vmul.f32 %v3696, 0.5
        %v3881 = vmul.f32 %v3807, 0.5
        %v3882 = vmul.f32 %v3809, 0.5
        %v3883 = vmul.f32 %v3698, 0.5
        %v3884 = vmul.f32 %v3700, 0.5
        %v3885 = vmul.f32 %v3811, 0.5
        %v3886 = vmul.f32 %v3813, 0.5
        %v3887 = vmul.f32 %v3704, 0.5
        %v3888 = vmul.f32 %v3706, 0.5
        %v3889 = vmul.f32 %v3817, 0.5
        %v3890 = vmul.f32 %v3819, 0.5
        %v3891 = vmul.f32 %v3708, 0.5
        %v3892 = vmul.f32 %v3710, 0.5
        %v3893 = vmul.f32 %v3821, 0.5
        %v3894 = vmul.f32 %v3823, 0.5
        %v3895 = vmul.f32 %v3714, 0.5
        %v3896 = vmul.f32 %v3716, 0.5
        %v3897 = vmul.f32 %v3827, 0.5
        %v3898 = vmul.f32 %v3829, 0.5
        %v3899 = vmul.f32 %v3718, 0.5
        %v3900 = vmul.f32 %v3720, 0.5
        %v3901 = vmul.f32 %v3831, 0.5
        %v3902 = vmul.f32 %v3833, 0.5
        %v3903 = vmul.f32 %v3724, 0.5
        %v3904 = vmul.f32 %v3726, 0.5
        %v3905 = vmul.f32 %v3837, 0.5
        %v3906 = vmul.f32 %v3839, 0.5
        %v3907 = vmul.f32 %v3728, 0.5
        %v3908 = vmul.f32 %v3730, 0.5
        %v3909 = vmul.f32 %v3841, 0.5
        %v3910 = vmul.f32 %v3843, 0.5
        %v3911 = vmul.f32 %v3734, 0.5
        %v3912 = vmul.f32 %v3736, 0.5
        %v3913 = vmul.f32 %v3847, 0.5
        %v3914 = vmul.f32 %v3849, 0.5
        %v3915 = vmul.f32 %v3738, 0.5
        %v3916 = vmul.f32 %v3740, 0.5
        %v3917 = vmul.f32 %v3851, 0.5
        %v3918 = vmul.f32 %v3853, 0.5
        %v3919 = vmul.f32 %v3664, %v3664
        %v3920 = vmul.f32 %v3666, %v3666
        %v3921 = vmul.f32 %v3777, %v3777
        %v3922 = vmul.f32 %v3779, %v3779
        %v3923 = vmul.f32 %v3668, %v3668
        %v3924 = vmul.f32 %v3670, %v3670
        %v3925 = vmul.f32 %v3781, %v3781
        %v3926 = vmul.f32 %v3783, %v3783
        %v3927 = vmul.f32 %v3674, %v3674
        %v3928 = vmul.f32 %v3676, %v3676
        %v3929 = vmul.f32 %v3787, %v3787
        %v3930 = vmul.f32 %v3789, %v3789
        %v3931 = vmul.f32 %v3678, %v3678
        %v3932 = vmul.f32 %v3680, %v3680
        %v3933 = vmul.f32 %v3791, %v3791
        %v3934 = vmul.f32 %v3793, %v3793
        %v3935 = vmul.f32 %v3684, %v3684
        %v3936 = vmul.f32 %v3686, %v3686
        %v3937 = vmul.f32 %v3797, %v3797
        %v3938 = vmul.f32 %v3799, %v3799
        %v3939 = vmul.f32 %v3688, %v3688
        %v3940 = vmul.f32 %v3690, %v3690
        %v3941 = vmul.f32 %v3801, %v3801
        %v3942 = vmul.f32 %v3803, %v3803
        %v3943 = vmul.f32 %v3694, %v3694
        %v3944 = vmul.f32 %v3696, %v3696
        %v3945 = vmul.f32 %v3807, %v3807
        %v3946 = vmul.f32 %v3809, %v3809
        %v3947 = vmul.f32 %v3698, %v3698
        %v3948 = vmul.f32 %v3700, %v3700
        %v3949 = vmul.f32 %v3811, %v3811
        %v3950 = vmul.f32 %v3813, %v3813
        %v3951 = vmul.f32 %v3704, %v3704
        %v3952 = vmul.f32 %v3706, %v3706
        %v3953 = vmul.f32 %v3817, %v3817
        %v3954 = vmul.f32 %v3819, %v3819
        %v3955 = vmul.f32 %v3708, %v3708
        %v3956 = vmul.f32 %v3710, %v3710
        %v3957 = vmul.f32 %v3821, %v3821
        %v3958 = vmul.f32 %v3823, %v3823
        %v3959 = vmul.f32 %v3714, %v3714
        %v3960 = vmul.f32 %v3716, %v3716
        %v3961 = vmul.f32 %v3827, %v3827
        %v3962 = vmul.f32 %v3829, %v3829
        %v3963 = vmul.f32 %v3718, %v3718
        %v3964 = vmul.f32 %v3720, %v3720
        %v3965 = vmul.f32 %v3831, %v3831
        %v3966 = vmul.f32 %v3833, %v3833
        %v3967 = vmul.f32 %v3724, %v3724
        %v3968 = vmul.f32 %v3726, %v3726
        %v3969 = vmul.f32 %v3837, %v3837
        %v3970 = vmul.f32 %v3839, %v3839
        %v3971 = vmul.f32 %v3728, %v3728
        %v3972 = vmul.f32 %v3730, %v3730
        %v3973 = vmul.f32 %v3841, %v3841
        %v3974 = vmul.f32 %v3843, %v3843
        %v3975 = vmul.f32 %v3734, %v3734
        %v3976 = vmul.f32 %v3736, %v3736
        %v3977 = vmul.f32 %v3847, %v3847
        %v3978 = vmul.f32 %v3849, %v3849
        %v3979 = vmul.f32 %v3738, %v3738
        %v3980 = vmul.f32 %v3740, %v3740
        %v3981 = vmul.f32 %v3851, %v3851
        %v3982 = vmul.f32 %v3853, %v3853
        %v3983 = vmul.f32 %v3919, %v3664
        %v3984 = vmul.f32 %v3920, %v3666
        %v3985 = vmul.f32 %v3921, %v3777
        %v3986 = vmul.f32 %v3922, %v3779
        %v3987 = vmul.f32 %v3923, %v3668
        %v3988 = vmul.f32 %v3924, %v3670
        %v3989 = vmul.f32 %v3925, %v3781
        %v3990 = vmul.f32 %v3926, %v3783
        %v3991 = vmul.f32 %v3927, %v3674
        %v3992 = vmul.f32 %v3928, %v3676
        %v3993 = vmul.f32 %v3929, %v3787
        %v3994 = vmul.f32 %v3930, %v3789
        %v3995 = vmul.f32 %v3931, %v3678
        %v3996 = vmul.f32 %v3932, %v3680
        %v3997 = vmul.f32 %v3933, %v3791
        %v3998 = vmul.f32 %v3934, %v3793
        %v3999 = vmul.f32 %v3935, %v3684
        %v4000 = vmul.f32 %v3936, %v3686
        %v4001 = vmul.f32 %v3937, %v3797
        %v4002 = vmul.f32 %v3938, %v3799
        %v4003 = vmul.f32 %v3939, %v3688
        %v4004 = vmul.f32 %v3940, %v3690
        %v4005 = vmul.f32 %v3941, %v3801
        %v4006 = vmul.f32 %v3942, %v3803
        %v4007 = vmul.f32 %v3943, %v3694
        %v4008 = vmul.f32 %v3944, %v3696
        %v4009 = vmul.f32 %v3945, %v3807
        %v4010 = vmul.f32 %v3946, %v3809
        %v4011 = vmul.f32 %v3947, %v3698
        %v4012 = vmul.f32 %v3948, %v3700
        %v4013 = vmul.f32 %v3949, %v3811
        %v4014 = vmul.f32 %v3950, %v3813
        %v4015 = vmul.f32 %v3951, %v3704
        %v4016 = vmul.f32 %v3952, %v3706
        %v4017 = vmul.f32 %v3953, %v3817
        %v4018 = vmul.f32 %v3954, %v3819
        %v4019 = vmul.f32 %v3955, %v3708
        %v4020 = vmul.f32 %v3956, %v3710
        %v4021 = vmul.f32 %v3957, %v3821
        %v4022 = vmul.f32 %v3958, %v3823
        %v4023 = vmul.f32 %v3959, %v3714
        %v4024 = vmul.f32 %v3960, %v3716
        %v4025 = vmul.f32 %v3961, %v3827
        %v4026 = vmul.f32 %v3962, %v3829
        %v4027 = vmul.f32 %v3963, %v3718
        %v4028 = vmul.f32 %v3964, %v3720
        %v4029 = vmul.f32 %v3965, %v3831
        %v4030 = vmul.f32 %v3966, %v3833
        %v4031 = vmul.f32 %v3967, %v3724
        %v4032 = vmul.f32 %v3968, %v3726
        %v4033 = vmul.f32 %v3969, %v3837
        %v4034 = vmul.f32 %v3970, %v3839
        %v4035 = vmul.f32 %v3971, %v3728
        %v4036 = vmul.f32 %v3972, %v3730
        %v4037 = vmul.f32 %v3973, %v3841
        %v4038 = vmul.f32 %v3974, %v3843
        %v4039 = vmul.f32 %v3975, %v3734
        %v4040 = vmul.f32 %v3976, %v3736
        %v4041 = vmul.f32 %v3977, %v3847
        %v4042 = vmul.f32 %v3978, %v3849
        %v4043 = vmul.f32 %v3979, %v3738
        %v4044 = vmul.f32 %v3980, %v3740
        %v4045 = vmul.f32 %v3981, %v3851
        %v4046 = vmul.f32 %v3982, %v3853
        %v4047 = vmul.f32 %v3983, 0.044715
        %v4048 = vmul.f32 %v3984, 0.044715
        %v4049 = vmul.f32 %v3985, 0.044715
        %v4050 = vmul.f32 %v3986, 0.044715
        %v4051 = vmul.f32 %v3987, 0.044715
        %v4052 = vmul.f32 %v3988, 0.044715
        %v4053 = vmul.f32 %v3989, 0.044715
        %v4054 = vmul.f32 %v3990, 0.044715
        %v4055 = vmul.f32 %v3991, 0.044715
        %v4056 = vmul.f32 %v3992, 0.044715
        %v4057 = vmul.f32 %v3993, 0.044715
        %v4058 = vmul.f32 %v3994, 0.044715
        %v4059 = vmul.f32 %v3995, 0.044715
        %v4060 = vmul.f32 %v3996, 0.044715
        %v4061 = vmul.f32 %v3997, 0.044715
        %v4062 = vmul.f32 %v3998, 0.044715
        %v4063 = vmul.f32 %v3999, 0.044715
        %v4064 = vmul.f32 %v4000, 0.044715
        %v4065 = vmul.f32 %v4001, 0.044715
        %v4066 = vmul.f32 %v4002, 0.044715
        %v4067 = vmul.f32 %v4003, 0.044715
        %v4068 = vmul.f32 %v4004, 0.044715
        %v4069 = vmul.f32 %v4005, 0.044715
        %v4070 = vmul.f32 %v4006, 0.044715
        %v4071 = vmul.f32 %v4007, 0.044715
        %v4072 = vmul.f32 %v4008, 0.044715
        %v4073 = vmul.f32 %v4009, 0.044715
        %v4074 = vmul.f32 %v4010, 0.044715
        %v4075 = vmul.f32 %v4011, 0.044715
        %v4076 = vmul.f32 %v4012, 0.044715
        %v4077 = vmul.f32 %v4013, 0.044715
        %v4078 = vmul.f32 %v4014, 0.044715
        %v4079 = vmul.f32 %v4015, 0.044715
        %v4080 = vmul.f32 %v4016, 0.044715
        %v4081 = vmul.f32 %v4017, 0.044715
        %v4082 = vmul.f32 %v4018, 0.044715
        %v4083 = vmul.f32 %v4019, 0.044715
        %v4084 = vmul.f32 %v4020, 0.044715
        %v4085 = vmul.f32 %v4021, 0.044715
        %v4086 = vmul.f32 %v4022, 0.044715
        %v4087 = vmul.f32 %v4023, 0.044715
        %v4088 = vmul.f32 %v4024, 0.044715
        %v4089 = vmul.f32 %v4025, 0.044715
        %v4090 = vmul.f32 %v4026, 0.044715
        %v4091 = vmul.f32 %v4027, 0.044715
        %v4092 = vmul.f32 %v4028, 0.044715
        %v4093 = vmul.f32 %v4029, 0.044715
        %v4094 = vmul.f32 %v4030, 0.044715
        %v4095 = vmul.f32 %v4031, 0.044715
        %v4096 = vmul.f32 %v4032, 0.044715
        %v4097 = vmul.f32 %v4033, 0.044715
        %v4098 = vmul.f32 %v4034, 0.044715
        %v4099 = vmul.f32 %v4035, 0.044715
        %v4100 = vmul.f32 %v4036, 0.044715
        %v4101 = vmul.f32 %v4037, 0.044715
        %v4102 = vmul.f32 %v4038, 0.044715
        %v4103 = vmul.f32 %v4039, 0.044715
        %v4104 = vmul.f32 %v4040, 0.044715
        %v4105 = vmul.f32 %v4041, 0.044715
        %v4106 = vmul.f32 %v4042, 0.044715
        %v4107 = vmul.f32 %v4043, 0.044715
        %v4108 = vmul.f32 %v4044, 0.044715
        %v4109 = vmul.f32 %v4045, 0.044715
        %v4110 = vmul.f32 %v4046, 0.044715
        %v4111 = vadd.f32 %v3664, %v4047
        %v4112 = vadd.f32 %v3666, %v4048
        %v4113 = vadd.f32 %v3777, %v4049
        %v4114 = vadd.f32 %v3779, %v4050
        %v4115 = vadd.f32 %v3668, %v4051
        %v4116 = vadd.f32 %v3670, %v4052
        %v4117 = vadd.f32 %v3781, %v4053
        %v4118 = vadd.f32 %v3783, %v4054
        %v4119 = vadd.f32 %v3674, %v4055
        %v4120 = vadd.f32 %v3676, %v4056
        %v4121 = vadd.f32 %v3787, %v4057
        %v4122 = vadd.f32 %v3789, %v4058
        %v4123 = vadd.f32 %v3678, %v4059
        %v4124 = vadd.f32 %v3680, %v4060
        %v4125 = vadd.f32 %v3791, %v4061
        %v4126 = vadd.f32 %v3793, %v4062
        %v4127 = vadd.f32 %v3684, %v4063
        %v4128 = vadd.f32 %v3686, %v4064
        %v4129 = vadd.f32 %v3797, %v4065
        %v4130 = vadd.f32 %v3799, %v4066
        %v4131 = vadd.f32 %v3688, %v4067
        %v4132 = vadd.f32 %v3690, %v4068
        %v4133 = vadd.f32 %v3801, %v4069
        %v4134 = vadd.f32 %v3803, %v4070
        %v4135 = vadd.f32 %v3694, %v4071
        %v4136 = vadd.f32 %v3696, %v4072
        %v4137 = vadd.f32 %v3807, %v4073
        %v4138 = vadd.f32 %v3809, %v4074
        %v4139 = vadd.f32 %v3698, %v4075
        %v4140 = vadd.f32 %v3700, %v4076
        %v4141 = vadd.f32 %v3811, %v4077
        %v4142 = vadd.f32 %v3813, %v4078
        %v4143 = vadd.f32 %v3704, %v4079
        %v4144 = vadd.f32 %v3706, %v4080
        %v4145 = vadd.f32 %v3817, %v4081
        %v4146 = vadd.f32 %v3819, %v4082
        %v4147 = vadd.f32 %v3708, %v4083
        %v4148 = vadd.f32 %v3710, %v4084
        %v4149 = vadd.f32 %v3821, %v4085
        %v4150 = vadd.f32 %v3823, %v4086
        %v4151 = vadd.f32 %v3714, %v4087
        %v4152 = vadd.f32 %v3716, %v4088
        %v4153 = vadd.f32 %v3827, %v4089
        %v4154 = vadd.f32 %v3829, %v4090
        %v4155 = vadd.f32 %v3718, %v4091
        %v4156 = vadd.f32 %v3720, %v4092
        %v4157 = vadd.f32 %v3831, %v4093
        %v4158 = vadd.f32 %v3833, %v4094
        %v4159 = vadd.f32 %v3724, %v4095
        %v4160 = vadd.f32 %v3726, %v4096
        %v4161 = vadd.f32 %v3837, %v4097
        %v4162 = vadd.f32 %v3839, %v4098
        %v4163 = vadd.f32 %v3728, %v4099
        %v4164 = vadd.f32 %v3730, %v4100
        %v4165 = vadd.f32 %v3841, %v4101
        %v4166 = vadd.f32 %v3843, %v4102
        %v4167 = vadd.f32 %v3734, %v4103
        %v4168 = vadd.f32 %v3736, %v4104
        %v4169 = vadd.f32 %v3847, %v4105
        %v4170 = vadd.f32 %v3849, %v4106
        %v4171 = vadd.f32 %v3738, %v4107
        %v4172 = vadd.f32 %v3740, %v4108
        %v4173 = vadd.f32 %v3851, %v4109
        %v4174 = vadd.f32 %v3853, %v4110
        %v4175 = vmul.f32 %v4111, 0.7978846
        %v4176 = vmul.f32 %v4112, 0.7978846
        %v4177 = vmul.f32 %v4113, 0.7978846
        %v4178 = vmul.f32 %v4114, 0.7978846
        %v4179 = vmul.f32 %v4115, 0.7978846
        %v4180 = vmul.f32 %v4116, 0.7978846
        %v4181 = vmul.f32 %v4117, 0.7978846
        %v4182 = vmul.f32 %v4118, 0.7978846
        %v4183 = vmul.f32 %v4119, 0.7978846
        %v4184 = vmul.f32 %v4120, 0.7978846
        %v4185 = vmul.f32 %v4121, 0.7978846
        %v4186 = vmul.f32 %v4122, 0.7978846
        %v4187 = vmul.f32 %v4123, 0.7978846
        %v4188 = vmul.f32 %v4124, 0.7978846
        %v4189 = vmul.f32 %v4125, 0.7978846
        %v4190 = vmul.f32 %v4126, 0.7978846
        %v4191 = vmul.f32 %v4127, 0.7978846
        %v4192 = vmul.f32 %v4128, 0.7978846
        %v4193 = vmul.f32 %v4129, 0.7978846
        %v4194 = vmul.f32 %v4130, 0.7978846
        %v4195 = vmul.f32 %v4131, 0.7978846
        %v4196 = vmul.f32 %v4132, 0.7978846
        %v4197 = vmul.f32 %v4133, 0.7978846
        %v4198 = vmul.f32 %v4134, 0.7978846
        %v4199 = vmul.f32 %v4135, 0.7978846
        %v4200 = vmul.f32 %v4136, 0.7978846
        %v4201 = vmul.f32 %v4137, 0.7978846
        %v4202 = vmul.f32 %v4138, 0.7978846
        %v4203 = vmul.f32 %v4139, 0.7978846
        %v4204 = vmul.f32 %v4140, 0.7978846
        %v4205 = vmul.f32 %v4141, 0.7978846
        %v4206 = vmul.f32 %v4142, 0.7978846
        %v4207 = vmul.f32 %v4143, 0.7978846
        %v4208 = vmul.f32 %v4144, 0.7978846
        %v4209 = vmul.f32 %v4145, 0.7978846
        %v4210 = vmul.f32 %v4146, 0.7978846
        %v4211 = vmul.f32 %v4147, 0.7978846
        %v4212 = vmul.f32 %v4148, 0.7978846
        %v4213 = vmul.f32 %v4149, 0.7978846
        %v4214 = vmul.f32 %v4150, 0.7978846
        %v4215 = vmul.f32 %v4151, 0.7978846
        %v4216 = vmul.f32 %v4152, 0.7978846
        %v4217 = vmul.f32 %v4153, 0.7978846
        %v4218 = vmul.f32 %v4154, 0.7978846
        %v4219 = vmul.f32 %v4155, 0.7978846
        %v4220 = vmul.f32 %v4156, 0.7978846
        %v4221 = vmul.f32 %v4157, 0.7978846
        %v4222 = vmul.f32 %v4158, 0.7978846
        %v4223 = vmul.f32 %v4159, 0.7978846
        %v4224 = vmul.f32 %v4160, 0.7978846
        %v4225 = vmul.f32 %v4161, 0.7978846
        %v4226 = vmul.f32 %v4162, 0.7978846
        %v4227 = vmul.f32 %v4163, 0.7978846
        %v4228 = vmul.f32 %v4164, 0.7978846
        %v4229 = vmul.f32 %v4165, 0.7978846
        %v4230 = vmul.f32 %v4166, 0.7978846
        %v4231 = vmul.f32 %v4167, 0.7978846
        %v4232 = vmul.f32 %v4168, 0.7978846
        %v4233 = vmul.f32 %v4169, 0.7978846
        %v4234 = vmul.f32 %v4170, 0.7978846
        %v4235 = vmul.f32 %v4171, 0.7978846
        %v4236 = vmul.f32 %v4172, 0.7978846
        %v4237 = vmul.f32 %v4173, 0.7978846
        %v4238 = vmul.f32 %v4174, 0.7978846
        %v4239 = vtanh.pop %v4175
        %v4240 = vtanh.pop %v4176
        %v4241 = vtanh.pop %v4177
        %v4242 = vtanh.pop %v4178
        %v4243 = vtanh.pop %v4179
        %v4244 = vtanh.pop %v4180
        %v4245 = vtanh.pop %v4181
        %v4246 = vtanh.pop %v4182
        %v4247 = vtanh.pop %v4183
        %v4248 = vtanh.pop %v4184
        %v4249 = vtanh.pop %v4185
        %v4250 = vtanh.pop %v4186
        %v4251 = vtanh.pop %v4187
        %v4252 = vtanh.pop %v4188
        %v4253 = vtanh.pop %v4189
        %v4254 = vtanh.pop %v4190
        %v4255 = vtanh.pop %v4191
        %v4256 = vtanh.pop %v4192
        %v4257 = vtanh.pop %v4193
        %v4258 = vtanh.pop %v4194
        %v4259 = vtanh.pop %v4195
        %v4260 = vtanh.pop %v4196
        %v4261 = vtanh.pop %v4197
        %v4262 = vtanh.pop %v4198
        %v4263 = vtanh.pop %v4199
        %v4264 = vtanh.pop %v4200
        %v4265 = vtanh.pop %v4201
        %v4266 = vtanh.pop %v4202
        %v4267 = vtanh.pop %v4203
        %v4268 = vtanh.pop %v4204
        %v4269 = vtanh.pop %v4205
        %v4270 = vtanh.pop %v4206
        %v4271 = vtanh.pop %v4207
        %v4272 = vtanh.pop %v4208
        %v4273 = vtanh.pop %v4209
        %v4274 = vtanh.pop %v4210
        %v4275 = vtanh.pop %v4211
        %v4276 = vtanh.pop %v4212
        %v4277 = vtanh.pop %v4213
        %v4278 = vtanh.pop %v4214
        %v4279 = vtanh.pop %v4215
        %v4280 = vtanh.pop %v4216
        %v4281 = vtanh.pop %v4217
        %v4282 = vtanh.pop %v4218
        %v4283 = vtanh.pop %v4219
        %v4284 = vtanh.pop %v4220
        %v4285 = vtanh.pop %v4221
        %v4286 = vtanh.pop %v4222
        %v4287 = vtanh.pop %v4223
        %v4288 = vtanh.pop %v4224
        %v4289 = vtanh.pop %v4225
        %v4290 = vtanh.pop %v4226
        %v4291 = vtanh.pop %v4227
        %v4292 = vtanh.pop %v4228
        %v4293 = vtanh.pop %v4229
        %v4294 = vtanh.pop %v4230
        %v4295 = vtanh.pop %v4231
        %v4296 = vtanh.pop %v4232
        %v4297 = vtanh.pop %v4233
        %v4298 = vtanh.pop %v4234
        %v4299 = vtanh.pop %v4235
        %v4300 = vtanh.pop %v4236
        %v4301 = vtanh.pop %v4237
        %v4302 = vtanh.pop %v4238
        %v4303 = vadd.f32 %v4239, 1.0
        %v4304 = vadd.f32 %v4240, 1.0
        %v4305 = vadd.f32 %v4241, 1.0
        %v4306 = vadd.f32 %v4242, 1.0
        %v4307 = vadd.f32 %v4243, 1.0
        %v4308 = vadd.f32 %v4244, 1.0
        %v4309 = vadd.f32 %v4245, 1.0
        %v4310 = vadd.f32 %v4246, 1.0
        %v4311 = vadd.f32 %v4247, 1.0
        %v4312 = vadd.f32 %v4248, 1.0
        %v4313 = vadd.f32 %v4249, 1.0
        %v4314 = vadd.f32 %v4250, 1.0
        %v4315 = vadd.f32 %v4251, 1.0
        %v4316 = vadd.f32 %v4252, 1.0
        %v4317 = vadd.f32 %v4253, 1.0
        %v4318 = vadd.f32 %v4254, 1.0
        %v4319 = vadd.f32 %v4255, 1.0
        %v4320 = vadd.f32 %v4256, 1.0
        %v4321 = vadd.f32 %v4257, 1.0
        %v4322 = vadd.f32 %v4258, 1.0
        %v4323 = vadd.f32 %v4259, 1.0
        %v4324 = vadd.f32 %v4260, 1.0
        %v4325 = vadd.f32 %v4261, 1.0
        %v4326 = vadd.f32 %v4262, 1.0
        %v4327 = vadd.f32 %v4263, 1.0
        %v4328 = vadd.f32 %v4264, 1.0
        %v4329 = vadd.f32 %v4265, 1.0
        %v4330 = vadd.f32 %v4266, 1.0
        %v4331 = vadd.f32 %v4267, 1.0
        %v4332 = vadd.f32 %v4268, 1.0
        %v4333 = vadd.f32 %v4269, 1.0
        %v4334 = vadd.f32 %v4270, 1.0
        %v4335 = vadd.f32 %v4271, 1.0
        %v4336 = vadd.f32 %v4272, 1.0
        %v4337 = vadd.f32 %v4273, 1.0
        %v4338 = vadd.f32 %v4274, 1.0
        %v4339 = vadd.f32 %v4275, 1.0
        %v4340 = vadd.f32 %v4276, 1.0
        %v4341 = vadd.f32 %v4277, 1.0
        %v4342 = vadd.f32 %v4278, 1.0
        %v4343 = vadd.f32 %v4279, 1.0
        %v4344 = vadd.f32 %v4280, 1.0
        %v4345 = vadd.f32 %v4281, 1.0
        %v4346 = vadd.f32 %v4282, 1.0
        %v4347 = vadd.f32 %v4283, 1.0
        %v4348 = vadd.f32 %v4284, 1.0
        %v4349 = vadd.f32 %v4285, 1.0
        %v4350 = vadd.f32 %v4286, 1.0
        %v4351 = vadd.f32 %v4287, 1.0
        %v4352 = vadd.f32 %v4288, 1.0
        %v4353 = vadd.f32 %v4289, 1.0
        %v4354 = vadd.f32 %v4290, 1.0
        %v4355 = vadd.f32 %v4291, 1.0
        %v4356 = vadd.f32 %v4292, 1.0
        %v4357 = vadd.f32 %v4293, 1.0
        %v4358 = vadd.f32 %v4294, 1.0
        %v4359 = vadd.f32 %v4295, 1.0
        %v4360 = vadd.f32 %v4296, 1.0
        %v4361 = vadd.f32 %v4297, 1.0
        %v4362 = vadd.f32 %v4298, 1.0
        %v4363 = vadd.f32 %v4299, 1.0
        %v4364 = vadd.f32 %v4300, 1.0
        %v4365 = vadd.f32 %v4301, 1.0
        %v4366 = vadd.f32 %v4302, 1.0
        %v4367 = vmul.f32 %v3855, %v4303
        %v4368 = vmul.f32 %v3856, %v4304
        %v4369 = vmul.f32 %v3857, %v4305
        %v4370 = vmul.f32 %v3858, %v4306
        %v4371 = vmul.f32 %v3859, %v4307
        %v4372 = vmul.f32 %v3860, %v4308
        %v4373 = vmul.f32 %v3861, %v4309
        %v4374 = vmul.f32 %v3862, %v4310
        %v4375 = vmul.f32 %v3863, %v4311
        %v4376 = vmul.f32 %v3864, %v4312
        %v4377 = vmul.f32 %v3865, %v4313
        %v4378 = vmul.f32 %v3866, %v4314
        %v4379 = vmul.f32 %v3867, %v4315
        %v4380 = vmul.f32 %v3868, %v4316
        %v4381 = vmul.f32 %v3869, %v4317
        %v4382 = vmul.f32 %v3870, %v4318
        %v4383 = vmul.f32 %v3871, %v4319
        %v4384 = vmul.f32 %v3872, %v4320
        %v4385 = vmul.f32 %v3873, %v4321
        %v4386 = vmul.f32 %v3874, %v4322
        %v4387 = vmul.f32 %v3875, %v4323
        %v4388 = vmul.f32 %v3876, %v4324
        %v4389 = vmul.f32 %v3877, %v4325
        %v4390 = vmul.f32 %v3878, %v4326
        %v4391 = vmul.f32 %v3879, %v4327
        %v4392 = vmul.f32 %v3880, %v4328
        %v4393 = vmul.f32 %v3881, %v4329
        %v4394 = vmul.f32 %v3882, %v4330
        %v4395 = vmul.f32 %v3883, %v4331
        %v4396 = vmul.f32 %v3884, %v4332
        %v4397 = vmul.f32 %v3885, %v4333
        %v4398 = vmul.f32 %v3886, %v4334
        %v4399 = vmul.f32 %v3887, %v4335
        %v4400 = vmul.f32 %v3888, %v4336
        %v4401 = vmul.f32 %v3889, %v4337
        %v4402 = vmul.f32 %v3890, %v4338
        %v4403 = vmul.f32 %v3891, %v4339
        %v4404 = vmul.f32 %v3892, %v4340
        %v4405 = vmul.f32 %v3893, %v4341
        %v4406 = vmul.f32 %v3894, %v4342
        %v4407 = vmul.f32 %v3895, %v4343
        %v4408 = vmul.f32 %v3896, %v4344
        %v4409 = vmul.f32 %v3897, %v4345
        %v4410 = vmul.f32 %v3898, %v4346
        %v4411 = vmul.f32 %v3899, %v4347
        %v4412 = vmul.f32 %v3900, %v4348
        %v4413 = vmul.f32 %v3901, %v4349
        %v4414 = vmul.f32 %v3902, %v4350
        %v4415 = vmul.f32 %v3903, %v4351
        %v4416 = vmul.f32 %v3904, %v4352
        %v4417 = vmul.f32 %v3905, %v4353
        %v4418 = vmul.f32 %v3906, %v4354
        %v4419 = vmul.f32 %v3907, %v4355
        %v4420 = vmul.f32 %v3908, %v4356
        %v4421 = vmul.f32 %v3909, %v4357
        %v4422 = vmul.f32 %v3910, %v4358
        %v4423 = vmul.f32 %v3911, %v4359
        %v4424 = vmul.f32 %v3912, %v4360
        %v4425 = vmul.f32 %v3913, %v4361
        %v4426 = vmul.f32 %v3914, %v4362
        %v4427 = vmul.f32 %v3915, %v4363
        %v4428 = vmul.f32 %v3916, %v4364
        %v4429 = vmul.f32 %v3917, %v4365
        %v4430 = vmul.f32 %v3918, %v4366
        %s4431 = scalar_lea.vmem %s3, 192
        %v4432 = vld [vmem:[%s4431] sm:$0xf]
        %v4433 = vld [vmem:[%s4431 + $0x4] sm:$0xf]
        %v4434 = vld [vmem:[%s4431 + $0x8] sm:$0xf]
        %v4435 = vld [vmem:[%s4431 + $0xc] sm:$0xf]
        %v4436 = vld [vmem:[%s4431 + $0x10] sm:$0xf]
        %v4437 = vld [vmem:[%s4431 + $0x14] sm:$0xf]
        %v4438 = vld [vmem:[%s4431 + $0x18] sm:$0xf]
        %v4439 = vld [vmem:[%s4431 + $0x1c] sm:$0xf]
        %v4440 = vld [vmem:[%s4431 + $0x20] sm:$0xf]
        %v4441 = vld [vmem:[%s4431 + $0x24] sm:$0xf]
        %v4442 = vld [vmem:[%s4431 + $0x28] sm:$0xf]
        %v4443 = vld [vmem:[%s4431 + $0x2c] sm:$0xf]
        %v4444 = vld [vmem:[%s4431 + $0x30] sm:$0xf]
        %v4445 = vld [vmem:[%s4431 + $0x34] sm:$0xf]
        %v4446 = vld [vmem:[%s4431 + $0x38] sm:$0xf]
        %v4447 = vld [vmem:[%s4431 + $0x3c] sm:$0xf]
        %v4448 = vpack.c.bf16 %v4371, %v4367
        %v4449 = vpack.c.bf16 %v4372, %v4368
        %v4450 = vpack.c.bf16 %v4373, %v4369
        %v4451 = vpack.c.bf16 %v4374, %v4370
        %v4452 = vpack.c.bf16 %v4379, %v4375
        %v4453 = vpack.c.bf16 %v4380, %v4376
        %v4454 = vpack.c.bf16 %v4381, %v4377
        %v4455 = vpack.c.bf16 %v4382, %v4378
        %v4456 = vpack.c.bf16 %v4387, %v4383
        %v4457 = vpack.c.bf16 %v4388, %v4384
        %v4458 = vpack.c.bf16 %v4389, %v4385
        %v4459 = vpack.c.bf16 %v4390, %v4386
        %v4460 = vpack.c.bf16 %v4395, %v4391
        %v4461 = vpack.c.bf16 %v4396, %v4392
        %v4462 = vpack.c.bf16 %v4397, %v4393
        %v4463 = vpack.c.bf16 %v4398, %v4394
        %v4464 = vpack.c.bf16 %v4403, %v4399
        %v4465 = vpack.c.bf16 %v4404, %v4400
        %v4466 = vpack.c.bf16 %v4405, %v4401
        %v4467 = vpack.c.bf16 %v4406, %v4402
        %v4468 = vpack.c.bf16 %v4411, %v4407
        %v4469 = vpack.c.bf16 %v4412, %v4408
        %v4470 = vpack.c.bf16 %v4413, %v4409
        %v4471 = vpack.c.bf16 %v4414, %v4410
        %v4472 = vpack.c.bf16 %v4419, %v4415
        %v4473 = vpack.c.bf16 %v4420, %v4416
        %v4474 = vpack.c.bf16 %v4421, %v4417
        %v4475 = vpack.c.bf16 %v4422, %v4418
        %v4476 = vpack.c.bf16 %v4427, %v4423
        %v4477 = vpack.c.bf16 %v4428, %v4424
        %v4478 = vpack.c.bf16 %v4429, %v4425
        %v4479 = vpack.c.bf16 %v4430, %v4426
        %s4480 = scalar_lea.vmem %s4, 384
        %v4481 = vld [vmem:[%s4480] sm:$0xff]
        %v4482 = vld [vmem:[%s4480 + $0x8] sm:$0xff]
        %v4483 = vld [vmem:[%s4480 + $0x10] sm:$0xff]
        %v4484 = vld [vmem:[%s4480 + $0x18] sm:$0xff]
        %v4485 = vld [vmem:[%s4480 + $0x20] sm:$0xff]
        %v4486 = vld [vmem:[%s4480 + $0x28] sm:$0xff]
        %v4487 = vld [vmem:[%s4480 + $0x30] sm:$0xff]
        %v4488 = vld [vmem:[%s4480 + $0x38] sm:$0xff]
        %v4489 = vld [vmem:[%s4480 + $0x40] sm:$0xff]
        %v4490 = vld [vmem:[%s4480 + $0x48] sm:$0xff]
        %v4491 = vld [vmem:[%s4480 + $0x50] sm:$0xff]
        %v4492 = vld [vmem:[%s4480 + $0x58] sm:$0xff]
        %v4493 = vld [vmem:[%s4480 + $0x60] sm:$0xff]
        %v4494 = vld [vmem:[%s4480 + $0x68] sm:$0xff]
        %v4495 = vld [vmem:[%s4480 + $0x70] sm:$0xff]
        %v4496 = vld [vmem:[%s4480 + $0x78] sm:$0xff]
        %4498 = vset.pattern.permute.xlu0 0
        %4499 = vperm.xlu0 %4498, %v4481
        %v4500 = vpop.permute.xlu0 %4499
        %4503 = vset.pattern.permute.xlu0 0
        %4504 = vperm.xlu0 %4503, %v4482
        %v4505 = vpop.permute.xlu0 %4504
        %4508 = vset.pattern.permute.xlu0 0
        %4509 = vperm.xlu0 %4508, %v4483
        %v4510 = vpop.permute.xlu0 %4509
        %4513 = vset.pattern.permute.xlu0 0
        %4514 = vperm.xlu0 %4513, %v4484
        %v4515 = vpop.permute.xlu0 %4514
        %4518 = vset.pattern.permute.xlu0 0
        %4519 = vperm.xlu0 %4518, %v4485
        %v4520 = vpop.permute.xlu0 %4519
        %4523 = vset.pattern.permute.xlu0 0
        %4524 = vperm.xlu0 %4523, %v4486
        %v4525 = vpop.permute.xlu0 %4524
        %4528 = vset.pattern.permute.xlu0 0
        %4529 = vperm.xlu0 %4528, %v4487
        %v4530 = vpop.permute.xlu0 %4529
        %4533 = vset.pattern.permute.xlu0 0
        %4534 = vperm.xlu0 %4533, %v4488
        %v4535 = vpop.permute.xlu0 %4534
        %4538 = vset.pattern.permute.xlu0 0
        %4539 = vperm.xlu0 %4538, %v4489
        %v4540 = vpop.permute.xlu0 %4539
        %4543 = vset.pattern.permute.xlu0 0
        %4544 = vperm.xlu0 %4543, %v4490
        %v4545 = vpop.permute.xlu0 %4544
        %4548 = vset.pattern.permute.xlu0 0
        %4549 = vperm.xlu0 %4548, %v4491
        %v4550 = vpop.permute.xlu0 %4549
        %4553 = vset.pattern.permute.xlu0 0
        %4554 = vperm.xlu0 %4553, %v4492
        %v4555 = vpop.permute.xlu0 %4554
        %4558 = vset.pattern.permute.xlu0 0
        %4559 = vperm.xlu0 %4558, %v4493
        %v4560 = vpop.permute.xlu0 %4559
        %4563 = vset.pattern.permute.xlu0 0
        %4564 = vperm.xlu0 %4563, %v4494
        %v4565 = vpop.permute.xlu0 %4564
        %4568 = vset.pattern.permute.xlu0 0
        %4569 = vperm.xlu0 %4568, %v4495
        %v4570 = vpop.permute.xlu0 %4569
        %4573 = vset.pattern.permute.xlu0 0
        %4574 = vperm.xlu0 %4573, %v4496
        %v4575 = vpop.permute.xlu0 %4574
        %v4593 = vunpack.c.l.b16 %v4432
        %v4594 = vunpack.c.l.b16 %v4433
        %v4595 = vunpack.c.l.b16 %v4434
        %v4596 = vunpack.c.l.b16 %v4435
        %v4597 = vunpack.c.l.b16 %v4436
        %v4598 = vunpack.c.l.b16 %v4437
        %v4599 = vunpack.c.l.b16 %v4438
        %v4600 = vunpack.c.l.b16 %v4439
        %v4601 = vunpack.c.l.b16 %v4440
        %v4602 = vunpack.c.l.b16 %v4441
        %v4603 = vunpack.c.l.b16 %v4442
        %v4604 = vunpack.c.l.b16 %v4443
        %v4605 = vunpack.c.l.b16 %v4444
        %v4606 = vunpack.c.l.b16 %v4445
        %v4607 = vunpack.c.l.b16 %v4446
        %v4608 = vunpack.c.l.b16 %v4447
        %v4609 = vpack.c.b16 %v4594, %v4593
        %v4610 = vpack.c.b16 %v4596, %v4595
        %v4611 = vpack.c.b16 %v4598, %v4597
        %v4612 = vpack.c.b16 %v4600, %v4599
        %v4613 = vpack.c.b16 %v4602, %v4601
        %v4614 = vpack.c.b16 %v4604, %v4603
        %v4615 = vpack.c.b16 %v4606, %v4605
        %v4616 = vpack.c.b16 %v4608, %v4607
        %4625 = vmatprep.subr.bf16.mxu0 %v4449
        %4626 = vmatpush1.bf16.msra.mxu0 %v4448
        %4627 = vmatprep.subr.bf16.mxu0 %v4453
        %4628 = vmatpush1.bf16.msra.mxu0 %v4452
        %4629 = vmatprep.subr.bf16.mxu0 %v4457
        %4630 = vmatpush1.bf16.msra.mxu0 %v4456
        %4631 = vmatprep.subr.bf16.mxu0 %v4461
        %4632 = vmatpush1.bf16.msra.mxu0 %v4460
        %4633 = vmatprep.subr.bf16.mxu0 %v4465
        %4634 = vmatpush1.bf16.msra.mxu0 %v4464
        %4635 = vmatprep.subr.bf16.mxu0 %v4469
        %4636 = vmatpush1.bf16.msra.mxu0 %v4468
        %4637 = vmatprep.subr.bf16.mxu0 %v4473
        %4638 = vmatpush1.bf16.msra.mxu0 %v4472
        %4639 = vmatprep.subr.bf16.mxu0 %v4477
        %4640 = vmatpush1.bf16.msra.mxu0 %v4476
        %4641 = vmatprep.subr.bf16.mxu0 0
        %4642 = vmatpush1.bf16.msra.mxu0 0
        %4643 = vmatprep.subr.bf16.mxu0 0
        %4644 = vmatpush1.bf16.msra.mxu0 0
        %4645 = vmatprep.subr.bf16.mxu0 0
        %4646 = vmatpush1.bf16.msra.mxu0 0
        %4647 = vmatprep.subr.bf16.mxu0 0
        %4648 = vmatpush1.bf16.msra.mxu0 0
        %4649 = vmatprep.subr.bf16.mxu0 0
        %4650 = vmatpush1.bf16.msra.mxu0 0
        %4651 = vmatprep.subr.bf16.mxu0 0
        %4652 = vmatpush1.bf16.msra.mxu0 0
        %4653 = vmatprep.subr.bf16.mxu0 0
        %4654 = vmatpush1.bf16.msra.mxu0 0
        %4655 = vmatprep.subr.bf16.mxu0 0
        %4656 = vmatpush1.bf16.msra.mxu0 0
        %4657 = vmatprep.mubr.bf16.mxu0 0
        %4658 = vmatmul.mubr.bf16.gmra.mrb[0].mxu0 %v4609
        %v4659 = vpop.f32.mrb[0].mxu0
        %v4660 = vadd.f32 %v4500, %v4659
        %v4661 = vpop.f32.mrb[0].mxu0
        %v4662 = vadd.f32 %v4500, %v4661
        %v4663 = vpop.f32.mrb[0].mxu0
        %v4664 = vadd.f32 %v4505, %v4663
        %v4665 = vpop.f32.mrb[0].mxu0
        %v4666 = vadd.f32 %v4505, %v4665
        %4667 = vmatprep.mubr.bf16.mxu0 0
        %4668 = vmatmul.mubr.bf16.gmra.mrb[0].mxu0 %v4610
        %v4669 = vpop.f32.mrb[0].mxu0
        %v4670 = vadd.f32 %v4510, %v4669
        %v4671 = vpop.f32.mrb[0].mxu0
        %v4672 = vadd.f32 %v4510, %v4671
        %v4673 = vpop.f32.mrb[0].mxu0
        %v4674 = vadd.f32 %v4515, %v4673
        %v4675 = vpop.f32.mrb[0].mxu0
        %v4676 = vadd.f32 %v4515, %v4675
        %4677 = vmatprep.mubr.bf16.mxu0 0
        %4678 = vmatmul.mubr.bf16.gmra.mrb[0].mxu0 %v4611
        %v4679 = vpop.f32.mrb[0].mxu0
        %v4680 = vadd.f32 %v4520, %v4679
        %v4681 = vpop.f32.mrb[0].mxu0
        %v4682 = vadd.f32 %v4520, %v4681
        %v4683 = vpop.f32.mrb[0].mxu0
        %v4684 = vadd.f32 %v4525, %v4683
        %v4685 = vpop.f32.mrb[0].mxu0
        %v4686 = vadd.f32 %v4525, %v4685
        %4687 = vmatprep.mubr.bf16.mxu0 0
        %4688 = vmatmul.mubr.bf16.gmra.mrb[0].mxu0 %v4612
        %v4689 = vpop.f32.mrb[0].mxu0
        %v4690 = vadd.f32 %v4530, %v4689
        %v4691 = vpop.f32.mrb[0].mxu0
        %v4692 = vadd.f32 %v4530, %v4691
        %v4693 = vpop.f32.mrb[0].mxu0
        %v4694 = vadd.f32 %v4535, %v4693
        %v4695 = vpop.f32.mrb[0].mxu0
        %v4696 = vadd.f32 %v4535, %v4695
        %4697 = vmatprep.mubr.bf16.mxu0 0
        %4698 = vmatmul.mubr.bf16.gmra.mrb[0].mxu0 %v4613
        %v4699 = vpop.f32.mrb[0].mxu0
        %v4700 = vadd.f32 %v4540, %v4699
        %v4701 = vpop.f32.mrb[0].mxu0
        %v4702 = vadd.f32 %v4540, %v4701
        %v4703 = vpop.f32.mrb[0].mxu0
        %v4704 = vadd.f32 %v4545, %v4703
        %v4705 = vpop.f32.mrb[0].mxu0
        %v4706 = vadd.f32 %v4545, %v4705
        %4707 = vmatprep.mubr.bf16.mxu0 0
        %4708 = vmatmul.mubr.bf16.gmra.mrb[0].mxu0 %v4614
        %v4709 = vpop.f32.mrb[0].mxu0
        %v4710 = vadd.f32 %v4550, %v4709
        %v4711 = vpop.f32.mrb[0].mxu0
        %v4712 = vadd.f32 %v4550, %v4711
        %v4713 = vpop.f32.mrb[0].mxu0
        %v4714 = vadd.f32 %v4555, %v4713
        %v4715 = vpop.f32.mrb[0].mxu0
        %v4716 = vadd.f32 %v4555, %v4715
        %4717 = vmatprep.mubr.bf16.mxu0 0
        %4718 = vmatmul.mubr.bf16.gmra.mrb[0].mxu0 %v4615
        %v4719 = vpop.f32.mrb[0].mxu0
        %v4720 = vadd.f32 %v4560, %v4719
        %v4721 = vpop.f32.mrb[0].mxu0
        %v4722 = vadd.f32 %v4560, %v4721
        %v4723 = vpop.f32.mrb[0].mxu0
        %v4724 = vadd.f32 %v4565, %v4723
        %v4725 = vpop.f32.mrb[0].mxu0
        %v4726 = vadd.f32 %v4565, %v4725
        %4727 = vmatprep.mubr.bf16.mxu0 0
        %4728 = vmatmul.mubr.bf16.gmra.mrb[0].mxu0 %v4616
        %v4729 = vpop.f32.mrb[0].mxu0
        %v4730 = vadd.f32 %v4570, %v4729
        %v4731 = vpop.f32.mrb[0].mxu0
        %v4732 = vadd.f32 %v4570, %v4731
        %v4733 = vpop.f32.mrb[0].mxu0
        %v4734 = vadd.f32 %v4575, %v4733
        %v4735 = vpop.f32.mrb[0].mxu0
        %v4736 = vadd.f32 %v4575, %v4735
        %4737 = vdwg.mxu0
        %4738 = vmatprep.subr.bf16.mxu0 %v4451
        %4739 = vmatpush1.bf16.msra.mxu0 %v4450
        %4740 = vmatprep.subr.bf16.mxu0 %v4455
        %4741 = vmatpush1.bf16.msra.mxu0 %v4454
        %4742 = vmatprep.subr.bf16.mxu0 %v4459
        %4743 = vmatpush1.bf16.msra.mxu0 %v4458
        %4744 = vmatprep.subr.bf16.mxu0 %v4463
        %4745 = vmatpush1.bf16.msra.mxu0 %v4462
        %4746 = vmatprep.subr.bf16.mxu0 %v4467
        %4747 = vmatpush1.bf16.msra.mxu0 %v4466
        %4748 = vmatprep.subr.bf16.mxu0 %v4471
        %4749 = vmatpush1.bf16.msra.mxu0 %v4470
        %4750 = vmatprep.subr.bf16.mxu0 %v4475
        %4751 = vmatpush1.bf16.msra.mxu0 %v4474
        %4752 = vmatprep.subr.bf16.mxu0 %v4479
        %4753 = vmatpush1.bf16.msra.mxu0 %v4478
        %4754 = vmatprep.subr.bf16.mxu0 0
        %4755 = vmatpush1.bf16.msra.mxu0 0
        %4756 = vmatprep.subr.bf16.mxu0 0
        %4757 = vmatpush1.bf16.msra.mxu0 0
        %4758 = vmatprep.subr.bf16.mxu0 0
        %4759 = vmatpush1.bf16.msra.mxu0 0
        %4760 = vmatprep.subr.bf16.mxu0 0
        %4761 = vmatpush1.bf16.msra.mxu0 0
        %4762 = vmatprep.subr.bf16.mxu0 0
        %4763 = vmatpush1.bf16.msra.mxu0 0
        %4764 = vmatprep.subr.bf16.mxu0 0
        %4765 = vmatpush1.bf16.msra.mxu0 0
        %4766 = vmatprep.subr.bf16.mxu0 0
        %4767 = vmatpush1.bf16.msra.mxu0 0
        %4768 = vmatprep.subr.bf16.mxu0 0
        %4769 = vmatpush1.bf16.msra.mxu0 0
        %4770 = vmatprep.mubr.bf16.mxu0 0
        %4771 = vmatmul.mubr.bf16.gmra.mrb[0].mxu0 %v4609
        %v4772 = vpop.f32.mrb[0].mxu0
        %v4773 = vadd.f32 %v4500, %v4772
        %v4774 = vpop.f32.mrb[0].mxu0
        %v4775 = vadd.f32 %v4500, %v4774
        %v4776 = vpop.f32.mrb[0].mxu0
        %v4777 = vadd.f32 %v4505, %v4776
        %v4778 = vpop.f32.mrb[0].mxu0
        %v4779 = vadd.f32 %v4505, %v4778
        %4780 = vmatprep.mubr.bf16.mxu0 0
        %4781 = vmatmul.mubr.bf16.gmra.mrb[0].mxu0 %v4610
        %v4782 = vpop.f32.mrb[0].mxu0
        %v4783 = vadd.f32 %v4510, %v4782
        %v4784 = vpop.f32.mrb[0].mxu0
        %v4785 = vadd.f32 %v4510, %v4784
        %v4786 = vpop.f32.mrb[0].mxu0
        %v4787 = vadd.f32 %v4515, %v4786
        %v4788 = vpop.f32.mrb[0].mxu0
        %v4789 = vadd.f32 %v4515, %v4788
        %4790 = vmatprep.mubr.bf16.mxu0 0
        %4791 = vmatmul.mubr.bf16.gmra.mrb[0].mxu0 %v4611
        %v4792 = vpop.f32.mrb[0].mxu0
        %v4793 = vadd.f32 %v4520, %v4792
        %v4794 = vpop.f32.mrb[0].mxu0
        %v4795 = vadd.f32 %v4520, %v4794
        %v4796 = vpop.f32.mrb[0].mxu0
        %v4797 = vadd.f32 %v4525, %v4796
        %v4798 = vpop.f32.mrb[0].mxu0
        %v4799 = vadd.f32 %v4525, %v4798
        %4800 = vmatprep.mubr.bf16.mxu0 0
        %4801 = vmatmul.mubr.bf16.gmra.mrb[0].mxu0 %v4612
        %v4802 = vpop.f32.mrb[0].mxu0
        %v4803 = vadd.f32 %v4530, %v4802
        %v4804 = vpop.f32.mrb[0].mxu0
        %v4805 = vadd.f32 %v4530, %v4804
        %v4806 = vpop.f32.mrb[0].mxu0
        %v4807 = vadd.f32 %v4535, %v4806
        %v4808 = vpop.f32.mrb[0].mxu0
        %v4809 = vadd.f32 %v4535, %v4808
        %4810 = vmatprep.mubr.bf16.mxu0 0
        %4811 = vmatmul.mubr.bf16.gmra.mrb[0].mxu0 %v4613
        %v4812 = vpop.f32.mrb[0].mxu0
        %v4813 = vadd.f32 %v4540, %v4812
        %v4814 = vpop.f32.mrb[0].mxu0
        %v4815 = vadd.f32 %v4540, %v4814
        %v4816 = vpop.f32.mrb[0].mxu0
        %v4817 = vadd.f32 %v4545, %v4816
        %v4818 = vpop.f32.mrb[0].mxu0
        %v4819 = vadd.f32 %v4545, %v4818
        %4820 = vmatprep.mubr.bf16.mxu0 0
        %4821 = vmatmul.mubr.bf16.gmra.mrb[0].mxu0 %v4614
        %v4822 = vpop.f32.mrb[0].mxu0
        %v4823 = vadd.f32 %v4550, %v4822
        %v4824 = vpop.f32.mrb[0].mxu0
        %v4825 = vadd.f32 %v4550, %v4824
        %v4826 = vpop.f32.mrb[0].mxu0
        %v4827 = vadd.f32 %v4555, %v4826
        %v4828 = vpop.f32.mrb[0].mxu0
        %v4829 = vadd.f32 %v4555, %v4828
        %4830 = vmatprep.mubr.bf16.mxu0 0
        %4831 = vmatmul.mubr.bf16.gmra.mrb[0].mxu0 %v4615
        %v4832 = vpop.f32.mrb[0].mxu0
        %v4833 = vadd.f32 %v4560, %v4832
        %v4834 = vpop.f32.mrb[0].mxu0
        %v4835 = vadd.f32 %v4560, %v4834
        %v4836 = vpop.f32.mrb[0].mxu0
        %v4837 = vadd.f32 %v4565, %v4836
        %v4838 = vpop.f32.mrb[0].mxu0
        %v4839 = vadd.f32 %v4565, %v4838
        %4840 = vmatprep.mubr.bf16.mxu0 0
        %4841 = vmatmul.mubr.bf16.gmra.mrb[0].mxu0 %v4616
        %v4842 = vpop.f32.mrb[0].mxu0
        %v4843 = vadd.f32 %v4570, %v4842
        %v4844 = vpop.f32.mrb[0].mxu0
        %v4845 = vadd.f32 %v4570, %v4844
        %v4846 = vpop.f32.mrb[0].mxu0
        %v4847 = vadd.f32 %v4575, %v4846
        %v4848 = vpop.f32.mrb[0].mxu0
        %v4849 = vadd.f32 %v4575, %v4848
        %4850 = vdwg.mxu0
        %v4851 = vmul.f32 %v4660, 0.5
        %v4852 = vmul.f32 %v4662, 0.5
        %v4853 = vmul.f32 %v4773, 0.5
        %v4854 = vmul.f32 %v4775, 0.5
        %v4855 = vmul.f32 %v4664, 0.5
        %v4856 = vmul.f32 %v4666, 0.5
        %v4857 = vmul.f32 %v4777, 0.5
        %v4858 = vmul.f32 %v4779, 0.5
        %v4859 = vmul.f32 %v4670, 0.5
        %v4860 = vmul.f32 %v4672, 0.5
        %v4861 = vmul.f32 %v4783, 0.5
        %v4862 = vmul.f32 %v4785, 0.5
        %v4863 = vmul.f32 %v4674, 0.5
        %v4864 = vmul.f32 %v4676, 0.5
        %v4865 = vmul.f32 %v4787, 0.5
        %v4866 = vmul.f32 %v4789, 0.5
        %v4867 = vmul.f32 %v4680, 0.5
        %v4868 = vmul.f32 %v4682, 0.5
        %v4869 = vmul.f32 %v4793, 0.5
        %v4870 = vmul.f32 %v4795, 0.5
        %v4871 = vmul.f32 %v4684, 0.5
        %v4872 = vmul.f32 %v4686, 0.5
        %v4873 = vmul.f32 %v4797, 0.5
        %v4874 = vmul.f32 %v4799, 0.5
        %v4875 = vmul.f32 %v4690, 0.5
        %v4876 = vmul.f32 %v4692, 0.5
        %v4877 = vmul.f32 %v4803, 0.5
        %v4878 = vmul.f32 %v4805, 0.5
        %v4879 = vmul.f32 %v4694, 0.5
        %v4880 = vmul.f32 %v4696, 0.5
        %v4881 = vmul.f32 %v4807, 0.5
        %v4882 = vmul.f32 %v4809, 0.5
        %v4883 = vmul.f32 %v4700, 0.5
        %v4884 = vmul.f32 %v4702, 0.5
        %v4885 = vmul.f32 %v4813, 0.5
        %v4886 = vmul.f32 %v4815, 0.5
        %v4887 = vmul.f32 %v4704, 0.5
        %v4888 = vmul.f32 %v4706, 0.5
        %v4889 = vmul.f32 %v4817, 0.5
        %v4890 = vmul.f32 %v4819, 0.5
        %v4891 = vmul.f32 %v4710, 0.5
        %v4892 = vmul.f32 %v4712, 0.5
        %v4893 = vmul.f32 %v4823, 0.5
        %v4894 = vmul.f32 %v4825, 0.5
        %v4895 = vmul.f32 %v4714, 0.5
        %v4896 = vmul.f32 %v4716, 0.5
        %v4897 = vmul.f32 %v4827, 0.5
        %v4898 = vmul.f32 %v4829, 0.5
        %v4899 = vmul.f32 %v4720, 0.5
        %v4900 = vmul.f32 %v4722, 0.5
        %v4901 = vmul.f32 %v4833, 0.5
        %v4902 = vmul.f32 %v4835, 0.5
        %v4903 = vmul.f32 %v4724, 0.5
        %v4904 = vmul.f32 %v4726, 0.5
        %v4905 = vmul.f32 %v4837, 0.5
        %v4906 = vmul.f32 %v4839, 0.5
        %v4907 = vmul.f32 %v4730, 0.5
        %v4908 = vmul.f32 %v4732, 0.5
        %v4909 = vmul.f32 %v4843, 0.5
        %v4910 = vmul.f32 %v4845, 0.5
        %v4911 = vmul.f32 %v4734, 0.5
        %v4912 = vmul.f32 %v4736, 0.5
        %v4913 = vmul.f32 %v4847, 0.5
        %v4914 = vmul.f32 %v4849, 0.5
        %v4915 = vmul.f32 %v4660, %v4660
        %v4916 = vmul.f32 %v4662, %v4662
        %v4917 = vmul.f32 %v4773, %v4773
        %v4918 = vmul.f32 %v4775, %v4775
        %v4919 = vmul.f32 %v4664, %v4664
        %v4920 = vmul.f32 %v4666, %v4666
        %v4921 = vmul.f32 %v4777, %v4777
        %v4922 = vmul.f32 %v4779, %v4779
        %v4923 = vmul.f32 %v4670, %v4670
        %v4924 = vmul.f32 %v4672, %v4672
        %v4925 = vmul.f32 %v4783, %v4783
        %v4926 = vmul.f32 %v4785, %v4785
        %v4927 = vmul.f32 %v4674, %v4674
        %v4928 = vmul.f32 %v4676, %v4676
        %v4929 = vmul.f32 %v4787, %v4787
        %v4930 = vmul.f32 %v4789, %v4789
        %v4931 = vmul.f32 %v4680, %v4680
        %v4932 = vmul.f32 %v4682, %v4682
        %v4933 = vmul.f32 %v4793, %v4793
        %v4934 = vmul.f32 %v4795, %v4795
        %v4935 = vmul.f32 %v4684, %v4684
        %v4936 = vmul.f32 %v4686, %v4686
        %v4937 = vmul.f32 %v4797, %v4797
        %v4938 = vmul.f32 %v4799, %v4799
        %v4939 = vmul.f32 %v4690, %v4690
        %v4940 = vmul.f32 %v4692, %v4692
        %v4941 = vmul.f32 %v4803, %v4803
        %v4942 = vmul.f32 %v4805, %v4805
        %v4943 = vmul.f32 %v4694, %v4694
        %v4944 = vmul.f32 %v4696, %v4696
        %v4945 = vmul.f32 %v4807, %v4807
        %v4946 = vmul.f32 %v4809, %v4809
        %v4947 = vmul.f32 %v4700, %v4700
        %v4948 = vmul.f32 %v4702, %v4702
        %v4949 = vmul.f32 %v4813, %v4813
        %v4950 = vmul.f32 %v4815, %v4815
        %v4951 = vmul.f32 %v4704, %v4704
        %v4952 = vmul.f32 %v4706, %v4706
        %v4953 = vmul.f32 %v4817, %v4817
        %v4954 = vmul.f32 %v4819, %v4819
        %v4955 = vmul.f32 %v4710, %v4710
        %v4956 = vmul.f32 %v4712, %v4712
        %v4957 = vmul.f32 %v4823, %v4823
        %v4958 = vmul.f32 %v4825, %v4825
        %v4959 = vmul.f32 %v4714, %v4714
        %v4960 = vmul.f32 %v4716, %v4716
        %v4961 = vmul.f32 %v4827, %v4827
        %v4962 = vmul.f32 %v4829, %v4829
        %v4963 = vmul.f32 %v4720, %v4720
        %v4964 = vmul.f32 %v4722, %v4722
        %v4965 = vmul.f32 %v4833, %v4833
        %v4966 = vmul.f32 %v4835, %v4835
        %v4967 = vmul.f32 %v4724, %v4724
        %v4968 = vmul.f32 %v4726, %v4726
        %v4969 = vmul.f32 %v4837, %v4837
        %v4970 = vmul.f32 %v4839, %v4839
        %v4971 = vmul.f32 %v4730, %v4730
        %v4972 = vmul.f32 %v4732, %v4732
        %v4973 = vmul.f32 %v4843, %v4843
        %v4974 = vmul.f32 %v4845, %v4845
        %v4975 = vmul.f32 %v4734, %v4734
        %v4976 = vmul.f32 %v4736, %v4736
        %v4977 = vmul.f32 %v4847, %v4847
        %v4978 = vmul.f32 %v4849, %v4849
        %v4979 = vmul.f32 %v4915, %v4660
        %v4980 = vmul.f32 %v4916, %v4662
        %v4981 = vmul.f32 %v4917, %v4773
        %v4982 = vmul.f32 %v4918, %v4775
        %v4983 = vmul.f32 %v4919, %v4664
        %v4984 = vmul.f32 %v4920, %v4666
        %v4985 = vmul.f32 %v4921, %v4777
        %v4986 = vmul.f32 %v4922, %v4779
        %v4987 = vmul.f32 %v4923, %v4670
        %v4988 = vmul.f32 %v4924, %v4672
        %v4989 = vmul.f32 %v4925, %v4783
        %v4990 = vmul.f32 %v4926, %v4785
        %v4991 = vmul.f32 %v4927, %v4674
        %v4992 = vmul.f32 %v4928, %v4676
        %v4993 = vmul.f32 %v4929, %v4787
        %v4994 = vmul.f32 %v4930, %v4789
        %v4995 = vmul.f32 %v4931, %v4680
        %v4996 = vmul.f32 %v4932, %v4682
        %v4997 = vmul.f32 %v4933, %v4793
        %v4998 = vmul.f32 %v4934, %v4795
        %v4999 = vmul.f32 %v4935, %v4684
        %v5000 = vmul.f32 %v4936, %v4686
        %v5001 = vmul.f32 %v4937, %v4797
        %v5002 = vmul.f32 %v4938, %v4799
        %v5003 = vmul.f32 %v4939, %v4690
        %v5004 = vmul.f32 %v4940, %v4692
        %v5005 = vmul.f32 %v4941, %v4803
        %v5006 = vmul.f32 %v4942, %v4805
        %v5007 = vmul.f32 %v4943, %v4694
        %v5008 = vmul.f32 %v4944, %v4696
        %v5009 = vmul.f32 %v4945, %v4807
        %v5010 = vmul.f32 %v4946, %v4809
        %v5011 = vmul.f32 %v4947, %v4700
        %v5012 = vmul.f32 %v4948, %v4702
        %v5013 = vmul.f32 %v4949, %v4813
        %v5014 = vmul.f32 %v4950, %v4815
        %v5015 = vmul.f32 %v4951, %v4704
        %v5016 = vmul.f32 %v4952, %v4706
        %v5017 = vmul.f32 %v4953, %v4817
        %v5018 = vmul.f32 %v4954, %v4819
        %v5019 = vmul.f32 %v4955, %v4710
        %v5020 = vmul.f32 %v4956, %v4712
        %v5021 = vmul.f32 %v4957, %v4823
        %v5022 = vmul.f32 %v4958, %v4825
        %v5023 = vmul.f32 %v4959, %v4714
        %v5024 = vmul.f32 %v4960, %v4716
        %v5025 = vmul.f32 %v4961, %v4827
        %v5026 = vmul.f32 %v4962, %v4829
        %v5027 = vmul.f32 %v4963, %v4720
        %v5028 = vmul.f32 %v4964, %v4722
        %v5029 = vmul.f32 %v4965, %v4833
        %v5030 = vmul.f32 %v4966, %v4835
        %v5031 = vmul.f32 %v4967, %v4724
        %v5032 = vmul.f32 %v4968, %v4726
        %v5033 = vmul.f32 %v4969, %v4837
        %v5034 = vmul.f32 %v4970, %v4839
        %v5035 = vmul.f32 %v4971, %v4730
        %v5036 = vmul.f32 %v4972, %v4732
        %v5037 = vmul.f32 %v4973, %v4843
        %v5038 = vmul.f32 %v4974, %v4845
        %v5039 = vmul.f32 %v4975, %v4734
        %v5040 = vmul.f32 %v4976, %v4736
        %v5041 = vmul.f32 %v4977, %v4847
        %v5042 = vmul.f32 %v4978, %v4849
        %v5043 = vmul.f32 %v4979, 0.044715
        %v5044 = vmul.f32 %v4980, 0.044715
        %v5045 = vmul.f32 %v4981, 0.044715
        %v5046 = vmul.f32 %v4982, 0.044715
        %v5047 = vmul.f32 %v4983, 0.044715
        %v5048 = vmul.f32 %v4984, 0.044715
        %v5049 = vmul.f32 %v4985, 0.044715
        %v5050 = vmul.f32 %v4986, 0.044715
        %v5051 = vmul.f32 %v4987, 0.044715
        %v5052 = vmul.f32 %v4988, 0.044715
        %v5053 = vmul.f32 %v4989, 0.044715
        %v5054 = vmul.f32 %v4990, 0.044715
        %v5055 = vmul.f32 %v4991, 0.044715
        %v5056 = vmul.f32 %v4992, 0.044715
        %v5057 = vmul.f32 %v4993, 0.044715
        %v5058 = vmul.f32 %v4994, 0.044715
        %v5059 = vmul.f32 %v4995, 0.044715
        %v5060 = vmul.f32 %v4996, 0.044715
        %v5061 = vmul.f32 %v4997, 0.044715
        %v5062 = vmul.f32 %v4998, 0.044715
        %v5063 = vmul.f32 %v4999, 0.044715
        %v5064 = vmul.f32 %v5000, 0.044715
        %v5065 = vmul.f32 %v5001, 0.044715
        %v5066 = vmul.f32 %v5002, 0.044715
        %v5067 = vmul.f32 %v5003, 0.044715
        %v5068 = vmul.f32 %v5004, 0.044715
        %v5069 = vmul.f32 %v5005, 0.044715
        %v5070 = vmul.f32 %v5006, 0.044715
        %v5071 = vmul.f32 %v5007, 0.044715
        %v5072 = vmul.f32 %v5008, 0.044715
        %v5073 = vmul.f32 %v5009, 0.044715
        %v5074 = vmul.f32 %v5010, 0.044715
        %v5075 = vmul.f32 %v5011, 0.044715
        %v5076 = vmul.f32 %v5012, 0.044715
        %v5077 = vmul.f32 %v5013, 0.044715
        %v5078 = vmul.f32 %v5014, 0.044715
        %v5079 = vmul.f32 %v5015, 0.044715
        %v5080 = vmul.f32 %v5016, 0.044715
        %v5081 = vmul.f32 %v5017, 0.044715
        %v5082 = vmul.f32 %v5018, 0.044715
        %v5083 = vmul.f32 %v5019, 0.044715
        %v5084 = vmul.f32 %v5020, 0.044715
        %v5085 = vmul.f32 %v5021, 0.044715
        %v5086 = vmul.f32 %v5022, 0.044715
        %v5087 = vmul.f32 %v5023, 0.044715
        %v5088 = vmul.f32 %v5024, 0.044715
        %v5089 = vmul.f32 %v5025, 0.044715
        %v5090 = vmul.f32 %v5026, 0.044715
        %v5091 = vmul.f32 %v5027, 0.044715
        %v5092 = vmul.f32 %v5028, 0.044715
        %v5093 = vmul.f32 %v5029, 0.044715
        %v5094 = vmul.f32 %v5030, 0.044715
        %v5095 = vmul.f32 %v5031, 0.044715
        %v5096 = vmul.f32 %v5032, 0.044715
        %v5097 = vmul.f32 %v5033, 0.044715
        %v5098 = vmul.f32 %v5034, 0.044715
        %v5099 = vmul.f32 %v5035, 0.044715
        %v5100 = vmul.f32 %v5036, 0.044715
        %v5101 = vmul.f32 %v5037, 0.044715
        %v5102 = vmul.f32 %v5038, 0.044715
        %v5103 = vmul.f32 %v5039, 0.044715
        %v5104 = vmul.f32 %v5040, 0.044715
        %v5105 = vmul.f32 %v5041, 0.044715
        %v5106 = vmul.f32 %v5042, 0.044715
        %v5107 = vadd.f32 %v4660, %v5043
        %v5108 = vadd.f32 %v4662, %v5044
        %v5109 = vadd.f32 %v4773, %v5045
        %v5110 = vadd.f32 %v4775, %v5046
        %v5111 = vadd.f32 %v4664, %v5047
        %v5112 = vadd.f32 %v4666, %v5048
        %v5113 = vadd.f32 %v4777, %v5049
        %v5114 = vadd.f32 %v4779, %v5050
        %v5115 = vadd.f32 %v4670, %v5051
        %v5116 = vadd.f32 %v4672, %v5052
        %v5117 = vadd.f32 %v4783, %v5053
        %v5118 = vadd.f32 %v4785, %v5054
        %v5119 = vadd.f32 %v4674, %v5055
        %v5120 = vadd.f32 %v4676, %v5056
        %v5121 = vadd.f32 %v4787, %v5057
        %v5122 = vadd.f32 %v4789, %v5058
        %v5123 = vadd.f32 %v4680, %v5059
        %v5124 = vadd.f32 %v4682, %v5060
        %v5125 = vadd.f32 %v4793, %v5061
        %v5126 = vadd.f32 %v4795, %v5062
        %v5127 = vadd.f32 %v4684, %v5063
        %v5128 = vadd.f32 %v4686, %v5064
        %v5129 = vadd.f32 %v4797, %v5065
        %v5130 = vadd.f32 %v4799, %v5066
        %v5131 = vadd.f32 %v4690, %v5067
        %v5132 = vadd.f32 %v4692, %v5068
        %v5133 = vadd.f32 %v4803, %v5069
        %v5134 = vadd.f32 %v4805, %v5070
        %v5135 = vadd.f32 %v4694, %v5071
        %v5136 = vadd.f32 %v4696, %v5072
        %v5137 = vadd.f32 %v4807, %v5073
        %v5138 = vadd.f32 %v4809, %v5074
        %v5139 = vadd.f32 %v4700, %v5075
        %v5140 = vadd.f32 %v4702, %v5076
        %v5141 = vadd.f32 %v4813, %v5077
        %v5142 = vadd.f32 %v4815, %v5078
        %v5143 = vadd.f32 %v4704, %v5079
        %v5144 = vadd.f32 %v4706, %v5080
        %v5145 = vadd.f32 %v4817, %v5081
        %v5146 = vadd.f32 %v4819, %v5082
        %v5147 = vadd.f32 %v4710, %v5083
        %v5148 = vadd.f32 %v4712, %v5084
        %v5149 = vadd.f32 %v4823, %v5085
        %v5150 = vadd.f32 %v4825, %v5086
        %v5151 = vadd.f32 %v4714, %v5087
        %v5152 = vadd.f32 %v4716, %v5088
        %v5153 = vadd.f32 %v4827, %v5089
        %v5154 = vadd.f32 %v4829, %v5090
        %v5155 = vadd.f32 %v4720, %v5091
        %v5156 = vadd.f32 %v4722, %v5092
        %v5157 = vadd.f32 %v4833, %v5093
        %v5158 = vadd.f32 %v4835, %v5094
        %v5159 = vadd.f32 %v4724, %v5095
        %v5160 = vadd.f32 %v4726, %v5096
        %v5161 = vadd.f32 %v4837, %v5097
        %v5162 = vadd.f32 %v4839, %v5098
        %v5163 = vadd.f32 %v4730, %v5099
        %v5164 = vadd.f32 %v4732, %v5100
        %v5165 = vadd.f32 %v4843, %v5101
        %v5166 = vadd.f32 %v4845, %v5102
        %v5167 = vadd.f32 %v4734, %v5103
        %v5168 = vadd.f32 %v4736, %v5104
        %v5169 = vadd.f32 %v4847, %v5105
        %v5170 = vadd.f32 %v4849, %v5106
        %v5171 = vmul.f32 %v5107, 0.7978846
        %v5172 = vmul.f32 %v5108, 0.7978846
        %v5173 = vmul.f32 %v5109, 0.7978846
        %v5174 = vmul.f32 %v5110, 0.7978846
        %v5175 = vmul.f32 %v5111, 0.7978846
        %v5176 = vmul.f32 %v5112, 0.7978846
        %v5177 = vmul.f32 %v5113, 0.7978846
        %v5178 = vmul.f32 %v5114, 0.7978846
        %v5179 = vmul.f32 %v5115, 0.7978846
        %v5180 = vmul.f32 %v5116, 0.7978846
        %v5181 = vmul.f32 %v5117, 0.7978846
        %v5182 = vmul.f32 %v5118, 0.7978846
        %v5183 = vmul.f32 %v5119, 0.7978846
        %v5184 = vmul.f32 %v5120, 0.7978846
        %v5185 = vmul.f32 %v5121, 0.7978846
        %v5186 = vmul.f32 %v5122, 0.7978846
        %v5187 = vmul.f32 %v5123, 0.7978846
        %v5188 = vmul.f32 %v5124, 0.7978846
        %v5189 = vmul.f32 %v5125, 0.7978846
        %v5190 = vmul.f32 %v5126, 0.7978846
        %v5191 = vmul.f32 %v5127, 0.7978846
        %v5192 = vmul.f32 %v5128, 0.7978846
        %v5193 = vmul.f32 %v5129, 0.7978846
        %v5194 = vmul.f32 %v5130, 0.7978846
        %v5195 = vmul.f32 %v5131, 0.7978846
        %v5196 = vmul.f32 %v5132, 0.7978846
        %v5197 = vmul.f32 %v5133, 0.7978846
        %v5198 = vmul.f32 %v5134, 0.7978846
        %v5199 = vmul.f32 %v5135, 0.7978846
        %v5200 = vmul.f32 %v5136, 0.7978846
        %v5201 = vmul.f32 %v5137, 0.7978846
        %v5202 = vmul.f32 %v5138, 0.7978846
        %v5203 = vmul.f32 %v5139, 0.7978846
        %v5204 = vmul.f32 %v5140, 0.7978846
        %v5205 = vmul.f32 %v5141, 0.7978846
        %v5206 = vmul.f32 %v5142, 0.7978846
        %v5207 = vmul.f32 %v5143, 0.7978846
        %v5208 = vmul.f32 %v5144, 0.7978846
        %v5209 = vmul.f32 %v5145, 0.7978846
        %v5210 = vmul.f32 %v5146, 0.7978846
        %v5211 = vmul.f32 %v5147, 0.7978846
        %v5212 = vmul.f32 %v5148, 0.7978846
        %v5213 = vmul.f32 %v5149, 0.7978846
        %v5214 = vmul.f32 %v5150, 0.7978846
        %v5215 = vmul.f32 %v5151, 0.7978846
        %v5216 = vmul.f32 %v5152, 0.7978846
        %v5217 = vmul.f32 %v5153, 0.7978846
        %v5218 = vmul.f32 %v5154, 0.7978846
        %v5219 = vmul.f32 %v5155, 0.7978846
        %v5220 = vmul.f32 %v5156, 0.7978846
        %v5221 = vmul.f32 %v5157, 0.7978846
        %v5222 = vmul.f32 %v5158, 0.7978846
        %v5223 = vmul.f32 %v5159, 0.7978846
        %v5224 = vmul.f32 %v5160, 0.7978846
        %v5225 = vmul.f32 %v5161, 0.7978846
        %v5226 = vmul.f32 %v5162, 0.7978846
        %v5227 = vmul.f32 %v5163, 0.7978846
        %v5228 = vmul.f32 %v5164, 0.7978846
        %v5229 = vmul.f32 %v5165, 0.7978846
        %v5230 = vmul.f32 %v5166, 0.7978846
        %v5231 = vmul.f32 %v5167, 0.7978846
        %v5232 = vmul.f32 %v5168, 0.7978846
        %v5233 = vmul.f32 %v5169, 0.7978846
        %v5234 = vmul.f32 %v5170, 0.7978846
        %v5235 = vtanh.pop %v5171
        %v5236 = vtanh.pop %v5172
        %v5237 = vtanh.pop %v5173
        %v5238 = vtanh.pop %v5174
        %v5239 = vtanh.pop %v5175
        %v5240 = vtanh.pop %v5176
        %v5241 = vtanh.pop %v5177
        %v5242 = vtanh.pop %v5178
        %v5243 = vtanh.pop %v5179
        %v5244 = vtanh.pop %v5180
        %v5245 = vtanh.pop %v5181
        %v5246 = vtanh.pop %v5182
        %v5247 = vtanh.pop %v5183
        %v5248 = vtanh.pop %v5184
        %v5249 = vtanh.pop %v5185
        %v5250 = vtanh.pop %v5186
        %v5251 = vtanh.pop %v5187
        %v5252 = vtanh.pop %v5188
        %v5253 = vtanh.pop %v5189
        %v5254 = vtanh.pop %v5190
        %v5255 = vtanh.pop %v5191
        %v5256 = vtanh.pop %v5192
        %v5257 = vtanh.pop %v5193
        %v5258 = vtanh.pop %v5194
        %v5259 = vtanh.pop %v5195
        %v5260 = vtanh.pop %v5196
        %v5261 = vtanh.pop %v5197
        %v5262 = vtanh.pop %v5198
        %v5263 = vtanh.pop %v5199
        %v5264 = vtanh.pop %v5200
        %v5265 = vtanh.pop %v5201
        %v5266 = vtanh.pop %v5202
        %v5267 = vtanh.pop %v5203
        %v5268 = vtanh.pop %v5204
        %v5269 = vtanh.pop %v5205
        %v5270 = vtanh.pop %v5206
        %v5271 = vtanh.pop %v5207
        %v5272 = vtanh.pop %v5208
        %v5273 = vtanh.pop %v5209
        %v5274 = vtanh.pop %v5210
        %v5275 = vtanh.pop %v5211
        %v5276 = vtanh.pop %v5212
        %v5277 = vtanh.pop %v5213
        %v5278 = vtanh.pop %v5214
        %v5279 = vtanh.pop %v5215
        %v5280 = vtanh.pop %v5216
        %v5281 = vtanh.pop %v5217
        %v5282 = vtanh.pop %v5218
        %v5283 = vtanh.pop %v5219
        %v5284 = vtanh.pop %v5220
        %v5285 = vtanh.pop %v5221
        %v5286 = vtanh.pop %v5222
        %v5287 = vtanh.pop %v5223
        %v5288 = vtanh.pop %v5224
        %v5289 = vtanh.pop %v5225
        %v5290 = vtanh.pop %v5226
        %v5291 = vtanh.pop %v5227
        %v5292 = vtanh.pop %v5228
        %v5293 = vtanh.pop %v5229
        %v5294 = vtanh.pop %v5230
        %v5295 = vtanh.pop %v5231
        %v5296 = vtanh.pop %v5232
        %v5297 = vtanh.pop %v5233
        %v5298 = vtanh.pop %v5234
        %v5299 = vadd.f32 %v5235, 1.0
        %v5300 = vadd.f32 %v5236, 1.0
        %v5301 = vadd.f32 %v5237, 1.0
        %v5302 = vadd.f32 %v5238, 1.0
        %v5303 = vadd.f32 %v5239, 1.0
        %v5304 = vadd.f32 %v5240, 1.0
        %v5305 = vadd.f32 %v5241, 1.0
        %v5306 = vadd.f32 %v5242, 1.0
        %v5307 = vadd.f32 %v5243, 1.0
        %v5308 = vadd.f32 %v5244, 1.0
        %v5309 = vadd.f32 %v5245, 1.0
        %v5310 = vadd.f32 %v5246, 1.0
        %v5311 = vadd.f32 %v5247, 1.0
        %v5312 = vadd.f32 %v5248, 1.0
        %v5313 = vadd.f32 %v5249, 1.0
        %v5314 = vadd.f32 %v5250, 1.0
        %v5315 = vadd.f32 %v5251, 1.0
        %v5316 = vadd.f32 %v5252, 1.0
        %v5317 = vadd.f32 %v5253, 1.0
        %v5318 = vadd.f32 %v5254, 1.0
        %v5319 = vadd.f32 %v5255, 1.0
        %v5320 = vadd.f32 %v5256, 1.0
        %v5321 = vadd.f32 %v5257, 1.0
        %v5322 = vadd.f32 %v5258, 1.0
        %v5323 = vadd.f32 %v5259, 1.0
        %v5324 = vadd.f32 %v5260, 1.0
        %v5325 = vadd.f32 %v5261, 1.0
        %v5326 = vadd.f32 %v5262, 1.0
        %v5327 = vadd.f32 %v5263, 1.0
        %v5328 = vadd.f32 %v5264, 1.0
        %v5329 = vadd.f32 %v5265, 1.0
        %v5330 = vadd.f32 %v5266, 1.0
        %v5331 = vadd.f32 %v5267, 1.0
        %v5332 = vadd.f32 %v5268, 1.0
        %v5333 = vadd.f32 %v5269, 1.0
        %v5334 = vadd.f32 %v5270, 1.0
        %v5335 = vadd.f32 %v5271, 1.0
        %v5336 = vadd.f32 %v5272, 1.0
        %v5337 = vadd.f32 %v5273, 1.0
        %v5338 = vadd.f32 %v5274, 1.0
        %v5339 = vadd.f32 %v5275, 1.0
        %v5340 = vadd.f32 %v5276, 1.0
        %v5341 = vadd.f32 %v5277, 1.0
        %v5342 = vadd.f32 %v5278, 1.0
        %v5343 = vadd.f32 %v5279, 1.0
        %v5344 = vadd.f32 %v5280, 1.0
        %v5345 = vadd.f32 %v5281, 1.0
        %v5346 = vadd.f32 %v5282, 1.0
        %v5347 = vadd.f32 %v5283, 1.0
        %v5348 = vadd.f32 %v5284, 1.0
        %v5349 = vadd.f32 %v5285, 1.0
        %v5350 = vadd.f32 %v5286, 1.0
        %v5351 = vadd.f32 %v5287, 1.0
        %v5352 = vadd.f32 %v5288, 1.0
        %v5353 = vadd.f32 %v5289, 1.0
        %v5354 = vadd.f32 %v5290, 1.0
        %v5355 = vadd.f32 %v5291, 1.0
        %v5356 = vadd.f32 %v5292, 1.0
        %v5357 = vadd.f32 %v5293, 1.0
        %v5358 = vadd.f32 %v5294, 1.0
        %v5359 = vadd.f32 %v5295, 1.0
        %v5360 = vadd.f32 %v5296, 1.0
        %v5361 = vadd.f32 %v5297, 1.0
        %v5362 = vadd.f32 %v5298, 1.0
        %v5363 = vmul.f32 %v4851, %v5299
        %v5364 = vmul.f32 %v4852, %v5300
        %v5365 = vmul.f32 %v4853, %v5301
        %v5366 = vmul.f32 %v4854, %v5302
        %v5367 = vmul.f32 %v4855, %v5303
        %v5368 = vmul.f32 %v4856, %v5304
        %v5369 = vmul.f32 %v4857, %v5305
        %v5370 = vmul.f32 %v4858, %v5306
        %v5371 = vmul.f32 %v4859, %v5307
        %v5372 = vmul.f32 %v4860, %v5308
        %v5373 = vmul.f32 %v4861, %v5309
        %v5374 = vmul.f32 %v4862, %v5310
        %v5375 = vmul.f32 %v4863, %v5311
        %v5376 = vmul.f32 %v4864, %v5312
        %v5377 = vmul.f32 %v4865, %v5313
        %v5378 = vmul.f32 %v4866, %v5314
        %v5379 = vmul.f32 %v4867, %v5315
        %v5380 = vmul.f32 %v4868, %v5316
        %v5381 = vmul.f32 %v4869, %v5317
        %v5382 = vmul.f32 %v4870, %v5318
        %v5383 = vmul.f32 %v4871, %v5319
        %v5384 = vmul.f32 %v4872, %v5320
        %v5385 = vmul.f32 %v4873, %v5321
        %v5386 = vmul.f32 %v4874, %v5322
        %v5387 = vmul.f32 %v4875, %v5323
        %v5388 = vmul.f32 %v4876, %v5324
        %v5389 = vmul.f32 %v4877, %v5325
        %v5390 = vmul.f32 %v4878, %v5326
        %v5391 = vmul.f32 %v4879, %v5327
        %v5392 = vmul.f32 %v4880, %v5328
        %v5393 = vmul.f32 %v4881, %v5329
        %v5394 = vmul.f32 %v4882, %v5330
        %v5395 = vmul.f32 %v4883, %v5331
        %v5396 = vmul.f32 %v4884, %v5332
        %v5397 = vmul.f32 %v4885, %v5333
        %v5398 = vmul.f32 %v4886, %v5334
        %v5399 = vmul.f32 %v4887, %v5335
        %v5400 = vmul.f32 %v4888, %v5336
        %v5401 = vmul.f32 %v4889, %v5337
        %v5402 = vmul.f32 %v4890, %v5338
        %v5403 = vmul.f32 %v4891, %v5339
        %v5404 = vmul.f32 %v4892, %v5340
        %v5405 = vmul.f32 %v4893, %v5341
        %v5406 = vmul.f32 %v4894, %v5342
        %v5407 = vmul.f32 %v4895, %v5343
        %v5408 = vmul.f32 %v4896, %v5344
        %v5409 = vmul.f32 %v4897, %v5345
        %v5410 = vmul.f32 %v4898, %v5346
        %v5411 = vmul.f32 %v4899, %v5347
        %v5412 = vmul.f32 %v4900, %v5348
        %v5413 = vmul.f32 %v4901, %v5349
        %v5414 = vmul.f32 %v4902, %v5350
        %v5415 = vmul.f32 %v4903, %v5351
        %v5416 = vmul.f32 %v4904, %v5352
        %v5417 = vmul.f32 %v4905, %v5353
        %v5418 = vmul.f32 %v4906, %v5354
        %v5419 = vmul.f32 %v4907, %v5355
        %v5420 = vmul.f32 %v4908, %v5356
        %v5421 = vmul.f32 %v4909, %v5357
        %v5422 = vmul.f32 %v4910, %v5358
        %v5423 = vmul.f32 %v4911, %v5359
        %v5424 = vmul.f32 %v4912, %v5360
        %v5425 = vmul.f32 %v4913, %v5361
        %v5426 = vmul.f32 %v4914, %v5362
        %v5427 = vld [vmem:[%s5] sm:$0x1]
        %v5428 = vld [vmem:[#allocation2] sm:$0x1]
        %5430 = vset.pattern.permute.xlu0 0
        %5431 = vperm.xlu0 %5430, %v5428
        %v5432 = vpop.permute.xlu0 %5431
        %v5434 = vlaneseq
        %v5435 = vshrl.u32 %v5434, 7
        %v5436 = vsub.s32 0, %v5435
        %v5437 = vrot.slane %v5432, %v5436
        %5438 = vmatprep.subr.mxu0 %v5364
        %5439 = vmatpush1.msra.mxu0 %v5363
        %5440 = vmatprep.subr.mxu0 %v5368
        %5441 = vmatpush1.msra.mxu0 %v5367
        %5442 = vmatprep.subr.mxu0 %v5372
        %5443 = vmatpush1.msra.mxu0 %v5371
        %5444 = vmatprep.subr.mxu0 %v5376
        %5445 = vmatpush1.msra.mxu0 %v5375
        %5446 = vmatprep.subr.mxu0 %v5380
        %5447 = vmatpush1.msra.mxu0 %v5379
        %5448 = vmatprep.subr.mxu0 %v5384
        %5449 = vmatpush1.msra.mxu0 %v5383
        %5450 = vmatprep.subr.mxu0 %v5388
        %5451 = vmatpush1.msra.mxu0 %v5387
        %5452 = vmatprep.subr.mxu0 %v5392
        %5453 = vmatpush1.msra.mxu0 %v5391
        %5454 = vmatprep.subr.mxu0 %v5396
        %5455 = vmatpush1.msra.mxu0 %v5395
        %5456 = vmatprep.subr.mxu0 %v5400
        %5457 = vmatpush1.msra.mxu0 %v5399
        %5458 = vmatprep.subr.mxu0 %v5404
        %5459 = vmatpush1.msra.mxu0 %v5403
        %5460 = vmatprep.subr.mxu0 %v5408
        %5461 = vmatpush1.msra.mxu0 %v5407
        %5462 = vmatprep.subr.mxu0 %v5412
        %5463 = vmatpush1.msra.mxu0 %v5411
        %5464 = vmatprep.subr.mxu0 %v5416
        %5465 = vmatpush1.msra.mxu0 %v5415
        %5466 = vmatprep.subr.mxu0 %v5420
        %5467 = vmatpush1.msra.mxu0 %v5419
        %5468 = vmatprep.subr.mxu0 %v5424
        %5469 = vmatpush1.msra.mxu0 %v5423
        %5470 = vmatprep.subr.mxu0 0.0
        %5471 = vmatpush1.msra.mxu0 0.0
        %5472 = vmatprep.subr.mxu0 0.0
        %5473 = vmatpush1.msra.mxu0 0.0
        %5474 = vmatprep.subr.mxu0 0.0
        %5475 = vmatpush1.msra.mxu0 0.0
        %5476 = vmatprep.subr.mxu0 0.0
        %5477 = vmatpush1.msra.mxu0 0.0
        %5478 = vmatprep.subr.mxu0 0.0
        %5479 = vmatpush1.msra.mxu0 0.0
        %5480 = vmatprep.subr.mxu0 0.0
        %5481 = vmatpush1.msra.mxu0 0.0
        %5482 = vmatprep.subr.mxu0 0.0
        %5483 = vmatpush1.msra.mxu0 0.0
        %5484 = vmatprep.subr.mxu0 0.0
        %5485 = vmatpush1.msra.mxu0 0.0
        %5486 = vmatprep.subr.mxu0 0.0
        %5487 = vmatpush1.msra.mxu0 0.0
        %5488 = vmatprep.subr.mxu0 0.0
        %5489 = vmatpush1.msra.mxu0 0.0
        %5490 = vmatprep.subr.mxu0 0.0
        %5491 = vmatpush1.msra.mxu0 0.0
        %5492 = vmatprep.subr.mxu0 0.0
        %5493 = vmatpush1.msra.mxu0 0.0
        %5494 = vmatprep.subr.mxu0 0.0
        %5495 = vmatpush1.msra.mxu0 0.0
        %5496 = vmatprep.subr.mxu0 0.0
        %5497 = vmatpush1.msra.mxu0 0.0
        %5498 = vmatprep.subr.mxu0 0.0
        %5499 = vmatpush1.msra.mxu0 0.0
        %5500 = vmatprep.subr.mxu0 0.0
        %5501 = vmatpush1.msra.mxu0 0.0
        %5502 = vmatprep.mubr.f32.mxu0 0.0
        %5503 = vmatmul.mubr.f32.gmra.mrb[0].mxu0 %v5427
        %v5504 = vpop.f32.mrb[0].mxu0
        %v5505 = vadd.f32 %v5437, %v5504
        %v5506 = vpop.f32.mrb[0].mxu0
        %v5507 = vadd.f32 %v5437, %v5506
        %5508 = vdwg.mxu0
        %5509 = vmatprep.subr.mxu0 %v5366
        %5510 = vmatpush1.msra.mxu0 %v5365
        %5511 = vmatprep.subr.mxu0 %v5370
        %5512 = vmatpush1.msra.mxu0 %v5369
        %5513 = vmatprep.subr.mxu0 %v5374
        %5514 = vmatpush1.msra.mxu0 %v5373
        %5515 = vmatprep.subr.mxu0 %v5378
        %5516 = vmatpush1.msra.mxu0 %v5377
        %5517 = vmatprep.subr.mxu0 %v5382
        %5518 = vmatpush1.msra.mxu0 %v5381
        %5519 = vmatprep.subr.mxu0 %v5386
        %5520 = vmatpush1.msra.mxu0 %v5385
        %5521 = vmatprep.subr.mxu0 %v5390
        %5522 = vmatpush1.msra.mxu0 %v5389
        %5523 = vmatprep.subr.mxu0 %v5394
        %5524 = vmatpush1.msra.mxu0 %v5393
        %5525 = vmatprep.subr.mxu0 %v5398
        %5526 = vmatpush1.msra.mxu0 %v5397
        %5527 = vmatprep.subr.mxu0 %v5402
        %5528 = vmatpush1.msra.mxu0 %v5401
        %5529 = vmatprep.subr.mxu0 %v5406
        %5530 = vmatpush1.msra.mxu0 %v5405
        %5531 = vmatprep.subr.mxu0 %v5410
        %5532 = vmatpush1.msra.mxu0 %v5409
        %5533 = vmatprep.subr.mxu0 %v5414
        %5534 = vmatpush1.msra.mxu0 %v5413
        %5535 = vmatprep.subr.mxu0 %v5418
        %5536 = vmatpush1.msra.mxu0 %v5417
        %5537 = vmatprep.subr.mxu0 %v5422
        %5538 = vmatpush1.msra.mxu0 %v5421
        %5539 = vmatprep.subr.mxu0 %v5426
        %5540 = vmatpush1.msra.mxu0 %v5425
        %5541 = vmatprep.subr.mxu0 0.0
        %5542 = vmatpush1.msra.mxu0 0.0
        %5543 = vmatprep.subr.mxu0 0.0
        %5544 = vmatpush1.msra.mxu0 0.0
        %5545 = vmatprep.subr.mxu0 0.0
        %5546 = vmatpush1.msra.mxu0 0.0
        %5547 = vmatprep.subr.mxu0 0.0
        %5548 = vmatpush1.msra.mxu0 0.0
        %5549 = vmatprep.subr.mxu0 0.0
        %5550 = vmatpush1.msra.mxu0 0.0
        %5551 = vmatprep.subr.mxu0 0.0
        %5552 = vmatpush1.msra.mxu0 0.0
        %5553 = vmatprep.subr.mxu0 0.0
        %5554 = vmatpush1.msra.mxu0 0.0
        %5555 = vmatprep.subr.mxu0 0.0
        %5556 = vmatpush1.msra.mxu0 0.0
        %5557 = vmatprep.subr.mxu0 0.0
        %5558 = vmatpush1.msra.mxu0 0.0
        %5559 = vmatprep.subr.mxu0 0.0
        %5560 = vmatpush1.msra.mxu0 0.0
        %5561 = vmatprep.subr.mxu0 0.0
        %5562 = vmatpush1.msra.mxu0 0.0
        %5563 = vmatprep.subr.mxu0 0.0
        %5564 = vmatpush1.msra.mxu0 0.0
        %5565 = vmatprep.subr.mxu0 0.0
        %5566 = vmatpush1.msra.mxu0 0.0
        %5567 = vmatprep.subr.mxu0 0.0
        %5568 = vmatpush1.msra.mxu0 0.0
        %5569 = vmatprep.subr.mxu0 0.0
        %5570 = vmatpush1.msra.mxu0 0.0
        %5571 = vmatprep.subr.mxu0 0.0
        %5572 = vmatpush1.msra.mxu0 0.0
        %5573 = vmatprep.mubr.f32.mxu0 0.0
        %5574 = vmatmul.mubr.f32.gmra.mrb[0].mxu0 %v5427
        %v5575 = vpop.f32.mrb[0].mxu0
        %v5576 = vadd.f32 %v5437, %v5575
        %v5577 = vpop.f32.mrb[0].mxu0
        %v5578 = vadd.f32 %v5437, %v5577
        %5579 = vdwg.mxu0
        %v5584 = vcombine.low %v5505, %v5507
        %v5585 = vcombine.low %v5576, %v5578
        %v5587 = vunpack.c.l.s4 1966171168
        %v5588 = vunpack.c.0.s8 %v5587
        %v5589 = vlaneseq
        %v5590 = vshrl.u32 %v5589, 7
        %v5591 = vsub.s32 %v5588, %v5590
        %v5592 = vrot.slane %v5584, %v5591
        %v5594 = vunpack.c.l.s4 1966171168
        %v5595 = vunpack.c.0.s8 %v5594
        %v5596 = vlaneseq
        %v5597 = vshrl.u32 %v5596, 7
        %v5598 = vsub.s32 %v5595, %v5597
        %v5599 = vrot.slane %v5585, %v5598
        %v5600 = vcombine.low %v5592, %v5599
        %v5602 = vunpack.c.l.s4 1966171168
        %v5603 = vunpack.c.0.s8 %v5602
        %v5604 = vlaneseq
        %v5605 = vshrl.u32 %v5604, 7
        %v5606 = vsub.s32 %v5603, %v5605
        %v5607 = vrot.slane %v5600, %v5606
        %v5609 = vlaneseq
        %vm5610 = vcmp.ge.s32.totalorder %v5609, 0
        %vm5611 = vcmp.lt.s32.totalorder %v5609, 512
        %vm5612 = vmand %vm5610, %vm5611
        %5613 = vst.msk [vmem:[%s274] sm:$0xf] %vm5612, %v5607
        %s5614 = sand.u32 %s183, 1
        %s5615 = scalar_lea.sflag [#allocation4], %s5614
        %s5616 = sand.u32 %s183, 1
        %s5617 = smul.addr %s5616, 4
        %s5618 = scalar_lea.vmem [#allocation3], %s5617
        // Predicated region
        $region49: #{gelufcnet2d_forward.1} parent=47 // pred_check
          %p5619 = pneg %p193
        $region50: #{gelufcnet2d_forward.1} parent=47 // pred_check_branch
          %5621 = sbr.rel (%p5619) target = $region52
        $region51: #{gelufcnet2d_forward.1} parent=47 // pred_region
          %s5622 = smul.u32 4, %s23
          %s5624 = ssub.s32 64, 64
          %5625 = vsyncadd %s5615, %s5624
          %s5626 = smul.addr %s5622, 16
          %s5627 = scalar_lea.hbm %s7, %s5626
          %s5629 = sshll.u32 %s5618, 4
          %s5630 = int_to_ptr.vmem [resolvable:$true] %s5629
          %5632 = dma.vmem_to_hbm [thread:$0]  %s5630, 64, %s5627, %s5615
        $region52: #{gelufcnet2d_forward.1} parent=47 // pred_fallthru
          _
      $region48: #{gelufcnet2d_forward.1} parent=5 // pred_fallthru
        _
      %p5633 = scmp.le.s32.totalorder 2, %s18
      // Predicated region
      $region53: #{gelufcnet2d_forward.1} parent=5 // pred_check
        %p5634 = pneg %p5633
      $region54: #{gelufcnet2d_forward.1} parent=5 // pred_check_branch
        %5636 = sbr.rel (%p5634) target = $region56
      $region55: #{gelufcnet2d_forward.1} parent=5 // pred_region
        %s5637 = ssub.s32 %s18, 2
        // Predicated region
        $region57: #{gelufcnet2d_forward.1} parent=55 // pred_check
          %p5638 = pneg %p199
        $region58: #{gelufcnet2d_forward.1} parent=55 // pred_check_branch
          %5640 = sbr.rel (%p5638) target = $region60
        $region59: #{gelufcnet2d_forward.1} parent=55 // pred_region
          %s5641 = sand.u32 %s184, 1
          %s5642 = scalar_lea.sflag [#allocation4], %s5641
          %s5643 = sand.u32 %s184, 1
          %s5644 = smul.addr %s5643, 4
          %s5645 = scalar_lea.vmem [#allocation3], %s5644
          %5646 = dma.done %s5642, 64
        $region60: #{gelufcnet2d_forward.1} parent=55 // pred_fallthru
          _
      $region56: #{gelufcnet2d_forward.1} parent=5 // pred_fallthru
        _
    $region6: #{gelufcnet2d_forward.1} parent=1 // loop_footer
      %s22 = sadd.s32 1, %s18
    $region7: #{gelufcnet2d_forward.1} parent=1 // loop_footer_branch
      %17 = sbr.rel target = $region3
    $region8: #{gelufcnet2d_forward.1} parent=1 // loop_exit
      _
    %5647 = vsyncpa [#allocation4], 1
    %s5648 = scalar_lea.sflag [#allocation4], 1
    %5649 = vsyncpa %s5648, 1

</llo_original>
